<compile_context>
chip_gen: v7x
topology: tpu7x:2x2x1
jax: 0.10.0
libtpu: 0.0.40
codegen_flags: <defaults>
</compile_context>

<pallas_src>
import functools

import jax
import jax.numpy as jnp
from jax.experimental import pallas as pl
from jax.experimental.pallas import tpu as pltpu


_VMEM = pl.BlockSpec(memory_space=pltpu.MemorySpace.VMEM)

# (F_in, heads, head_dim, has_align) — matches GATNet.__init__
LAYER_CFG = ((84, 16, 4, True), (64, 8, 4, True), (32, 4, 4, False))


# ----------------------------------------------------------------------------
# Fused Pallas kernel: 3 GAT layers + ELU + LayerNorm + residual align
# + per-edge (mean-over-heads) attention gather + temperature softmax.
# ----------------------------------------------------------------------------
def make_gatnet_kernel(N, E, layer_cfg, inv_temperature,
                       ln_eps=1e-5, neg_slope=0.2):
    n_layers = len(layer_cfg)

    def kernel(*refs):
        x_ref, mask_ref, ssel_ref, dsel_ref = refs[:4]
        layer_refs = refs[4:4 + 4 * n_layers]
        out_x_ref, out_scores_ref = refs[4 + 4 * n_layers: 6 + 4 * n_layers]
        agg_ref = refs[-1]                       # [N, 64] f32 scratch (reused)

        neg_mask = mask_ref[...]                 # [N, N]: 0 on edges, -1e30 off
        ssel = ssel_ref[...]                     # [N, E]  one_hot(src).T
        dsel = dsel_ref[...]                     # [N, E]  one_hot(dst).T

        def gat_layer(x_in, l):
            _, H, C, has_align = layer_cfg[l]
            HC = H * C
            w_ref, bias_ref, g_ref, beta_ref = layer_refs[4 * l: 4 * l + 4]

            # single MXU pass: [ xW | x@W_adst | x@W_asrc | x@align_W ]
            big = jnp.dot(x_in, w_ref[...], preferred_element_type=jnp.float32)
            xp = big[:, :HC]                              # [N, HC]
            a_dst = big[:, HC:HC + H]                     # [N, H]
            a_src_t = big[:, HC + H:HC + 2 * H].T         # [H, N]

            attn_sum = jnp.zeros((N, N), jnp.float32)
            for h in range(H):
                # e[i, j] = leaky(alpha_dst[i] + alpha_src[j]), masked softmax over j
                e = a_dst[:, h:h + 1] + a_src_t[h:h + 1, :]      # [N, N]
                e = jnp.maximum(e, neg_slope * e)                 # LeakyReLU(0.2)
                e = e + neg_mask                                  # mask non-edges
                m = jnp.max(e, axis=-1, keepdims=True)
                p = jnp.exp(e - m)
                inv = pl.reciprocal(jnp.sum(p, axis=-1, keepdims=True),
                                    approx=True)
                attn = p * inv                                    # softmax over src
                attn_sum = attn_sum + attn
                agg_ref[:, h * C:(h + 1) * C] = jnp.dot(
                    attn, xp[:, h * C:(h + 1) * C],
                    preferred_element_type=jnp.float32)

            out = agg_ref[:, :HC] + bias_ref[...]
            # ELU (clamp the dead branch so exp never overflows)
            out = jnp.where(out > 0, out,
                            jnp.exp(jnp.minimum(out, 0.0)) - 1.0)
            # LayerNorm over the feature axis (align_b already folded into beta)
            mu = jnp.mean(out, axis=-1, keepdims=True)
            var = jnp.mean((out - mu) ** 2, axis=-1, keepdims=True)
            out = (out - mu) * jax.lax.rsqrt(var + ln_eps) * g_ref[...] \
                + beta_ref[...]
            # dropout(p=0.2): identity at inference
            if has_align:
                out = out + big[:, HC + 2 * H:HC + 2 * H + HC]    # residual align

            # per-edge attention (mean over heads) for the original E edges: [1, E]
            attn_mean = attn_sum * (1.0 / H)
            sel = jnp.dot(attn_mean, ssel,
                          preferred_element_type=jnp.float32)     # [N, E]
            edge_row = jnp.sum(sel * dsel, axis=0, keepdims=True)  # [1, E]
            return out, edge_row

        x_cur = x_ref[...]
        rows = []
        for l in range(n_layers):
            x_cur, row = gat_layer(x_cur, l)
            rows.append(row)
        out_x_ref[...] = x_cur

        # temperature-scaled softmax over the edge axis for each layer's map
        s = jnp.concatenate(rows, axis=0) * inv_temperature        # [3, E]
        m = jnp.max(s, axis=-1, keepdims=True)
        p = jnp.exp(s - m)
        out_scores_ref[...] = p * pl.reciprocal(
            jnp.sum(p, axis=-1, keepdims=True), approx=True)

    return kernel


# ----------------------------------------------------------------------------
# Parameter construction (deterministic, synthetic)
# ----------------------------------------------------------------------------
def glorot(key, shape):
    lim = jnp.sqrt(6.0 / (shape[0] + shape[1]))
    return jax.random.uniform(key, shape, jnp.float32, -lim, lim)


def build_params():
    keys = jax.random.split(jax.random.PRNGKey(1), 20)
    params, ki = [], 0
    for (fin, H, C, has_align) in LAYER_CFG:
        HC = H * C
        W = glorot(keys[ki], (fin, HC))
        att_src = glorot(keys[ki + 1], (H, C))
        att_dst = glorot(keys[ki + 2], (H, C))
        ki += 3
        # fold attention projections (and align) into one weight -> one MXU pass
        W_adst = jnp.einsum('fhc,hc->fh', W.reshape(fin, H, C), att_dst)
        W_asrc = jnp.einsum('fhc,hc->fh', W.reshape(fin, H, C), att_src)
        blocks = [W, W_adst, W_asrc]
        ln_beta = jnp.zeros((1, HC), jnp.float32)
        if has_align:
            align_W = glorot(keys[ki], (fin, HC))
            ki += 1
            align_b = jnp.zeros((1, HC), jnp.float32)
            blocks.append(align_W)
            ln_beta = ln_beta + align_b          # both added post-LN -> fold
        params.append(dict(
            W_big=jnp.concatenate(blocks, axis=1),
            bias=jnp.zeros((1, HC), jnp.float32),
            ln_g=jnp.ones((1, HC), jnp.float32),
            ln_beta=ln_beta,
        ))
    return params


# ----------------------------------------------------------------------------
# Full forward (mirrors GATNet.forward) — one pallas_call
# ----------------------------------------------------------------------------
def gatnet_forward(x, edge_index, batch, params, temperature):
    del batch  # unused in the reference forward
    N = x.shape[0]
    E = edge_index.shape[1]
    src, dst = edge_index[0], edge_index[1]

    # dense adjacency [dst, src] with self loops, turned into an additive mask
    adj = jnp.zeros((N, N), jnp.float32)
    adj = adj.at[dst, src].set(1.0)
    adj = adj.at[jnp.arange(N), jnp.arange(N)].set(1.0)
    neg_mask = (adj - 1.0) * 1e30

    # one-hot edge selectors, transposed to [N, E] for lane-dense in-kernel gather
    ssel = jax.nn.one_hot(src, N, dtype=jnp.float32).T
    dsel = jax.nn.one_hot(dst, N, dtype=jnp.float32).T

    inputs = [x, neg_mask, ssel, dsel]
    for p in params:
        inputs += [p["W_big"], p["bias"], p["ln_g"], p["ln_beta"]]

    HC_last = LAYER_CFG[-1][1] * LAYER_CFG[-1][2]
    HC_max = max(h * c for _, h, c, _ in LAYER_CFG)
    kern = make_gatnet_kernel(N, E, LAYER_CFG, 1.0 / temperature)

    x_out, scores = pl.pallas_call(
        kern,
        out_shape=(jax.ShapeDtypeStruct((N, HC_last), jnp.float32),
                   jax.ShapeDtypeStruct((3, E), jnp.float32)),
        in_specs=[_VMEM] * len(inputs),
        out_specs=(_VMEM, _VMEM),
        scratch_shapes=[pltpu.VMEM((N, HC_max), jnp.float32)],
    )(*inputs)

    # TODO(synk): final_edge_score_map / normalize_scores are computed but not
    # returned by the torch forward; omitted since they don't affect outputs.
    return x_out, scores[0], scores[1], scores[2]


# ----------------------------------------------------------------------------
if __name__ == "__main__":
    N, F_in = 16, 84           # in_channels of gat_conv1 is hard-coded to 84
    temperature = 0.5

    key = jax.random.PRNGKey(0)
    x = jax.random.normal(key, (N, F_in), jnp.float32)

    # small synthetic graph: bidirectional ring -> E = 32 edges
    src = jnp.concatenate([jnp.arange(N), (jnp.arange(N) + 1) % N])
    dst = jnp.concatenate([(jnp.arange(N) + 1) % N, jnp.arange(N)])
    edge_index = jnp.stack([src, dst]).astype(jnp.int32)            # [2, 32]
    batch = jnp.zeros((N,), jnp.int32)

    params = build_params()

    fwd = jax.jit(functools.partial(gatnet_forward, temperature=temperature))
    outs = fwd(x, edge_index, batch, params)
    jax.block_until_ready(outs)

    x_out, esm1, esm2, esm3 = outs
    assert x_out.shape == (N, 16)
    assert esm1.shape == esm2.shape == esm3.shape == (edge_index.shape[1],)
    print("KERNEL_OK")
</pallas_src>

<mosaic_0001>
module attributes {stable_mosaic.version = 11 : i64} {
  func.func @kernel(%arg0: memref<16x84xf32, #tpu.memory_space<vmem>>, %arg1: memref<16x16xf32, #tpu.memory_space<vmem>>, %arg2: memref<16x32xf32, #tpu.memory_space<vmem>>, %arg3: memref<16x32xf32, #tpu.memory_space<vmem>>, %arg4: memref<84x160xf32, #tpu.memory_space<vmem>>, %arg5: memref<1x64xf32, #tpu.memory_space<vmem>>, %arg6: memref<1x64xf32, #tpu.memory_space<vmem>>, %arg7: memref<1x64xf32, #tpu.memory_space<vmem>>, %arg8: memref<64x80xf32, #tpu.memory_space<vmem>>, %arg9: memref<1x32xf32, #tpu.memory_space<vmem>>, %arg10: memref<1x32xf32, #tpu.memory_space<vmem>>, %arg11: memref<1x32xf32, #tpu.memory_space<vmem>>, %arg12: memref<32x24xf32, #tpu.memory_space<vmem>>, %arg13: memref<1x16xf32, #tpu.memory_space<vmem>>, %arg14: memref<1x16xf32, #tpu.memory_space<vmem>>, %arg15: memref<1x16xf32, #tpu.memory_space<vmem>>, %arg16: memref<16x16xf32, #tpu.memory_space<vmem>>, %arg17: memref<3x32xf32, #tpu.memory_space<vmem>>, %arg18: memref<16x64xf32, #tpu.memory_space<vmem>>) attributes {dimension_semantics = [], scalar_prefetch = 0 : i64, scratch_operands = 1 : i64, tpu.core_type = #tpu.core_type<tc>} {
    %c0 = arith.constant 0 : index
    %c0_0 = arith.constant 0 : index
    %0 = vector.load %arg1[%c0, %c0_0] : memref<16x16xf32, #tpu.memory_space<vmem>>, vector<16x16xf32>
    %c0_1 = arith.constant 0 : index
    %c0_2 = arith.constant 0 : index
    %1 = vector.load %arg2[%c0_1, %c0_2] : memref<16x32xf32, #tpu.memory_space<vmem>>, vector<16x32xf32>
    %c0_3 = arith.constant 0 : index
    %c0_4 = arith.constant 0 : index
    %2 = vector.load %arg3[%c0_3, %c0_4] : memref<16x32xf32, #tpu.memory_space<vmem>>, vector<16x32xf32>
    %c0_5 = arith.constant 0 : index
    %c0_6 = arith.constant 0 : index
    %3 = vector.load %arg0[%c0_5, %c0_6] : memref<16x84xf32, #tpu.memory_space<vmem>>, vector<16x84xf32>
    %c0_7 = arith.constant 0 : index
    %c0_8 = arith.constant 0 : index
    %4 = vector.load %arg4[%c0_7, %c0_8] : memref<84x160xf32, #tpu.memory_space<vmem>>, vector<84x160xf32>
    %cst = arith.constant dense<0.000000e+00> : vector<16x160xf32>
    %5 = tpu.matmul %3, %4, %cst {dimension_numbers = #tpu.dot_dimension_numbers<[1], [0], [0], [1], [0, 0, 1, 1], [], []>} : vector<16x84xf32>, vector<84x160xf32>, vector<16x160xf32> -> vector<16x160xf32>
    %6 = vector.extract_strided_slice %5 {offsets = [0, 0], sizes = [16, 64], strides = [1, 1]} : vector<16x160xf32> to vector<16x64xf32>
    %7 = vector.extract_strided_slice %5 {offsets = [0, 64], sizes = [16, 16], strides = [1, 1]} : vector<16x160xf32> to vector<16x16xf32>
    %8 = vector.extract_strided_slice %5 {offsets = [0, 80], sizes = [16, 16], strides = [1, 1]} : vector<16x160xf32> to vector<16x16xf32>
    %9 = tpu.transpose %8, [1, 0] : vector<16x16xf32> -> vector<16x16xf32>
    %cst_9 = arith.constant 0.000000e+00 : f32
    %10 = vector.broadcast %cst_9 : f32 to vector<16x16xf32>
    %11 = vector.extract_strided_slice %7 {offsets = [0, 0], sizes = [16, 1], strides = [1, 1]} : vector<16x16xf32> to vector<16x1xf32>
    %12 = vector.extract_strided_slice %9 {offsets = [0, 0], sizes = [1, 16], strides = [1, 1]} : vector<16x16xf32> to vector<1x16xf32>
    %13 = vector.broadcast %11 : vector<16x1xf32> to vector<16x16xf32>
    %14 = vector.broadcast %12 : vector<1x16xf32> to vector<16x16xf32>
    %15 = arith.addf %13, %14 : vector<16x16xf32>
    %cst_10 = arith.constant 2.000000e-01 : f32
    %16 = vector.broadcast %cst_10 : f32 to vector<16x16xf32>
    %17 = arith.mulf %16, %15 : vector<16x16xf32>
    %18 = arith.maximumf %15, %17 : vector<16x16xf32>
    %19 = arith.addf %18, %0 : vector<16x16xf32>
    %cst_11 = arith.constant dense<0xFF800000> : vector<16xf32>
    %20 = vector.multi_reduction <maximumf>, %19, %cst_11 [1] : vector<16x16xf32> to vector<16xf32>
    %21 = vector.shape_cast %20 : vector<16xf32> to vector<16x1xf32>
    %22 = vector.broadcast %21 : vector<16x1xf32> to vector<16x16xf32>
    %23 = arith.subf %19, %22 : vector<16x16xf32>
    %24 = math.exp %23 : vector<16x16xf32>
    %cst_12 = arith.constant dense<0.000000e+00> : vector<16xf32>
    %25 = vector.multi_reduction <add>, %24, %cst_12 [1] : vector<16x16xf32> to vector<16xf32>
    %26 = vector.shape_cast %25 : vector<16xf32> to vector<16x1xf32>
    %27 = tpu.reciprocal %26 {approx = true} : vector<16x1xf32> -> vector<16x1xf32>
    %28 = vector.broadcast %27 : vector<16x1xf32> to vector<16x16xf32>
    %29 = arith.mulf %24, %28 : vector<16x16xf32>
    %30 = arith.addf %10, %29 : vector<16x16xf32>
    %31 = vector.extract_strided_slice %6 {offsets = [0, 0], sizes = [16, 4], strides = [1, 1]} : vector<16x64xf32> to vector<16x4xf32>
    %cst_13 = arith.constant dense<0.000000e+00> : vector<16x4xf32>
    %32 = tpu.matmul %29, %31, %cst_13 {dimension_numbers = #tpu.dot_dimension_numbers<[1], [0], [0], [1], [0, 0, 1, 1], [], []>} : vector<16x16xf32>, vector<16x4xf32>, vector<16x4xf32> -> vector<16x4xf32>
    %c0_14 = arith.constant 0 : index
    %c0_15 = arith.constant 0 : index
    %33 = vector.load %arg18[%c0_14, %c0_15] : memref<16x64xf32, #tpu.memory_space<vmem>>, vector<16x4xf32>
    tpu.vector_store %arg18[%c0_14, %c0_15], %32 {strides = array<i32>} : memref<16x64xf32, #tpu.memory_space<vmem>>, vector<16x4xf32>,
    %34 = vector.extract_strided_slice %7 {offsets = [0, 1], sizes = [16, 1], strides = [1, 1]} : vector<16x16xf32> to vector<16x1xf32>
    %35 = vector.extract_strided_slice %9 {offsets = [1, 0], sizes = [1, 16], strides = [1, 1]} : vector<16x16xf32> to vector<1x16xf32>
    %36 = vector.broadcast %34 : vector<16x1xf32> to vector<16x16xf32>
    %37 = vector.broadcast %35 : vector<1x16xf32> to vector<16x16xf32>
    %38 = arith.addf %36, %37 : vector<16x16xf32>
    %cst_16 = arith.constant 2.000000e-01 : f32
    %39 = vector.broadcast %cst_16 : f32 to vector<16x16xf32>
    %40 = arith.mulf %39, %38 : vector<16x16xf32>
    %41 = arith.maximumf %38, %40 : vector<16x16xf32>
    %42 = arith.addf %41, %0 : vector<16x16xf32>
    %cst_17 = arith.constant dense<0xFF800000> : vector<16xf32>
    %43 = vector.multi_reduction <maximumf>, %42, %cst_17 [1] : vector<16x16xf32> to vector<16xf32>
    %44 = vector.shape_cast %43 : vector<16xf32> to vector<16x1xf32>
    %45 = vector.broadcast %44 : vector<16x1xf32> to vector<16x16xf32>
    %46 = arith.subf %42, %45 : vector<16x16xf32>
    %47 = math.exp %46 : vector<16x16xf32>
    %cst_18 = arith.constant dense<0.000000e+00> : vector<16xf32>
    %48 = vector.multi_reduction <add>, %47, %cst_18 [1] : vector<16x16xf32> to vector<16xf32>
    %49 = vector.shape_cast %48 : vector<16xf32> to vector<16x1xf32>
    %50 = tpu.reciprocal %49 {approx = true} : vector<16x1xf32> -> vector<16x1xf32>
    %51 = vector.broadcast %50 : vector<16x1xf32> to vector<16x16xf32>
    %52 = arith.mulf %47, %51 : vector<16x16xf32>
    %53 = arith.addf %30, %52 : vector<16x16xf32>
    %54 = vector.extract_strided_slice %6 {offsets = [0, 4], sizes = [16, 4], strides = [1, 1]} : vector<16x64xf32> to vector<16x4xf32>
    %cst_19 = arith.constant dense<0.000000e+00> : vector<16x4xf32>
    %55 = tpu.matmul %52, %54, %cst_19 {dimension_numbers = #tpu.dot_dimension_numbers<[1], [0], [0], [1], [0, 0, 1, 1], [], []>} : vector<16x16xf32>, vector<16x4xf32>, vector<16x4xf32> -> vector<16x4xf32>
    %c0_20 = arith.constant 0 : index
    %c4 = arith.constant 4 : index
    %56 = vector.load %arg18[%c0_20, %c4] : memref<16x64xf32, #tpu.memory_space<vmem>>, vector<16x4xf32>
    tpu.vector_store %arg18[%c0_20, %c4], %55 {strides = array<i32>} : memref<16x64xf32, #tpu.memory_space<vmem>>, vector<16x4xf32>,
    %57 = vector.extract_strided_slice %7 {offsets = [0, 2], sizes = [16, 1], strides = [1, 1]} : vector<16x16xf32> to vector<16x1xf32>
    %58 = vector.extract_strided_slice %9 {offsets = [2, 0], sizes = [1, 16], strides = [1, 1]} : vector<16x16xf32> to vector<1x16xf32>
    %59 = vector.broadcast %57 : vector<16x1xf32> to vector<16x16xf32>
    %60 = vector.broadcast %58 : vector<1x16xf32> to vector<16x16xf32>
    %61 = arith.addf %59, %60 : vector<16x16xf32>
    %cst_21 = arith.constant 2.000000e-01 : f32
    %62 = vector.broadcast %cst_21 : f32 to vector<16x16xf32>
    %63 = arith.mulf %62, %61 : vector<16x16xf32>
    %64 = arith.maximumf %61, %63 : vector<16x16xf32>
    %65 = arith.addf %64, %0 : vector<16x16xf32>
    %cst_22 = arith.constant dense<0xFF800000> : vector<16xf32>
    %66 = vector.multi_reduction <maximumf>, %65, %cst_22 [1] : vector<16x16xf32> to vector<16xf32>
    %67 = vector.shape_cast %66 : vector<16xf32> to vector<16x1xf32>
    %68 = vector.broadcast %67 : vector<16x1xf32> to vector<16x16xf32>
    %69 = arith.subf %65, %68 : vector<16x16xf32>
    %70 = math.exp %69 : vector<16x16xf32>
    %cst_23 = arith.constant dense<0.000000e+00> : vector<16xf32>
    %71 = vector.multi_reduction <add>, %70, %cst_23 [1] : vector<16x16xf32> to vector<16xf32>
    %72 = vector.shape_cast %71 : vector<16xf32> to vector<16x1xf32>
    %73 = tpu.reciprocal %72 {approx = true} : vector<16x1xf32> -> vector<16x1xf32>
    %74 = vector.broadcast %73 : vector<16x1xf32> to vector<16x16xf32>
    %75 = arith.mulf %70, %74 : vector<16x16xf32>
    %76 = arith.addf %53, %75 : vector<16x16xf32>
    %77 = vector.extract_strided_slice %6 {offsets = [0, 8], sizes = [16, 4], strides = [1, 1]} : vector<16x64xf32> to vector<16x4xf32>
    %cst_24 = arith.constant dense<0.000000e+00> : vector<16x4xf32>
    %78 = tpu.matmul %75, %77, %cst_24 {dimension_numbers = #tpu.dot_dimension_numbers<[1], [0], [0], [1], [0, 0, 1, 1], [], []>} : vector<16x16xf32>, vector<16x4xf32>, vector<16x4xf32> -> vector<16x4xf32>
    %c0_25 = arith.constant 0 : index
    %c8 = arith.constant 8 : index
    %79 = vector.load %arg18[%c0_25, %c8] : memref<16x64xf32, #tpu.memory_space<vmem>>, vector<16x4xf32>
    tpu.vector_store %arg18[%c0_25, %c8], %78 {strides = array<i32>} : memref<16x64xf32, #tpu.memory_space<vmem>>, vector<16x4xf32>,
    %80 = vector.extract_strided_slice %7 {offsets = [0, 3], sizes = [16, 1], strides = [1, 1]} : vector<16x16xf32> to vector<16x1xf32>
    %81 = vector.extract_strided_slice %9 {offsets = [3, 0], sizes = [1, 16], strides = [1, 1]} : vector<16x16xf32> to vector<1x16xf32>
    %82 = vector.broadcast %80 : vector<16x1xf32> to vector<16x16xf32>
    %83 = vector.broadcast %81 : vector<1x16xf32> to vector<16x16xf32>
    %84 = arith.addf %82, %83 : vector<16x16xf32>
    %cst_26 = arith.constant 2.000000e-01 : f32
    %85 = vector.broadcast %cst_26 : f32 to vector<16x16xf32>
    %86 = arith.mulf %85, %84 : vector<16x16xf32>
    %87 = arith.maximumf %84, %86 : vector<16x16xf32>
    %88 = arith.addf %87, %0 : vector<16x16xf32>
    %cst_27 = arith.constant dense<0xFF800000> : vector<16xf32>
    %89 = vector.multi_reduction <maximumf>, %88, %cst_27 [1] : vector<16x16xf32> to vector<16xf32>
    %90 = vector.shape_cast %89 : vector<16xf32> to vector<16x1xf32>
    %91 = vector.broadcast %90 : vector<16x1xf32> to vector<16x16xf32>
    %92 = arith.subf %88, %91 : vector<16x16xf32>
    %93 = math.exp %92 : vector<16x16xf32>
    %cst_28 = arith.constant dense<0.000000e+00> : vector<16xf32>
    %94 = vector.multi_reduction <add>, %93, %cst_28 [1] : vector<16x16xf32> to vector<16xf32>
    %95 = vector.shape_cast %94 : vector<16xf32> to vector<16x1xf32>
    %96 = tpu.reciprocal %95 {approx = true} : vector<16x1xf32> -> vector<16x1xf32>
    %97 = vector.broadcast %96 : vector<16x1xf32> to vector<16x16xf32>
    %98 = arith.mulf %93, %97 : vector<16x16xf32>
    %99 = arith.addf %76, %98 : vector<16x16xf32>
    %100 = vector.extract_strided_slice %6 {offsets = [0, 12], sizes = [16, 4], strides = [1, 1]} : vector<16x64xf32> to vector<16x4xf32>
    %cst_29 = arith.constant dense<0.000000e+00> : vector<16x4xf32>
    %101 = tpu.matmul %98, %100, %cst_29 {dimension_numbers = #tpu.dot_dimension_numbers<[1], [0], [0], [1], [0, 0, 1, 1], [], []>} : vector<16x16xf32>, vector<16x4xf32>, vector<16x4xf32> -> vector<16x4xf32>
    %c0_30 = arith.constant 0 : index
    %c12 = arith.constant 12 : index
    %102 = vector.load %arg18[%c0_30, %c12] : memref<16x64xf32, #tpu.memory_space<vmem>>, vector<16x4xf32>
    tpu.vector_store %arg18[%c0_30, %c12], %101 {strides = array<i32>} : memref<16x64xf32, #tpu.memory_space<vmem>>, vector<16x4xf32>,
    %103 = vector.extract_strided_slice %7 {offsets = [0, 4], sizes = [16, 1], strides = [1, 1]} : vector<16x16xf32> to vector<16x1xf32>
    %104 = vector.extract_strided_slice %9 {offsets = [4, 0], sizes = [1, 16], strides = [1, 1]} : vector<16x16xf32> to vector<1x16xf32>
    %105 = vector.broadcast %103 : vector<16x1xf32> to vector<16x16xf32>
    %106 = vector.broadcast %104 : vector<1x16xf32> to vector<16x16xf32>
    %107 = arith.addf %105, %106 : vector<16x16xf32>
    %cst_31 = arith.constant 2.000000e-01 : f32
    %108 = vector.broadcast %cst_31 : f32 to vector<16x16xf32>
    %109 = arith.mulf %108, %107 : vector<16x16xf32>
    %110 = arith.maximumf %107, %109 : vector<16x16xf32>
    %111 = arith.addf %110, %0 : vector<16x16xf32>
    %cst_32 = arith.constant dense<0xFF800000> : vector<16xf32>
    %112 = vector.multi_reduction <maximumf>, %111, %cst_32 [1] : vector<16x16xf32> to vector<16xf32>
    %113 = vector.shape_cast %112 : vector<16xf32> to vector<16x1xf32>
    %114 = vector.broadcast %113 : vector<16x1xf32> to vector<16x16xf32>
    %115 = arith.subf %111, %114 : vector<16x16xf32>
    %116 = math.exp %115 : vector<16x16xf32>
    %cst_33 = arith.constant dense<0.000000e+00> : vector<16xf32>
    %117 = vector.multi_reduction <add>, %116, %cst_33 [1] : vector<16x16xf32> to vector<16xf32>
    %118 = vector.shape_cast %117 : vector<16xf32> to vector<16x1xf32>
    %119 = tpu.reciprocal %118 {approx = true} : vector<16x1xf32> -> vector<16x1xf32>
    %120 = vector.broadcast %119 : vector<16x1xf32> to vector<16x16xf32>
    %121 = arith.mulf %116, %120 : vector<16x16xf32>
    %122 = arith.addf %99, %121 : vector<16x16xf32>
    %123 = vector.extract_strided_slice %6 {offsets = [0, 16], sizes = [16, 4], strides = [1, 1]} : vector<16x64xf32> to vector<16x4xf32>
    %cst_34 = arith.constant dense<0.000000e+00> : vector<16x4xf32>
    %124 = tpu.matmul %121, %123, %cst_34 {dimension_numbers = #tpu.dot_dimension_numbers<[1], [0], [0], [1], [0, 0, 1, 1], [], []>} : vector<16x16xf32>, vector<16x4xf32>, vector<16x4xf32> -> vector<16x4xf32>
    %c0_35 = arith.constant 0 : index
    %c16 = arith.constant 16 : index
    %125 = vector.load %arg18[%c0_35, %c16] : memref<16x64xf32, #tpu.memory_space<vmem>>, vector<16x4xf32>
    tpu.vector_store %arg18[%c0_35, %c16], %124 {strides = array<i32>} : memref<16x64xf32, #tpu.memory_space<vmem>>, vector<16x4xf32>,
    %126 = vector.extract_strided_slice %7 {offsets = [0, 5], sizes = [16, 1], strides = [1, 1]} : vector<16x16xf32> to vector<16x1xf32>
    %127 = vector.extract_strided_slice %9 {offsets = [5, 0], sizes = [1, 16], strides = [1, 1]} : vector<16x16xf32> to vector<1x16xf32>
    %128 = vector.broadcast %126 : vector<16x1xf32> to vector<16x16xf32>
    %129 = vector.broadcast %127 : vector<1x16xf32> to vector<16x16xf32>
    %130 = arith.addf %128, %129 : vector<16x16xf32>
    %cst_36 = arith.constant 2.000000e-01 : f32
    %131 = vector.broadcast %cst_36 : f32 to vector<16x16xf32>
    %132 = arith.mulf %131, %130 : vector<16x16xf32>
    %133 = arith.maximumf %130, %132 : vector<16x16xf32>
    %134 = arith.addf %133, %0 : vector<16x16xf32>
    %cst_37 = arith.constant dense<0xFF800000> : vector<16xf32>
    %135 = vector.multi_reduction <maximumf>, %134, %cst_37 [1] : vector<16x16xf32> to vector<16xf32>
    %136 = vector.shape_cast %135 : vector<16xf32> to vector<16x1xf32>
    %137 = vector.broadcast %136 : vector<16x1xf32> to vector<16x16xf32>
    %138 = arith.subf %134, %137 : vector<16x16xf32>
    %139 = math.exp %138 : vector<16x16xf32>
    %cst_38 = arith.constant dense<0.000000e+00> : vector<16xf32>
    %140 = vector.multi_reduction <add>, %139, %cst_38 [1] : vector<16x16xf32> to vector<16xf32>
    %141 = vector.shape_cast %140 : vector<16xf32> to vector<16x1xf32>
    %142 = tpu.reciprocal %141 {approx = true} : vector<16x1xf32> -> vector<16x1xf32>
    %143 = vector.broadcast %142 : vector<16x1xf32> to vector<16x16xf32>
    %144 = arith.mulf %139, %143 : vector<16x16xf32>
    %145 = arith.addf %122, %144 : vector<16x16xf32>
    %146 = vector.extract_strided_slice %6 {offsets = [0, 20], sizes = [16, 4], strides = [1, 1]} : vector<16x64xf32> to vector<16x4xf32>
    %cst_39 = arith.constant dense<0.000000e+00> : vector<16x4xf32>
    %147 = tpu.matmul %144, %146, %cst_39 {dimension_numbers = #tpu.dot_dimension_numbers<[1], [0], [0], [1], [0, 0, 1, 1], [], []>} : vector<16x16xf32>, vector<16x4xf32>, vector<16x4xf32> -> vector<16x4xf32>
    %c0_40 = arith.constant 0 : index
    %c20 = arith.constant 20 : index
    %148 = vector.load %arg18[%c0_40, %c20] : memref<16x64xf32, #tpu.memory_space<vmem>>, vector<16x4xf32>
    tpu.vector_store %arg18[%c0_40, %c20], %147 {strides = array<i32>} : memref<16x64xf32, #tpu.memory_space<vmem>>, vector<16x4xf32>,
    %149 = vector.extract_strided_slice %7 {offsets = [0, 6], sizes = [16, 1], strides = [1, 1]} : vector<16x16xf32> to vector<16x1xf32>
    %150 = vector.extract_strided_slice %9 {offsets = [6, 0], sizes = [1, 16], strides = [1, 1]} : vector<16x16xf32> to vector<1x16xf32>
    %151 = vector.broadcast %149 : vector<16x1xf32> to vector<16x16xf32>
    %152 = vector.broadcast %150 : vector<1x16xf32> to vector<16x16xf32>
    %153 = arith.addf %151, %152 : vector<16x16xf32>
    %cst_41 = arith.constant 2.000000e-01 : f32
    %154 = vector.broadcast %cst_41 : f32 to vector<16x16xf32>
    %155 = arith.mulf %154, %153 : vector<16x16xf32>
    %156 = arith.maximumf %153, %155 : vector<16x16xf32>
    %157 = arith.addf %156, %0 : vector<16x16xf32>
    %cst_42 = arith.constant dense<0xFF800000> : vector<16xf32>
    %158 = vector.multi_reduction <maximumf>, %157, %cst_42 [1] : vector<16x16xf32> to vector<16xf32>
    %159 = vector.shape_cast %158 : vector<16xf32> to vector<16x1xf32>
    %160 = vector.broadcast %159 : vector<16x1xf32> to vector<16x16xf32>
    %161 = arith.subf %157, %160 : vector<16x16xf32>
    %162 = math.exp %161 : vector<16x16xf32>
    %cst_43 = arith.constant dense<0.000000e+00> : vector<16xf32>
    %163 = vector.multi_reduction <add>, %162, %cst_43 [1] : vector<16x16xf32> to vector<16xf32>
    %164 = vector.shape_cast %163 : vector<16xf32> to vector<16x1xf32>
    %165 = tpu.reciprocal %164 {approx = true} : vector<16x1xf32> -> vector<16x1xf32>
    %166 = vector.broadcast %165 : vector<16x1xf32> to vector<16x16xf32>
    %167 = arith.mulf %162, %166 : vector<16x16xf32>
    %168 = arith.addf %145, %167 : vector<16x16xf32>
    %169 = vector.extract_strided_slice %6 {offsets = [0, 24], sizes = [16, 4], strides = [1, 1]} : vector<16x64xf32> to vector<16x4xf32>
    %cst_44 = arith.constant dense<0.000000e+00> : vector<16x4xf32>
    %170 = tpu.matmul %167, %169, %cst_44 {dimension_numbers = #tpu.dot_dimension_numbers<[1], [0], [0], [1], [0, 0, 1, 1], [], []>} : vector<16x16xf32>, vector<16x4xf32>, vector<16x4xf32> -> vector<16x4xf32>
    %c0_45 = arith.constant 0 : index
    %c24 = arith.constant 24 : index
    %171 = vector.load %arg18[%c0_45, %c24] : memref<16x64xf32, #tpu.memory_space<vmem>>, vector<16x4xf32>
    tpu.vector_store %arg18[%c0_45, %c24], %170 {strides = array<i32>} : memref<16x64xf32, #tpu.memory_space<vmem>>, vector<16x4xf32>,
    %172 = vector.extract_strided_slice %7 {offsets = [0, 7], sizes = [16, 1], strides = [1, 1]} : vector<16x16xf32> to vector<16x1xf32>
    %173 = vector.extract_strided_slice %9 {offsets = [7, 0], sizes = [1, 16], strides = [1, 1]} : vector<16x16xf32> to vector<1x16xf32>
    %174 = vector.broadcast %172 : vector<16x1xf32> to vector<16x16xf32>
    %175 = vector.broadcast %173 : vector<1x16xf32> to vector<16x16xf32>
    %176 = arith.addf %174, %175 : vector<16x16xf32>
    %cst_46 = arith.constant 2.000000e-01 : f32
    %177 = vector.broadcast %cst_46 : f32 to vector<16x16xf32>
    %178 = arith.mulf %177, %176 : vector<16x16xf32>
    %179 = arith.maximumf %176, %178 : vector<16x16xf32>
    %180 = arith.addf %179, %0 : vector<16x16xf32>
    %cst_47 = arith.constant dense<0xFF800000> : vector<16xf32>
    %181 = vector.multi_reduction <maximumf>, %180, %cst_47 [1] : vector<16x16xf32> to vector<16xf32>
    %182 = vector.shape_cast %181 : vector<16xf32> to vector<16x1xf32>
    %183 = vector.broadcast %182 : vector<16x1xf32> to vector<16x16xf32>
    %184 = arith.subf %180, %183 : vector<16x16xf32>
    %185 = math.exp %184 : vector<16x16xf32>
    %cst_48 = arith.constant dense<0.000000e+00> : vector<16xf32>
    %186 = vector.multi_reduction <add>, %185, %cst_48 [1] : vector<16x16xf32> to vector<16xf32>
    %187 = vector.shape_cast %186 : vector<16xf32> to vector<16x1xf32>
    %188 = tpu.reciprocal %187 {approx = true} : vector<16x1xf32> -> vector<16x1xf32>
    %189 = vector.broadcast %188 : vector<16x1xf32> to vector<16x16xf32>
    %190 = arith.mulf %185, %189 : vector<16x16xf32>
    %191 = arith.addf %168, %190 : vector<16x16xf32>
    %192 = vector.extract_strided_slice %6 {offsets = [0, 28], sizes = [16, 4], strides = [1, 1]} : vector<16x64xf32> to vector<16x4xf32>
    %cst_49 = arith.constant dense<0.000000e+00> : vector<16x4xf32>
    %193 = tpu.matmul %190, %192, %cst_49 {dimension_numbers = #tpu.dot_dimension_numbers<[1], [0], [0], [1], [0, 0, 1, 1], [], []>} : vector<16x16xf32>, vector<16x4xf32>, vector<16x4xf32> -> vector<16x4xf32>
    %c0_50 = arith.constant 0 : index
    %c28 = arith.constant 28 : index
    %194 = vector.load %arg18[%c0_50, %c28] : memref<16x64xf32, #tpu.memory_space<vmem>>, vector<16x4xf32>
    tpu.vector_store %arg18[%c0_50, %c28], %193 {strides = array<i32>} : memref<16x64xf32, #tpu.memory_space<vmem>>, vector<16x4xf32>,
    %195 = vector.extract_strided_slice %7 {offsets = [0, 8], sizes = [16, 1], strides = [1, 1]} : vector<16x16xf32> to vector<16x1xf32>
    %196 = vector.extract_strided_slice %9 {offsets = [8, 0], sizes = [1, 16], strides = [1, 1]} : vector<16x16xf32> to vector<1x16xf32>
    %197 = vector.broadcast %195 : vector<16x1xf32> to vector<16x16xf32>
    %198 = vector.broadcast %196 : vector<1x16xf32> to vector<16x16xf32>
    %199 = arith.addf %197, %198 : vector<16x16xf32>
    %cst_51 = arith.constant 2.000000e-01 : f32
    %200 = vector.broadcast %cst_51 : f32 to vector<16x16xf32>
    %201 = arith.mulf %200, %199 : vector<16x16xf32>
    %202 = arith.maximumf %199, %201 : vector<16x16xf32>
    %203 = arith.addf %202, %0 : vector<16x16xf32>
    %cst_52 = arith.constant dense<0xFF800000> : vector<16xf32>
    %204 = vector.multi_reduction <maximumf>, %203, %cst_52 [1] : vector<16x16xf32> to vector<16xf32>
    %205 = vector.shape_cast %204 : vector<16xf32> to vector<16x1xf32>
    %206 = vector.broadcast %205 : vector<16x1xf32> to vector<16x16xf32>
    %207 = arith.subf %203, %206 : vector<16x16xf32>
    %208 = math.exp %207 : vector<16x16xf32>
    %cst_53 = arith.constant dense<0.000000e+00> : vector<16xf32>
    %209 = vector.multi_reduction <add>, %208, %cst_53 [1] : vector<16x16xf32> to vector<16xf32>
    %210 = vector.shape_cast %209 : vector<16xf32> to vector<16x1xf32>
    %211 = tpu.reciprocal %210 {approx = true} : vector<16x1xf32> -> vector<16x1xf32>
    %212 = vector.broadcast %211 : vector<16x1xf32> to vector<16x16xf32>
    %213 = arith.mulf %208, %212 : vector<16x16xf32>
    %214 = arith.addf %191, %213 : vector<16x16xf32>
    %215 = vector.extract_strided_slice %6 {offsets = [0, 32], sizes = [16, 4], strides = [1, 1]} : vector<16x64xf32> to vector<16x4xf32>
    %cst_54 = arith.constant dense<0.000000e+00> : vector<16x4xf32>
    %216 = tpu.matmul %213, %215, %cst_54 {dimension_numbers = #tpu.dot_dimension_numbers<[1], [0], [0], [1], [0, 0, 1, 1], [], []>} : vector<16x16xf32>, vector<16x4xf32>, vector<16x4xf32> -> vector<16x4xf32>
    %c0_55 = arith.constant 0 : index
    %c32 = arith.constant 32 : index
    %217 = vector.load %arg18[%c0_55, %c32] : memref<16x64xf32, #tpu.memory_space<vmem>>, vector<16x4xf32>
    tpu.vector_store %arg18[%c0_55, %c32], %216 {strides = array<i32>} : memref<16x64xf32, #tpu.memory_space<vmem>>, vector<16x4xf32>,
    %218 = vector.extract_strided_slice %7 {offsets = [0, 9], sizes = [16, 1], strides = [1, 1]} : vector<16x16xf32> to vector<16x1xf32>
    %219 = vector.extract_strided_slice %9 {offsets = [9, 0], sizes = [1, 16], strides = [1, 1]} : vector<16x16xf32> to vector<1x16xf32>
    %220 = vector.broadcast %218 : vector<16x1xf32> to vector<16x16xf32>
    %221 = vector.broadcast %219 : vector<1x16xf32> to vector<16x16xf32>
    %222 = arith.addf %220, %221 : vector<16x16xf32>
    %cst_56 = arith.constant 2.000000e-01 : f32
    %223 = vector.broadcast %cst_56 : f32 to vector<16x16xf32>
    %224 = arith.mulf %223, %222 : vector<16x16xf32>
    %225 = arith.maximumf %222, %224 : vector<16x16xf32>
    %226 = arith.addf %225, %0 : vector<16x16xf32>
    %cst_57 = arith.constant dense<0xFF800000> : vector<16xf32>
    %227 = vector.multi_reduction <maximumf>, %226, %cst_57 [1] : vector<16x16xf32> to vector<16xf32>
    %228 = vector.shape_cast %227 : vector<16xf32> to vector<16x1xf32>
    %229 = vector.broadcast %228 : vector<16x1xf32> to vector<16x16xf32>
    %230 = arith.subf %226, %229 : vector<16x16xf32>
    %231 = math.exp %230 : vector<16x16xf32>
    %cst_58 = arith.constant dense<0.000000e+00> : vector<16xf32>
    %232 = vector.multi_reduction <add>, %231, %cst_58 [1] : vector<16x16xf32> to vector<16xf32>
    %233 = vector.shape_cast %232 : vector<16xf32> to vector<16x1xf32>
    %234 = tpu.reciprocal %233 {approx = true} : vector<16x1xf32> -> vector<16x1xf32>
    %235 = vector.broadcast %234 : vector<16x1xf32> to vector<16x16xf32>
    %236 = arith.mulf %231, %235 : vector<16x16xf32>
    %237 = arith.addf %214, %236 : vector<16x16xf32>
    %238 = vector.extract_strided_slice %6 {offsets = [0, 36], sizes = [16, 4], strides = [1, 1]} : vector<16x64xf32> to vector<16x4xf32>
    %cst_59 = arith.constant dense<0.000000e+00> : vector<16x4xf32>
    %239 = tpu.matmul %236, %238, %cst_59 {dimension_numbers = #tpu.dot_dimension_numbers<[1], [0], [0], [1], [0, 0, 1, 1], [], []>} : vector<16x16xf32>, vector<16x4xf32>, vector<16x4xf32> -> vector<16x4xf32>
    %c0_60 = arith.constant 0 : index
    %c36 = arith.constant 36 : index
    %240 = vector.load %arg18[%c0_60, %c36] : memref<16x64xf32, #tpu.memory_space<vmem>>, vector<16x4xf32>
    tpu.vector_store %arg18[%c0_60, %c36], %239 {strides = array<i32>} : memref<16x64xf32, #tpu.memory_space<vmem>>, vector<16x4xf32>,
    %241 = vector.extract_strided_slice %7 {offsets = [0, 10], sizes = [16, 1], strides = [1, 1]} : vector<16x16xf32> to vector<16x1xf32>
    %242 = vector.extract_strided_slice %9 {offsets = [10, 0], sizes = [1, 16], strides = [1, 1]} : vector<16x16xf32> to vector<1x16xf32>
    %243 = vector.broadcast %241 : vector<16x1xf32> to vector<16x16xf32>
    %244 = vector.broadcast %242 : vector<1x16xf32> to vector<16x16xf32>
    %245 = arith.addf %243, %244 : vector<16x16xf32>
    %cst_61 = arith.constant 2.000000e-01 : f32
    %246 = vector.broadcast %cst_61 : f32 to vector<16x16xf32>
    %247 = arith.mulf %246, %245 : vector<16x16xf32>
    %248 = arith.maximumf %245, %247 : vector<16x16xf32>
    %249 = arith.addf %248, %0 : vector<16x16xf32>
    %cst_62 = arith.constant dense<0xFF800000> : vector<16xf32>
    %250 = vector.multi_reduction <maximumf>, %249, %cst_62 [1] : vector<16x16xf32> to vector<16xf32>
    %251 = vector.shape_cast %250 : vector<16xf32> to vector<16x1xf32>
    %252 = vector.broadcast %251 : vector<16x1xf32> to vector<16x16xf32>
    %253 = arith.subf %249, %252 : vector<16x16xf32>
    %254 = math.exp %253 : vector<16x16xf32>
    %cst_63 = arith.constant dense<0.000000e+00> : vector<16xf32>
    %255 = vector.multi_reduction <add>, %254, %cst_63 [1] : vector<16x16xf32> to vector<16xf32>
    %256 = vector.shape_cast %255 : vector<16xf32> to vector<16x1xf32>
    %257 = tpu.reciprocal %256 {approx = true} : vector<16x1xf32> -> vector<16x1xf32>
    %258 = vector.broadcast %257 : vector<16x1xf32> to vector<16x16xf32>
    %259 = arith.mulf %254, %258 : vector<16x16xf32>
    %260 = arith.addf %237, %259 : vector<16x16xf32>
    %261 = vector.extract_strided_slice %6 {offsets = [0, 40], sizes = [16, 4], strides = [1, 1]} : vector<16x64xf32> to vector<16x4xf32>
    %cst_64 = arith.constant dense<0.000000e+00> : vector<16x4xf32>
    %262 = tpu.matmul %259, %261, %cst_64 {dimension_numbers = #tpu.dot_dimension_numbers<[1], [0], [0], [1], [0, 0, 1, 1], [], []>} : vector<16x16xf32>, vector<16x4xf32>, vector<16x4xf32> -> vector<16x4xf32>
    %c0_65 = arith.constant 0 : index
    %c40 = arith.constant 40 : index
    %263 = vector.load %arg18[%c0_65, %c40] : memref<16x64xf32, #tpu.memory_space<vmem>>, vector<16x4xf32>
    tpu.vector_store %arg18[%c0_65, %c40], %262 {strides = array<i32>} : memref<16x64xf32, #tpu.memory_space<vmem>>, vector<16x4xf32>,
    %264 = vector.extract_strided_slice %7 {offsets = [0, 11], sizes = [16, 1], strides = [1, 1]} : vector<16x16xf32> to vector<16x1xf32>
    %265 = vector.extract_strided_slice %9 {offsets = [11, 0], sizes = [1, 16], strides = [1, 1]} : vector<16x16xf32> to vector<1x16xf32>
    %266 = vector.broadcast %264 : vector<16x1xf32> to vector<16x16xf32>
    %267 = vector.broadcast %265 : vector<1x16xf32> to vector<16x16xf32>
    %268 = arith.addf %266, %267 : vector<16x16xf32>
    %cst_66 = arith.constant 2.000000e-01 : f32
    %269 = vector.broadcast %cst_66 : f32 to vector<16x16xf32>
    %270 = arith.mulf %269, %268 : vector<16x16xf32>
    %271 = arith.maximumf %268, %270 : vector<16x16xf32>
    %272 = arith.addf %271, %0 : vector<16x16xf32>
    %cst_67 = arith.constant dense<0xFF800000> : vector<16xf32>
    %273 = vector.multi_reduction <maximumf>, %272, %cst_67 [1] : vector<16x16xf32> to vector<16xf32>
    %274 = vector.shape_cast %273 : vector<16xf32> to vector<16x1xf32>
    %275 = vector.broadcast %274 : vector<16x1xf32> to vector<16x16xf32>
    %276 = arith.subf %272, %275 : vector<16x16xf32>
    %277 = math.exp %276 : vector<16x16xf32>
    %cst_68 = arith.constant dense<0.000000e+00> : vector<16xf32>
    %278 = vector.multi_reduction <add>, %277, %cst_68 [1] : vector<16x16xf32> to vector<16xf32>
    %279 = vector.shape_cast %278 : vector<16xf32> to vector<16x1xf32>
    %280 = tpu.reciprocal %279 {approx = true} : vector<16x1xf32> -> vector<16x1xf32>
    %281 = vector.broadcast %280 : vector<16x1xf32> to vector<16x16xf32>
    %282 = arith.mulf %277, %281 : vector<16x16xf32>
    %283 = arith.addf %260, %282 : vector<16x16xf32>
    %284 = vector.extract_strided_slice %6 {offsets = [0, 44], sizes = [16, 4], strides = [1, 1]} : vector<16x64xf32> to vector<16x4xf32>
    %cst_69 = arith.constant dense<0.000000e+00> : vector<16x4xf32>
    %285 = tpu.matmul %282, %284, %cst_69 {dimension_numbers = #tpu.dot_dimension_numbers<[1], [0], [0], [1], [0, 0, 1, 1], [], []>} : vector<16x16xf32>, vector<16x4xf32>, vector<16x4xf32> -> vector<16x4xf32>
    %c0_70 = arith.constant 0 : index
    %c44 = arith.constant 44 : index
    %286 = vector.load %arg18[%c0_70, %c44] : memref<16x64xf32, #tpu.memory_space<vmem>>, vector<16x4xf32>
    tpu.vector_store %arg18[%c0_70, %c44], %285 {strides = array<i32>} : memref<16x64xf32, #tpu.memory_space<vmem>>, vector<16x4xf32>,
    %287 = vector.extract_strided_slice %7 {offsets = [0, 12], sizes = [16, 1], strides = [1, 1]} : vector<16x16xf32> to vector<16x1xf32>
    %288 = vector.extract_strided_slice %9 {offsets = [12, 0], sizes = [1, 16], strides = [1, 1]} : vector<16x16xf32> to vector<1x16xf32>
    %289 = vector.broadcast %287 : vector<16x1xf32> to vector<16x16xf32>
    %290 = vector.broadcast %288 : vector<1x16xf32> to vector<16x16xf32>
    %291 = arith.addf %289, %290 : vector<16x16xf32>
    %cst_71 = arith.constant 2.000000e-01 : f32
    %292 = vector.broadcast %cst_71 : f32 to vector<16x16xf32>
    %293 = arith.mulf %292, %291 : vector<16x16xf32>
    %294 = arith.maximumf %291, %293 : vector<16x16xf32>
    %295 = arith.addf %294, %0 : vector<16x16xf32>
    %cst_72 = arith.constant dense<0xFF800000> : vector<16xf32>
    %296 = vector.multi_reduction <maximumf>, %295, %cst_72 [1] : vector<16x16xf32> to vector<16xf32>
    %297 = vector.shape_cast %296 : vector<16xf32> to vector<16x1xf32>
    %298 = vector.broadcast %297 : vector<16x1xf32> to vector<16x16xf32>
    %299 = arith.subf %295, %298 : vector<16x16xf32>
    %300 = math.exp %299 : vector<16x16xf32>
    %cst_73 = arith.constant dense<0.000000e+00> : vector<16xf32>
    %301 = vector.multi_reduction <add>, %300, %cst_73 [1] : vector<16x16xf32> to vector<16xf32>
    %302 = vector.shape_cast %301 : vector<16xf32> to vector<16x1xf32>
    %303 = tpu.reciprocal %302 {approx = true} : vector<16x1xf32> -> vector<16x1xf32>
    %304 = vector.broadcast %303 : vector<16x1xf32> to vector<16x16xf32>
    %305 = arith.mulf %300, %304 : vector<16x16xf32>
    %306 = arith.addf %283, %305 : vector<16x16xf32>
    %307 = vector.extract_strided_slice %6 {offsets = [0, 48], sizes = [16, 4], strides = [1, 1]} : vector<16x64xf32> to vector<16x4xf32>
    %cst_74 = arith.constant dense<0.000000e+00> : vector<16x4xf32>
    %308 = tpu.matmul %305, %307, %cst_74 {dimension_numbers = #tpu.dot_dimension_numbers<[1], [0], [0], [1], [0, 0, 1, 1], [], []>} : vector<16x16xf32>, vector<16x4xf32>, vector<16x4xf32> -> vector<16x4xf32>
    %c0_75 = arith.constant 0 : index
    %c48 = arith.constant 48 : index
    %309 = vector.load %arg18[%c0_75, %c48] : memref<16x64xf32, #tpu.memory_space<vmem>>, vector<16x4xf32>
    tpu.vector_store %arg18[%c0_75, %c48], %308 {strides = array<i32>} : memref<16x64xf32, #tpu.memory_space<vmem>>, vector<16x4xf32>,
    %310 = vector.extract_strided_slice %7 {offsets = [0, 13], sizes = [16, 1], strides = [1, 1]} : vector<16x16xf32> to vector<16x1xf32>
    %311 = vector.extract_strided_slice %9 {offsets = [13, 0], sizes = [1, 16], strides = [1, 1]} : vector<16x16xf32> to vector<1x16xf32>
    %312 = vector.broadcast %310 : vector<16x1xf32> to vector<16x16xf32>
    %313 = vector.broadcast %311 : vector<1x16xf32> to vector<16x16xf32>
    %314 = arith.addf %312, %313 : vector<16x16xf32>
    %cst_76 = arith.constant 2.000000e-01 : f32
    %315 = vector.broadcast %cst_76 : f32 to vector<16x16xf32>
    %316 = arith.mulf %315, %314 : vector<16x16xf32>
    %317 = arith.maximumf %314, %316 : vector<16x16xf32>
    %318 = arith.addf %317, %0 : vector<16x16xf32>
    %cst_77 = arith.constant dense<0xFF800000> : vector<16xf32>
    %319 = vector.multi_reduction <maximumf>, %318, %cst_77 [1] : vector<16x16xf32> to vector<16xf32>
    %320 = vector.shape_cast %319 : vector<16xf32> to vector<16x1xf32>
    %321 = vector.broadcast %320 : vector<16x1xf32> to vector<16x16xf32>
    %322 = arith.subf %318, %321 : vector<16x16xf32>
    %323 = math.exp %322 : vector<16x16xf32>
    %cst_78 = arith.constant dense<0.000000e+00> : vector<16xf32>
    %324 = vector.multi_reduction <add>, %323, %cst_78 [1] : vector<16x16xf32> to vector<16xf32>
    %325 = vector.shape_cast %324 : vector<16xf32> to vector<16x1xf32>
    %326 = tpu.reciprocal %325 {approx = true} : vector<16x1xf32> -> vector<16x1xf32>
    %327 = vector.broadcast %326 : vector<16x1xf32> to vector<16x16xf32>
    %328 = arith.mulf %323, %327 : vector<16x16xf32>
    %329 = arith.addf %306, %328 : vector<16x16xf32>
    %330 = vector.extract_strided_slice %6 {offsets = [0, 52], sizes = [16, 4], strides = [1, 1]} : vector<16x64xf32> to vector<16x4xf32>
    %cst_79 = arith.constant dense<0.000000e+00> : vector<16x4xf32>
    %331 = tpu.matmul %328, %330, %cst_79 {dimension_numbers = #tpu.dot_dimension_numbers<[1], [0], [0], [1], [0, 0, 1, 1], [], []>} : vector<16x16xf32>, vector<16x4xf32>, vector<16x4xf32> -> vector<16x4xf32>
    %c0_80 = arith.constant 0 : index
    %c52 = arith.constant 52 : index
    %332 = vector.load %arg18[%c0_80, %c52] : memref<16x64xf32, #tpu.memory_space<vmem>>, vector<16x4xf32>
    tpu.vector_store %arg18[%c0_80, %c52], %331 {strides = array<i32>} : memref<16x64xf32, #tpu.memory_space<vmem>>, vector<16x4xf32>,
    %333 = vector.extract_strided_slice %7 {offsets = [0, 14], sizes = [16, 1], strides = [1, 1]} : vector<16x16xf32> to vector<16x1xf32>
    %334 = vector.extract_strided_slice %9 {offsets = [14, 0], sizes = [1, 16], strides = [1, 1]} : vector<16x16xf32> to vector<1x16xf32>
    %335 = vector.broadcast %333 : vector<16x1xf32> to vector<16x16xf32>
    %336 = vector.broadcast %334 : vector<1x16xf32> to vector<16x16xf32>
    %337 = arith.addf %335, %336 : vector<16x16xf32>
    %cst_81 = arith.constant 2.000000e-01 : f32
    %338 = vector.broadcast %cst_81 : f32 to vector<16x16xf32>
    %339 = arith.mulf %338, %337 : vector<16x16xf32>
    %340 = arith.maximumf %337, %339 : vector<16x16xf32>
    %341 = arith.addf %340, %0 : vector<16x16xf32>
    %cst_82 = arith.constant dense<0xFF800000> : vector<16xf32>
    %342 = vector.multi_reduction <maximumf>, %341, %cst_82 [1] : vector<16x16xf32> to vector<16xf32>
    %343 = vector.shape_cast %342 : vector<16xf32> to vector<16x1xf32>
    %344 = vector.broadcast %343 : vector<16x1xf32> to vector<16x16xf32>
    %345 = arith.subf %341, %344 : vector<16x16xf32>
    %346 = math.exp %345 : vector<16x16xf32>
    %cst_83 = arith.constant dense<0.000000e+00> : vector<16xf32>
    %347 = vector.multi_reduction <add>, %346, %cst_83 [1] : vector<16x16xf32> to vector<16xf32>
    %348 = vector.shape_cast %347 : vector<16xf32> to vector<16x1xf32>
    %349 = tpu.reciprocal %348 {approx = true} : vector<16x1xf32> -> vector<16x1xf32>
    %350 = vector.broadcast %349 : vector<16x1xf32> to vector<16x16xf32>
    %351 = arith.mulf %346, %350 : vector<16x16xf32>
    %352 = arith.addf %329, %351 : vector<16x16xf32>
    %353 = vector.extract_strided_slice %6 {offsets = [0, 56], sizes = [16, 4], strides = [1, 1]} : vector<16x64xf32> to vector<16x4xf32>
    %cst_84 = arith.constant dense<0.000000e+00> : vector<16x4xf32>
    %354 = tpu.matmul %351, %353, %cst_84 {dimension_numbers = #tpu.dot_dimension_numbers<[1], [0], [0], [1], [0, 0, 1, 1], [], []>} : vector<16x16xf32>, vector<16x4xf32>, vector<16x4xf32> -> vector<16x4xf32>
    %c0_85 = arith.constant 0 : index
    %c56 = arith.constant 56 : index
    %355 = vector.load %arg18[%c0_85, %c56] : memref<16x64xf32, #tpu.memory_space<vmem>>, vector<16x4xf32>
    tpu.vector_store %arg18[%c0_85, %c56], %354 {strides = array<i32>} : memref<16x64xf32, #tpu.memory_space<vmem>>, vector<16x4xf32>,
    %356 = vector.extract_strided_slice %7 {offsets = [0, 15], sizes = [16, 1], strides = [1, 1]} : vector<16x16xf32> to vector<16x1xf32>
    %357 = vector.extract_strided_slice %9 {offsets = [15, 0], sizes = [1, 16], strides = [1, 1]} : vector<16x16xf32> to vector<1x16xf32>
    %358 = vector.broadcast %356 : vector<16x1xf32> to vector<16x16xf32>
    %359 = vector.broadcast %357 : vector<1x16xf32> to vector<16x16xf32>
    %360 = arith.addf %358, %359 : vector<16x16xf32>
    %cst_86 = arith.constant 2.000000e-01 : f32
    %361 = vector.broadcast %cst_86 : f32 to vector<16x16xf32>
    %362 = arith.mulf %361, %360 : vector<16x16xf32>
    %363 = arith.maximumf %360, %362 : vector<16x16xf32>
    %364 = arith.addf %363, %0 : vector<16x16xf32>
    %cst_87 = arith.constant dense<0xFF800000> : vector<16xf32>
    %365 = vector.multi_reduction <maximumf>, %364, %cst_87 [1] : vector<16x16xf32> to vector<16xf32>
    %366 = vector.shape_cast %365 : vector<16xf32> to vector<16x1xf32>
    %367 = vector.broadcast %366 : vector<16x1xf32> to vector<16x16xf32>
    %368 = arith.subf %364, %367 : vector<16x16xf32>
    %369 = math.exp %368 : vector<16x16xf32>
    %cst_88 = arith.constant dense<0.000000e+00> : vector<16xf32>
    %370 = vector.multi_reduction <add>, %369, %cst_88 [1] : vector<16x16xf32> to vector<16xf32>
    %371 = vector.shape_cast %370 : vector<16xf32> to vector<16x1xf32>
    %372 = tpu.reciprocal %371 {approx = true} : vector<16x1xf32> -> vector<16x1xf32>
    %373 = vector.broadcast %372 : vector<16x1xf32> to vector<16x16xf32>
    %374 = arith.mulf %369, %373 : vector<16x16xf32>
    %375 = arith.addf %352, %374 : vector<16x16xf32>
    %376 = vector.extract_strided_slice %6 {offsets = [0, 60], sizes = [16, 4], strides = [1, 1]} : vector<16x64xf32> to vector<16x4xf32>
    %cst_89 = arith.constant dense<0.000000e+00> : vector<16x4xf32>
    %377 = tpu.matmul %374, %376, %cst_89 {dimension_numbers = #tpu.dot_dimension_numbers<[1], [0], [0], [1], [0, 0, 1, 1], [], []>} : vector<16x16xf32>, vector<16x4xf32>, vector<16x4xf32> -> vector<16x4xf32>
    %c0_90 = arith.constant 0 : index
    %c60 = arith.constant 60 : index
    %378 = vector.load %arg18[%c0_90, %c60] : memref<16x64xf32, #tpu.memory_space<vmem>>, vector<16x4xf32>
    tpu.vector_store %arg18[%c0_90, %c60], %377 {strides = array<i32>} : memref<16x64xf32, #tpu.memory_space<vmem>>, vector<16x4xf32>,
    %c0_91 = arith.constant 0 : index
    %c0_92 = arith.constant 0 : index
    %379 = vector.load %arg18[%c0_91, %c0_92] : memref<16x64xf32, #tpu.memory_space<vmem>>, vector<16x64xf32>
    %c0_93 = arith.constant 0 : index
    %c0_94 = arith.constant 0 : index
    %380 = vector.load %arg5[%c0_93, %c0_94] : memref<1x64xf32, #tpu.memory_space<vmem>>, vector<1x64xf32>
    %381 = vector.broadcast %380 : vector<1x64xf32> to vector<16x64xf32>
    %382 = arith.addf %379, %381 : vector<16x64xf32>
    %cst_95 = arith.constant 0.000000e+00 : f32
    %383 = vector.broadcast %cst_95 : f32 to vector<16x64xf32>
    %384 = arith.cmpf ogt, %382, %383 : vector<16x64xf32>
    %cst_96 = arith.constant 0.000000e+00 : f32
    %385 = vector.broadcast %cst_96 : f32 to vector<16x64xf32>
    %386 = arith.minimumf %382, %385 : vector<16x64xf32>
    %387 = math.exp %386 : vector<16x64xf32>
    %cst_97 = arith.constant 1.000000e+00 : f32
    %388 = vector.broadcast %cst_97 : f32 to vector<16x64xf32>
    %389 = arith.subf %387, %388 : vector<16x64xf32>
    %390 = arith.select %384, %382, %389 : vector<16x64xi1>, vector<16x64xf32>
    %cst_98 = arith.constant dense<0.000000e+00> : vector<16xf32>
    %391 = vector.multi_reduction <add>, %390, %cst_98 [1] : vector<16x64xf32> to vector<16xf32>
    %392 = vector.shape_cast %391 : vector<16xf32> to vector<16x1xf32>
    %cst_99 = arith.constant 6.400000e+01 : f32
    %393 = vector.broadcast %cst_99 : f32 to vector<16x1xf32>
    %394 = arith.divf %392, %393 : vector<16x1xf32>
    %395 = vector.broadcast %394 : vector<16x1xf32> to vector<16x64xf32>
    %396 = arith.subf %390, %395 : vector<16x64xf32>
    %397 = arith.mulf %396, %396 : vector<16x64xf32>
    %cst_100 = arith.constant dense<0.000000e+00> : vector<16xf32>
    %398 = vector.multi_reduction <add>, %397, %cst_100 [1] : vector<16x64xf32> to vector<16xf32>
    %399 = vector.shape_cast %398 : vector<16xf32> to vector<16x1xf32>
    %cst_101 = arith.constant 6.400000e+01 : f32
    %400 = vector.broadcast %cst_101 : f32 to vector<16x1xf32>
    %401 = arith.divf %399, %400 : vector<16x1xf32>
    %402 = vector.broadcast %394 : vector<16x1xf32> to vector<16x64xf32>
    %403 = arith.subf %390, %402 : vector<16x64xf32>
    %cst_102 = arith.constant 9.99999974E-6 : f32
    %404 = vector.broadcast %cst_102 : f32 to vector<16x1xf32>
    %405 = arith.addf %401, %404 : vector<16x1xf32>
    %406 = math.rsqrt %405 : vector<16x1xf32>
    %407 = vector.broadcast %406 : vector<16x1xf32> to vector<16x64xf32>
    %408 = arith.mulf %403, %407 : vector<16x64xf32>
    %c0_103 = arith.constant 0 : index
    %c0_104 = arith.constant 0 : index
    %409 = vector.load %arg6[%c0_103, %c0_104] : memref<1x64xf32, #tpu.memory_space<vmem>>, vector<1x64xf32>
    %410 = vector.broadcast %409 : vector<1x64xf32> to vector<16x64xf32>
    %411 = arith.mulf %408, %410 : vector<16x64xf32>
    %c0_105 = arith.constant 0 : index
    %c0_106 = arith.constant 0 : index
    %412 = vector.load %arg7[%c0_105, %c0_106] : memref<1x64xf32, #tpu.memory_space<vmem>>, vector<1x64xf32>
    %413 = vector.broadcast %412 : vector<1x64xf32> to vector<16x64xf32>
    %414 = arith.addf %411, %413 : vector<16x64xf32>
    %415 = vector.extract_strided_slice %5 {offsets = [0, 96], sizes = [16, 64], strides = [1, 1]} : vector<16x160xf32> to vector<16x64xf32>
    %416 = arith.addf %414, %415 : vector<16x64xf32>
    %cst_107 = arith.constant 6.250000e-02 : f32
    %417 = vector.broadcast %cst_107 : f32 to vector<16x16xf32>
    %418 = arith.mulf %375, %417 : vector<16x16xf32>
    %cst_108 = arith.constant dense<0.000000e+00> : vector<16x32xf32>
    %419 = tpu.matmul %418, %1, %cst_108 {dimension_numbers = #tpu.dot_dimension_numbers<[1], [0], [0], [1], [0, 0, 1, 1], [], []>} : vector<16x16xf32>, vector<16x32xf32>, vector<16x32xf32> -> vector<16x32xf32>
    %420 = arith.mulf %419, %2 : vector<16x32xf32>
    %cst_109 = arith.constant dense<0.000000e+00> : vector<32xf32>
    %421 = vector.multi_reduction <add>, %420, %cst_109 [0] : vector<16x32xf32> to vector<32xf32>
    %422 = vector.shape_cast %421 : vector<32xf32> to vector<1x32xf32>
    %c0_110 = arith.constant 0 : index
    %c0_111 = arith.constant 0 : index
    %423 = vector.load %arg8[%c0_110, %c0_111] : memref<64x80xf32, #tpu.memory_space<vmem>>, vector<64x80xf32>
    %cst_112 = arith.constant dense<0.000000e+00> : vector<16x80xf32>
    %424 = tpu.matmul %416, %423, %cst_112 {dimension_numbers = #tpu.dot_dimension_numbers<[1], [0], [0], [1], [0, 0, 1, 1], [], []>} : vector<16x64xf32>, vector<64x80xf32>, vector<16x80xf32> -> vector<16x80xf32>
    %425 = vector.extract_strided_slice %424 {offsets = [0, 0], sizes = [16, 32], strides = [1, 1]} : vector<16x80xf32> to vector<16x32xf32>
    %426 = vector.extract_strided_slice %424 {offsets = [0, 32], sizes = [16, 8], strides = [1, 1]} : vector<16x80xf32> to vector<16x8xf32>
    %427 = vector.extract_strided_slice %424 {offsets = [0, 40], sizes = [16, 8], strides = [1, 1]} : vector<16x80xf32> to vector<16x8xf32>
    %428 = tpu.transpose %427, [1, 0] : vector<16x8xf32> -> vector<8x16xf32>
    %cst_113 = arith.constant 0.000000e+00 : f32
    %429 = vector.broadcast %cst_113 : f32 to vector<16x16xf32>
    %430 = vector.extract_strided_slice %426 {offsets = [0, 0], sizes = [16, 1], strides = [1, 1]} : vector<16x8xf32> to vector<16x1xf32>
    %431 = vector.extract_strided_slice %428 {offsets = [0, 0], sizes = [1, 16], strides = [1, 1]} : vector<8x16xf32> to vector<1x16xf32>
    %432 = vector.broadcast %430 : vector<16x1xf32> to vector<16x16xf32>
    %433 = vector.broadcast %431 : vector<1x16xf32> to vector<16x16xf32>
    %434 = arith.addf %432, %433 : vector<16x16xf32>
    %cst_114 = arith.constant 2.000000e-01 : f32
    %435 = vector.broadcast %cst_114 : f32 to vector<16x16xf32>
    %436 = arith.mulf %435, %434 : vector<16x16xf32>
    %437 = arith.maximumf %434, %436 : vector<16x16xf32>
    %438 = arith.addf %437, %0 : vector<16x16xf32>
    %cst_115 = arith.constant dense<0xFF800000> : vector<16xf32>
    %439 = vector.multi_reduction <maximumf>, %438, %cst_115 [1] : vector<16x16xf32> to vector<16xf32>
    %440 = vector.shape_cast %439 : vector<16xf32> to vector<16x1xf32>
    %441 = vector.broadcast %440 : vector<16x1xf32> to vector<16x16xf32>
    %442 = arith.subf %438, %441 : vector<16x16xf32>
    %443 = math.exp %442 : vector<16x16xf32>
    %cst_116 = arith.constant dense<0.000000e+00> : vector<16xf32>
    %444 = vector.multi_reduction <add>, %443, %cst_116 [1] : vector<16x16xf32> to vector<16xf32>
    %445 = vector.shape_cast %444 : vector<16xf32> to vector<16x1xf32>
    %446 = tpu.reciprocal %445 {approx = true} : vector<16x1xf32> -> vector<16x1xf32>
    %447 = vector.broadcast %446 : vector<16x1xf32> to vector<16x16xf32>
    %448 = arith.mulf %443, %447 : vector<16x16xf32>
    %449 = arith.addf %429, %448 : vector<16x16xf32>
    %450 = vector.extract_strided_slice %425 {offsets = [0, 0], sizes = [16, 4], strides = [1, 1]} : vector<16x32xf32> to vector<16x4xf32>
    %cst_117 = arith.constant dense<0.000000e+00> : vector<16x4xf32>
    %451 = tpu.matmul %448, %450, %cst_117 {dimension_numbers = #tpu.dot_dimension_numbers<[1], [0], [0], [1], [0, 0, 1, 1], [], []>} : vector<16x16xf32>, vector<16x4xf32>, vector<16x4xf32> -> vector<16x4xf32>
    %c0_118 = arith.constant 0 : index
    %c0_119 = arith.constant 0 : index
    %452 = vector.load %arg18[%c0_118, %c0_119] : memref<16x64xf32, #tpu.memory_space<vmem>>, vector<16x4xf32>
    tpu.vector_store %arg18[%c0_118, %c0_119], %451 {strides = array<i32>} : memref<16x64xf32, #tpu.memory_space<vmem>>, vector<16x4xf32>,
    %453 = vector.extract_strided_slice %426 {offsets = [0, 1], sizes = [16, 1], strides = [1, 1]} : vector<16x8xf32> to vector<16x1xf32>
    %454 = vector.extract_strided_slice %428 {offsets = [1, 0], sizes = [1, 16], strides = [1, 1]} : vector<8x16xf32> to vector<1x16xf32>
    %455 = vector.broadcast %453 : vector<16x1xf32> to vector<16x16xf32>
    %456 = vector.broadcast %454 : vector<1x16xf32> to vector<16x16xf32>
    %457 = arith.addf %455, %456 : vector<16x16xf32>
    %cst_120 = arith.constant 2.000000e-01 : f32
    %458 = vector.broadcast %cst_120 : f32 to vector<16x16xf32>
    %459 = arith.mulf %458, %457 : vector<16x16xf32>
    %460 = arith.maximumf %457, %459 : vector<16x16xf32>
    %461 = arith.addf %460, %0 : vector<16x16xf32>
    %cst_121 = arith.constant dense<0xFF800000> : vector<16xf32>
    %462 = vector.multi_reduction <maximumf>, %461, %cst_121 [1] : vector<16x16xf32> to vector<16xf32>
    %463 = vector.shape_cast %462 : vector<16xf32> to vector<16x1xf32>
    %464 = vector.broadcast %463 : vector<16x1xf32> to vector<16x16xf32>
    %465 = arith.subf %461, %464 : vector<16x16xf32>
    %466 = math.exp %465 : vector<16x16xf32>
    %cst_122 = arith.constant dense<0.000000e+00> : vector<16xf32>
    %467 = vector.multi_reduction <add>, %466, %cst_122 [1] : vector<16x16xf32> to vector<16xf32>
    %468 = vector.shape_cast %467 : vector<16xf32> to vector<16x1xf32>
    %469 = tpu.reciprocal %468 {approx = true} : vector<16x1xf32> -> vector<16x1xf32>
    %470 = vector.broadcast %469 : vector<16x1xf32> to vector<16x16xf32>
    %471 = arith.mulf %466, %470 : vector<16x16xf32>
    %472 = arith.addf %449, %471 : vector<16x16xf32>
    %473 = vector.extract_strided_slice %425 {offsets = [0, 4], sizes = [16, 4], strides = [1, 1]} : vector<16x32xf32> to vector<16x4xf32>
    %cst_123 = arith.constant dense<0.000000e+00> : vector<16x4xf32>
    %474 = tpu.matmul %471, %473, %cst_123 {dimension_numbers = #tpu.dot_dimension_numbers<[1], [0], [0], [1], [0, 0, 1, 1], [], []>} : vector<16x16xf32>, vector<16x4xf32>, vector<16x4xf32> -> vector<16x4xf32>
    %c0_124 = arith.constant 0 : index
    %c4_125 = arith.constant 4 : index
    %475 = vector.load %arg18[%c0_124, %c4_125] : memref<16x64xf32, #tpu.memory_space<vmem>>, vector<16x4xf32>
    tpu.vector_store %arg18[%c0_124, %c4_125], %474 {strides = array<i32>} : memref<16x64xf32, #tpu.memory_space<vmem>>, vector<16x4xf32>,
    %476 = vector.extract_strided_slice %426 {offsets = [0, 2], sizes = [16, 1], strides = [1, 1]} : vector<16x8xf32> to vector<16x1xf32>
    %477 = vector.extract_strided_slice %428 {offsets = [2, 0], sizes = [1, 16], strides = [1, 1]} : vector<8x16xf32> to vector<1x16xf32>
    %478 = vector.broadcast %476 : vector<16x1xf32> to vector<16x16xf32>
    %479 = vector.broadcast %477 : vector<1x16xf32> to vector<16x16xf32>
    %480 = arith.addf %478, %479 : vector<16x16xf32>
    %cst_126 = arith.constant 2.000000e-01 : f32
    %481 = vector.broadcast %cst_126 : f32 to vector<16x16xf32>
    %482 = arith.mulf %481, %480 : vector<16x16xf32>
    %483 = arith.maximumf %480, %482 : vector<16x16xf32>
    %484 = arith.addf %483, %0 : vector<16x16xf32>
    %cst_127 = arith.constant dense<0xFF800000> : vector<16xf32>
    %485 = vector.multi_reduction <maximumf>, %484, %cst_127 [1] : vector<16x16xf32> to vector<16xf32>
    %486 = vector.shape_cast %485 : vector<16xf32> to vector<16x1xf32>
    %487 = vector.broadcast %486 : vector<16x1xf32> to vector<16x16xf32>
    %488 = arith.subf %484, %487 : vector<16x16xf32>
    %489 = math.exp %488 : vector<16x16xf32>
    %cst_128 = arith.constant dense<0.000000e+00> : vector<16xf32>
    %490 = vector.multi_reduction <add>, %489, %cst_128 [1] : vector<16x16xf32> to vector<16xf32>
    %491 = vector.shape_cast %490 : vector<16xf32> to vector<16x1xf32>
    %492 = tpu.reciprocal %491 {approx = true} : vector<16x1xf32> -> vector<16x1xf32>
    %493 = vector.broadcast %492 : vector<16x1xf32> to vector<16x16xf32>
    %494 = arith.mulf %489, %493 : vector<16x16xf32>
    %495 = arith.addf %472, %494 : vector<16x16xf32>
    %496 = vector.extract_strided_slice %425 {offsets = [0, 8], sizes = [16, 4], strides = [1, 1]} : vector<16x32xf32> to vector<16x4xf32>
    %cst_129 = arith.constant dense<0.000000e+00> : vector<16x4xf32>
    %497 = tpu.matmul %494, %496, %cst_129 {dimension_numbers = #tpu.dot_dimension_numbers<[1], [0], [0], [1], [0, 0, 1, 1], [], []>} : vector<16x16xf32>, vector<16x4xf32>, vector<16x4xf32> -> vector<16x4xf32>
    %c0_130 = arith.constant 0 : index
    %c8_131 = arith.constant 8 : index
    %498 = vector.load %arg18[%c0_130, %c8_131] : memref<16x64xf32, #tpu.memory_space<vmem>>, vector<16x4xf32>
    tpu.vector_store %arg18[%c0_130, %c8_131], %497 {strides = array<i32>} : memref<16x64xf32, #tpu.memory_space<vmem>>, vector<16x4xf32>,
    %499 = vector.extract_strided_slice %426 {offsets = [0, 3], sizes = [16, 1], strides = [1, 1]} : vector<16x8xf32> to vector<16x1xf32>
    %500 = vector.extract_strided_slice %428 {offsets = [3, 0], sizes = [1, 16], strides = [1, 1]} : vector<8x16xf32> to vector<1x16xf32>
    %501 = vector.broadcast %499 : vector<16x1xf32> to vector<16x16xf32>
    %502 = vector.broadcast %500 : vector<1x16xf32> to vector<16x16xf32>
    %503 = arith.addf %501, %502 : vector<16x16xf32>
    %cst_132 = arith.constant 2.000000e-01 : f32
    %504 = vector.broadcast %cst_132 : f32 to vector<16x16xf32>
    %505 = arith.mulf %504, %503 : vector<16x16xf32>
    %506 = arith.maximumf %503, %505 : vector<16x16xf32>
    %507 = arith.addf %506, %0 : vector<16x16xf32>
    %cst_133 = arith.constant dense<0xFF800000> : vector<16xf32>
    %508 = vector.multi_reduction <maximumf>, %507, %cst_133 [1] : vector<16x16xf32> to vector<16xf32>
    %509 = vector.shape_cast %508 : vector<16xf32> to vector<16x1xf32>
    %510 = vector.broadcast %509 : vector<16x1xf32> to vector<16x16xf32>
    %511 = arith.subf %507, %510 : vector<16x16xf32>
    %512 = math.exp %511 : vector<16x16xf32>
    %cst_134 = arith.constant dense<0.000000e+00> : vector<16xf32>
    %513 = vector.multi_reduction <add>, %512, %cst_134 [1] : vector<16x16xf32> to vector<16xf32>
    %514 = vector.shape_cast %513 : vector<16xf32> to vector<16x1xf32>
    %515 = tpu.reciprocal %514 {approx = true} : vector<16x1xf32> -> vector<16x1xf32>
    %516 = vector.broadcast %515 : vector<16x1xf32> to vector<16x16xf32>
    %517 = arith.mulf %512, %516 : vector<16x16xf32>
    %518 = arith.addf %495, %517 : vector<16x16xf32>
    %519 = vector.extract_strided_slice %425 {offsets = [0, 12], sizes = [16, 4], strides = [1, 1]} : vector<16x32xf32> to vector<16x4xf32>
    %cst_135 = arith.constant dense<0.000000e+00> : vector<16x4xf32>
    %520 = tpu.matmul %517, %519, %cst_135 {dimension_numbers = #tpu.dot_dimension_numbers<[1], [0], [0], [1], [0, 0, 1, 1], [], []>} : vector<16x16xf32>, vector<16x4xf32>, vector<16x4xf32> -> vector<16x4xf32>
    %c0_136 = arith.constant 0 : index
    %c12_137 = arith.constant 12 : index
    %521 = vector.load %arg18[%c0_136, %c12_137] : memref<16x64xf32, #tpu.memory_space<vmem>>, vector<16x4xf32>
    tpu.vector_store %arg18[%c0_136, %c12_137], %520 {strides = array<i32>} : memref<16x64xf32, #tpu.memory_space<vmem>>, vector<16x4xf32>,
    %522 = vector.extract_strided_slice %426 {offsets = [0, 4], sizes = [16, 1], strides = [1, 1]} : vector<16x8xf32> to vector<16x1xf32>
    %523 = vector.extract_strided_slice %428 {offsets = [4, 0], sizes = [1, 16], strides = [1, 1]} : vector<8x16xf32> to vector<1x16xf32>
    %524 = vector.broadcast %522 : vector<16x1xf32> to vector<16x16xf32>
    %525 = vector.broadcast %523 : vector<1x16xf32> to vector<16x16xf32>
    %526 = arith.addf %524, %525 : vector<16x16xf32>
    %cst_138 = arith.constant 2.000000e-01 : f32
    %527 = vector.broadcast %cst_138 : f32 to vector<16x16xf32>
    %528 = arith.mulf %527, %526 : vector<16x16xf32>
    %529 = arith.maximumf %526, %528 : vector<16x16xf32>
    %530 = arith.addf %529, %0 : vector<16x16xf32>
    %cst_139 = arith.constant dense<0xFF800000> : vector<16xf32>
    %531 = vector.multi_reduction <maximumf>, %530, %cst_139 [1] : vector<16x16xf32> to vector<16xf32>
    %532 = vector.shape_cast %531 : vector<16xf32> to vector<16x1xf32>
    %533 = vector.broadcast %532 : vector<16x1xf32> to vector<16x16xf32>
    %534 = arith.subf %530, %533 : vector<16x16xf32>
    %535 = math.exp %534 : vector<16x16xf32>
    %cst_140 = arith.constant dense<0.000000e+00> : vector<16xf32>
    %536 = vector.multi_reduction <add>, %535, %cst_140 [1] : vector<16x16xf32> to vector<16xf32>
    %537 = vector.shape_cast %536 : vector<16xf32> to vector<16x1xf32>
    %538 = tpu.reciprocal %537 {approx = true} : vector<16x1xf32> -> vector<16x1xf32>
    %539 = vector.broadcast %538 : vector<16x1xf32> to vector<16x16xf32>
    %540 = arith.mulf %535, %539 : vector<16x16xf32>
    %541 = arith.addf %518, %540 : vector<16x16xf32>
    %542 = vector.extract_strided_slice %425 {offsets = [0, 16], sizes = [16, 4], strides = [1, 1]} : vector<16x32xf32> to vector<16x4xf32>
    %cst_141 = arith.constant dense<0.000000e+00> : vector<16x4xf32>
    %543 = tpu.matmul %540, %542, %cst_141 {dimension_numbers = #tpu.dot_dimension_numbers<[1], [0], [0], [1], [0, 0, 1, 1], [], []>} : vector<16x16xf32>, vector<16x4xf32>, vector<16x4xf32> -> vector<16x4xf32>
    %c0_142 = arith.constant 0 : index
    %c16_143 = arith.constant 16 : index
    %544 = vector.load %arg18[%c0_142, %c16_143] : memref<16x64xf32, #tpu.memory_space<vmem>>, vector<16x4xf32>
    tpu.vector_store %arg18[%c0_142, %c16_143], %543 {strides = array<i32>} : memref<16x64xf32, #tpu.memory_space<vmem>>, vector<16x4xf32>,
    %545 = vector.extract_strided_slice %426 {offsets = [0, 5], sizes = [16, 1], strides = [1, 1]} : vector<16x8xf32> to vector<16x1xf32>
    %546 = vector.extract_strided_slice %428 {offsets = [5, 0], sizes = [1, 16], strides = [1, 1]} : vector<8x16xf32> to vector<1x16xf32>
    %547 = vector.broadcast %545 : vector<16x1xf32> to vector<16x16xf32>
    %548 = vector.broadcast %546 : vector<1x16xf32> to vector<16x16xf32>
    %549 = arith.addf %547, %548 : vector<16x16xf32>
    %cst_144 = arith.constant 2.000000e-01 : f32
    %550 = vector.broadcast %cst_144 : f32 to vector<16x16xf32>
    %551 = arith.mulf %550, %549 : vector<16x16xf32>
    %552 = arith.maximumf %549, %551 : vector<16x16xf32>
    %553 = arith.addf %552, %0 : vector<16x16xf32>
    %cst_145 = arith.constant dense<0xFF800000> : vector<16xf32>
    %554 = vector.multi_reduction <maximumf>, %553, %cst_145 [1] : vector<16x16xf32> to vector<16xf32>
    %555 = vector.shape_cast %554 : vector<16xf32> to vector<16x1xf32>
    %556 = vector.broadcast %555 : vector<16x1xf32> to vector<16x16xf32>
    %557 = arith.subf %553, %556 : vector<16x16xf32>
    %558 = math.exp %557 : vector<16x16xf32>
    %cst_146 = arith.constant dense<0.000000e+00> : vector<16xf32>
    %559 = vector.multi_reduction <add>, %558, %cst_146 [1] : vector<16x16xf32> to vector<16xf32>
    %560 = vector.shape_cast %559 : vector<16xf32> to vector<16x1xf32>
    %561 = tpu.reciprocal %560 {approx = true} : vector<16x1xf32> -> vector<16x1xf32>
    %562 = vector.broadcast %561 : vector<16x1xf32> to vector<16x16xf32>
    %563 = arith.mulf %558, %562 : vector<16x16xf32>
    %564 = arith.addf %541, %563 : vector<16x16xf32>
    %565 = vector.extract_strided_slice %425 {offsets = [0, 20], sizes = [16, 4], strides = [1, 1]} : vector<16x32xf32> to vector<16x4xf32>
    %cst_147 = arith.constant dense<0.000000e+00> : vector<16x4xf32>
    %566 = tpu.matmul %563, %565, %cst_147 {dimension_numbers = #tpu.dot_dimension_numbers<[1], [0], [0], [1], [0, 0, 1, 1], [], []>} : vector<16x16xf32>, vector<16x4xf32>, vector<16x4xf32> -> vector<16x4xf32>
    %c0_148 = arith.constant 0 : index
    %c20_149 = arith.constant 20 : index
    %567 = vector.load %arg18[%c0_148, %c20_149] : memref<16x64xf32, #tpu.memory_space<vmem>>, vector<16x4xf32>
    tpu.vector_store %arg18[%c0_148, %c20_149], %566 {strides = array<i32>} : memref<16x64xf32, #tpu.memory_space<vmem>>, vector<16x4xf32>,
    %568 = vector.extract_strided_slice %426 {offsets = [0, 6], sizes = [16, 1], strides = [1, 1]} : vector<16x8xf32> to vector<16x1xf32>
    %569 = vector.extract_strided_slice %428 {offsets = [6, 0], sizes = [1, 16], strides = [1, 1]} : vector<8x16xf32> to vector<1x16xf32>
    %570 = vector.broadcast %568 : vector<16x1xf32> to vector<16x16xf32>
    %571 = vector.broadcast %569 : vector<1x16xf32> to vector<16x16xf32>
    %572 = arith.addf %570, %571 : vector<16x16xf32>
    %cst_150 = arith.constant 2.000000e-01 : f32
    %573 = vector.broadcast %cst_150 : f32 to vector<16x16xf32>
    %574 = arith.mulf %573, %572 : vector<16x16xf32>
    %575 = arith.maximumf %572, %574 : vector<16x16xf32>
    %576 = arith.addf %575, %0 : vector<16x16xf32>
    %cst_151 = arith.constant dense<0xFF800000> : vector<16xf32>
    %577 = vector.multi_reduction <maximumf>, %576, %cst_151 [1] : vector<16x16xf32> to vector<16xf32>
    %578 = vector.shape_cast %577 : vector<16xf32> to vector<16x1xf32>
    %579 = vector.broadcast %578 : vector<16x1xf32> to vector<16x16xf32>
    %580 = arith.subf %576, %579 : vector<16x16xf32>
    %581 = math.exp %580 : vector<16x16xf32>
    %cst_152 = arith.constant dense<0.000000e+00> : vector<16xf32>
    %582 = vector.multi_reduction <add>, %581, %cst_152 [1] : vector<16x16xf32> to vector<16xf32>
    %583 = vector.shape_cast %582 : vector<16xf32> to vector<16x1xf32>
    %584 = tpu.reciprocal %583 {approx = true} : vector<16x1xf32> -> vector<16x1xf32>
    %585 = vector.broadcast %584 : vector<16x1xf32> to vector<16x16xf32>
    %586 = arith.mulf %581, %585 : vector<16x16xf32>
    %587 = arith.addf %564, %586 : vector<16x16xf32>
    %588 = vector.extract_strided_slice %425 {offsets = [0, 24], sizes = [16, 4], strides = [1, 1]} : vector<16x32xf32> to vector<16x4xf32>
    %cst_153 = arith.constant dense<0.000000e+00> : vector<16x4xf32>
    %589 = tpu.matmul %586, %588, %cst_153 {dimension_numbers = #tpu.dot_dimension_numbers<[1], [0], [0], [1], [0, 0, 1, 1], [], []>} : vector<16x16xf32>, vector<16x4xf32>, vector<16x4xf32> -> vector<16x4xf32>
    %c0_154 = arith.constant 0 : index
    %c24_155 = arith.constant 24 : index
    %590 = vector.load %arg18[%c0_154, %c24_155] : memref<16x64xf32, #tpu.memory_space<vmem>>, vector<16x4xf32>
    tpu.vector_store %arg18[%c0_154, %c24_155], %589 {strides = array<i32>} : memref<16x64xf32, #tpu.memory_space<vmem>>, vector<16x4xf32>,
    %591 = vector.extract_strided_slice %426 {offsets = [0, 7], sizes = [16, 1], strides = [1, 1]} : vector<16x8xf32> to vector<16x1xf32>
    %592 = vector.extract_strided_slice %428 {offsets = [7, 0], sizes = [1, 16], strides = [1, 1]} : vector<8x16xf32> to vector<1x16xf32>
    %593 = vector.broadcast %591 : vector<16x1xf32> to vector<16x16xf32>
    %594 = vector.broadcast %592 : vector<1x16xf32> to vector<16x16xf32>
    %595 = arith.addf %593, %594 : vector<16x16xf32>
    %cst_156 = arith.constant 2.000000e-01 : f32
    %596 = vector.broadcast %cst_156 : f32 to vector<16x16xf32>
    %597 = arith.mulf %596, %595 : vector<16x16xf32>
    %598 = arith.maximumf %595, %597 : vector<16x16xf32>
    %599 = arith.addf %598, %0 : vector<16x16xf32>
    %cst_157 = arith.constant dense<0xFF800000> : vector<16xf32>
    %600 = vector.multi_reduction <maximumf>, %599, %cst_157 [1] : vector<16x16xf32> to vector<16xf32>
    %601 = vector.shape_cast %600 : vector<16xf32> to vector<16x1xf32>
    %602 = vector.broadcast %601 : vector<16x1xf32> to vector<16x16xf32>
    %603 = arith.subf %599, %602 : vector<16x16xf32>
    %604 = math.exp %603 : vector<16x16xf32>
    %cst_158 = arith.constant dense<0.000000e+00> : vector<16xf32>
    %605 = vector.multi_reduction <add>, %604, %cst_158 [1] : vector<16x16xf32> to vector<16xf32>
    %606 = vector.shape_cast %605 : vector<16xf32> to vector<16x1xf32>
    %607 = tpu.reciprocal %606 {approx = true} : vector<16x1xf32> -> vector<16x1xf32>
    %608 = vector.broadcast %607 : vector<16x1xf32> to vector<16x16xf32>
    %609 = arith.mulf %604, %608 : vector<16x16xf32>
    %610 = arith.addf %587, %609 : vector<16x16xf32>
    %611 = vector.extract_strided_slice %425 {offsets = [0, 28], sizes = [16, 4], strides = [1, 1]} : vector<16x32xf32> to vector<16x4xf32>
    %cst_159 = arith.constant dense<0.000000e+00> : vector<16x4xf32>
    %612 = tpu.matmul %609, %611, %cst_159 {dimension_numbers = #tpu.dot_dimension_numbers<[1], [0], [0], [1], [0, 0, 1, 1], [], []>} : vector<16x16xf32>, vector<16x4xf32>, vector<16x4xf32> -> vector<16x4xf32>
    %c0_160 = arith.constant 0 : index
    %c28_161 = arith.constant 28 : index
    %613 = vector.load %arg18[%c0_160, %c28_161] : memref<16x64xf32, #tpu.memory_space<vmem>>, vector<16x4xf32>
    tpu.vector_store %arg18[%c0_160, %c28_161], %612 {strides = array<i32>} : memref<16x64xf32, #tpu.memory_space<vmem>>, vector<16x4xf32>,
    %c0_162 = arith.constant 0 : index
    %c0_163 = arith.constant 0 : index
    %614 = vector.load %arg18[%c0_162, %c0_163] : memref<16x64xf32, #tpu.memory_space<vmem>>, vector<16x32xf32>
    %c0_164 = arith.constant 0 : index
    %c0_165 = arith.constant 0 : index
    %615 = vector.load %arg9[%c0_164, %c0_165] : memref<1x32xf32, #tpu.memory_space<vmem>>, vector<1x32xf32>
    %616 = vector.broadcast %615 : vector<1x32xf32> to vector<16x32xf32>
    %617 = arith.addf %614, %616 : vector<16x32xf32>
    %cst_166 = arith.constant 0.000000e+00 : f32
    %618 = vector.broadcast %cst_166 : f32 to vector<16x32xf32>
    %619 = arith.cmpf ogt, %617, %618 : vector<16x32xf32>
    %cst_167 = arith.constant 0.000000e+00 : f32
    %620 = vector.broadcast %cst_167 : f32 to vector<16x32xf32>
    %621 = arith.minimumf %617, %620 : vector<16x32xf32>
    %622 = math.exp %621 : vector<16x32xf32>
    %cst_168 = arith.constant 1.000000e+00 : f32
    %623 = vector.broadcast %cst_168 : f32 to vector<16x32xf32>
    %624 = arith.subf %622, %623 : vector<16x32xf32>
    %625 = arith.select %619, %617, %624 : vector<16x32xi1>, vector<16x32xf32>
    %cst_169 = arith.constant dense<0.000000e+00> : vector<16xf32>
    %626 = vector.multi_reduction <add>, %625, %cst_169 [1] : vector<16x32xf32> to vector<16xf32>
    %627 = vector.shape_cast %626 : vector<16xf32> to vector<16x1xf32>
    %cst_170 = arith.constant 3.200000e+01 : f32
    %628 = vector.broadcast %cst_170 : f32 to vector<16x1xf32>
    %629 = arith.divf %627, %628 : vector<16x1xf32>
    %630 = vector.broadcast %629 : vector<16x1xf32> to vector<16x32xf32>
    %631 = arith.subf %625, %630 : vector<16x32xf32>
    %632 = arith.mulf %631, %631 : vector<16x32xf32>
    %cst_171 = arith.constant dense<0.000000e+00> : vector<16xf32>
    %633 = vector.multi_reduction <add>, %632, %cst_171 [1] : vector<16x32xf32> to vector<16xf32>
    %634 = vector.shape_cast %633 : vector<16xf32> to vector<16x1xf32>
    %cst_172 = arith.constant 3.200000e+01 : f32
    %635 = vector.broadcast %cst_172 : f32 to vector<16x1xf32>
    %636 = arith.divf %634, %635 : vector<16x1xf32>
    %637 = vector.broadcast %629 : vector<16x1xf32> to vector<16x32xf32>
    %638 = arith.subf %625, %637 : vector<16x32xf32>
    %cst_173 = arith.constant 9.99999974E-6 : f32
    %639 = vector.broadcast %cst_173 : f32 to vector<16x1xf32>
    %640 = arith.addf %636, %639 : vector<16x1xf32>
    %641 = math.rsqrt %640 : vector<16x1xf32>
    %642 = vector.broadcast %641 : vector<16x1xf32> to vector<16x32xf32>
    %643 = arith.mulf %638, %642 : vector<16x32xf32>
    %c0_174 = arith.constant 0 : index
    %c0_175 = arith.constant 0 : index
    %644 = vector.load %arg10[%c0_174, %c0_175] : memref<1x32xf32, #tpu.memory_space<vmem>>, vector<1x32xf32>
    %645 = vector.broadcast %644 : vector<1x32xf32> to vector<16x32xf32>
    %646 = arith.mulf %643, %645 : vector<16x32xf32>
    %c0_176 = arith.constant 0 : index
    %c0_177 = arith.constant 0 : index
    %647 = vector.load %arg11[%c0_176, %c0_177] : memref<1x32xf32, #tpu.memory_space<vmem>>, vector<1x32xf32>
    %648 = vector.broadcast %647 : vector<1x32xf32> to vector<16x32xf32>
    %649 = arith.addf %646, %648 : vector<16x32xf32>
    %650 = vector.extract_strided_slice %424 {offsets = [0, 48], sizes = [16, 32], strides = [1, 1]} : vector<16x80xf32> to vector<16x32xf32>
    %651 = arith.addf %649, %650 : vector<16x32xf32>
    %cst_178 = arith.constant 1.250000e-01 : f32
    %652 = vector.broadcast %cst_178 : f32 to vector<16x16xf32>
    %653 = arith.mulf %610, %652 : vector<16x16xf32>
    %cst_179 = arith.constant dense<0.000000e+00> : vector<16x32xf32>
    %654 = tpu.matmul %653, %1, %cst_179 {dimension_numbers = #tpu.dot_dimension_numbers<[1], [0], [0], [1], [0, 0, 1, 1], [], []>} : vector<16x16xf32>, vector<16x32xf32>, vector<16x32xf32> -> vector<16x32xf32>
    %655 = arith.mulf %654, %2 : vector<16x32xf32>
    %cst_180 = arith.constant dense<0.000000e+00> : vector<32xf32>
    %656 = vector.multi_reduction <add>, %655, %cst_180 [0] : vector<16x32xf32> to vector<32xf32>
    %657 = vector.shape_cast %656 : vector<32xf32> to vector<1x32xf32>
    %c0_181 = arith.constant 0 : index
    %c0_182 = arith.constant 0 : index
    %658 = vector.load %arg12[%c0_181, %c0_182] : memref<32x24xf32, #tpu.memory_space<vmem>>, vector<32x24xf32>
    %cst_183 = arith.constant dense<0.000000e+00> : vector<16x24xf32>
    %659 = tpu.matmul %651, %658, %cst_183 {dimension_numbers = #tpu.dot_dimension_numbers<[1], [0], [0], [1], [0, 0, 1, 1], [], []>} : vector<16x32xf32>, vector<32x24xf32>, vector<16x24xf32> -> vector<16x24xf32>
    %660 = vector.extract_strided_slice %659 {offsets = [0, 0], sizes = [16, 16], strides = [1, 1]} : vector<16x24xf32> to vector<16x16xf32>
    %661 = vector.extract_strided_slice %659 {offsets = [0, 16], sizes = [16, 4], strides = [1, 1]} : vector<16x24xf32> to vector<16x4xf32>
    %662 = vector.extract_strided_slice %659 {offsets = [0, 20], sizes = [16, 4], strides = [1, 1]} : vector<16x24xf32> to vector<16x4xf32>
    %663 = tpu.transpose %662, [1, 0] : vector<16x4xf32> -> vector<4x16xf32>
    %cst_184 = arith.constant 0.000000e+00 : f32
    %664 = vector.broadcast %cst_184 : f32 to vector<16x16xf32>
    %665 = vector.extract_strided_slice %661 {offsets = [0, 0], sizes = [16, 1], strides = [1, 1]} : vector<16x4xf32> to vector<16x1xf32>
    %666 = vector.extract_strided_slice %663 {offsets = [0, 0], sizes = [1, 16], strides = [1, 1]} : vector<4x16xf32> to vector<1x16xf32>
    %667 = vector.broadcast %665 : vector<16x1xf32> to vector<16x16xf32>
    %668 = vector.broadcast %666 : vector<1x16xf32> to vector<16x16xf32>
    %669 = arith.addf %667, %668 : vector<16x16xf32>
    %cst_185 = arith.constant 2.000000e-01 : f32
    %670 = vector.broadcast %cst_185 : f32 to vector<16x16xf32>
    %671 = arith.mulf %670, %669 : vector<16x16xf32>
    %672 = arith.maximumf %669, %671 : vector<16x16xf32>
    %673 = arith.addf %672, %0 : vector<16x16xf32>
    %cst_186 = arith.constant dense<0xFF800000> : vector<16xf32>
    %674 = vector.multi_reduction <maximumf>, %673, %cst_186 [1] : vector<16x16xf32> to vector<16xf32>
    %675 = vector.shape_cast %674 : vector<16xf32> to vector<16x1xf32>
    %676 = vector.broadcast %675 : vector<16x1xf32> to vector<16x16xf32>
    %677 = arith.subf %673, %676 : vector<16x16xf32>
    %678 = math.exp %677 : vector<16x16xf32>
    %cst_187 = arith.constant dense<0.000000e+00> : vector<16xf32>
    %679 = vector.multi_reduction <add>, %678, %cst_187 [1] : vector<16x16xf32> to vector<16xf32>
    %680 = vector.shape_cast %679 : vector<16xf32> to vector<16x1xf32>
    %681 = tpu.reciprocal %680 {approx = true} : vector<16x1xf32> -> vector<16x1xf32>
    %682 = vector.broadcast %681 : vector<16x1xf32> to vector<16x16xf32>
    %683 = arith.mulf %678, %682 : vector<16x16xf32>
    %684 = arith.addf %664, %683 : vector<16x16xf32>
    %685 = vector.extract_strided_slice %660 {offsets = [0, 0], sizes = [16, 4], strides = [1, 1]} : vector<16x16xf32> to vector<16x4xf32>
    %cst_188 = arith.constant dense<0.000000e+00> : vector<16x4xf32>
    %686 = tpu.matmul %683, %685, %cst_188 {dimension_numbers = #tpu.dot_dimension_numbers<[1], [0], [0], [1], [0, 0, 1, 1], [], []>} : vector<16x16xf32>, vector<16x4xf32>, vector<16x4xf32> -> vector<16x4xf32>
    %c0_189 = arith.constant 0 : index
    %c0_190 = arith.constant 0 : index
    %687 = vector.load %arg18[%c0_189, %c0_190] : memref<16x64xf32, #tpu.memory_space<vmem>>, vector<16x4xf32>
    tpu.vector_store %arg18[%c0_189, %c0_190], %686 {strides = array<i32>} : memref<16x64xf32, #tpu.memory_space<vmem>>, vector<16x4xf32>,
    %688 = vector.extract_strided_slice %661 {offsets = [0, 1], sizes = [16, 1], strides = [1, 1]} : vector<16x4xf32> to vector<16x1xf32>
    %689 = vector.extract_strided_slice %663 {offsets = [1, 0], sizes = [1, 16], strides = [1, 1]} : vector<4x16xf32> to vector<1x16xf32>
    %690 = vector.broadcast %688 : vector<16x1xf32> to vector<16x16xf32>
    %691 = vector.broadcast %689 : vector<1x16xf32> to vector<16x16xf32>
    %692 = arith.addf %690, %691 : vector<16x16xf32>
    %cst_191 = arith.constant 2.000000e-01 : f32
    %693 = vector.broadcast %cst_191 : f32 to vector<16x16xf32>
    %694 = arith.mulf %693, %692 : vector<16x16xf32>
    %695 = arith.maximumf %692, %694 : vector<16x16xf32>
    %696 = arith.addf %695, %0 : vector<16x16xf32>
    %cst_192 = arith.constant dense<0xFF800000> : vector<16xf32>
    %697 = vector.multi_reduction <maximumf>, %696, %cst_192 [1] : vector<16x16xf32> to vector<16xf32>
    %698 = vector.shape_cast %697 : vector<16xf32> to vector<16x1xf32>
    %699 = vector.broadcast %698 : vector<16x1xf32> to vector<16x16xf32>
    %700 = arith.subf %696, %699 : vector<16x16xf32>
    %701 = math.exp %700 : vector<16x16xf32>
    %cst_193 = arith.constant dense<0.000000e+00> : vector<16xf32>
    %702 = vector.multi_reduction <add>, %701, %cst_193 [1] : vector<16x16xf32> to vector<16xf32>
    %703 = vector.shape_cast %702 : vector<16xf32> to vector<16x1xf32>
    %704 = tpu.reciprocal %703 {approx = true} : vector<16x1xf32> -> vector<16x1xf32>
    %705 = vector.broadcast %704 : vector<16x1xf32> to vector<16x16xf32>
    %706 = arith.mulf %701, %705 : vector<16x16xf32>
    %707 = arith.addf %684, %706 : vector<16x16xf32>
    %708 = vector.extract_strided_slice %660 {offsets = [0, 4], sizes = [16, 4], strides = [1, 1]} : vector<16x16xf32> to vector<16x4xf32>
    %cst_194 = arith.constant dense<0.000000e+00> : vector<16x4xf32>
    %709 = tpu.matmul %706, %708, %cst_194 {dimension_numbers = #tpu.dot_dimension_numbers<[1], [0], [0], [1], [0, 0, 1, 1], [], []>} : vector<16x16xf32>, vector<16x4xf32>, vector<16x4xf32> -> vector<16x4xf32>
    %c0_195 = arith.constant 0 : index
    %c4_196 = arith.constant 4 : index
    %710 = vector.load %arg18[%c0_195, %c4_196] : memref<16x64xf32, #tpu.memory_space<vmem>>, vector<16x4xf32>
    tpu.vector_store %arg18[%c0_195, %c4_196], %709 {strides = array<i32>} : memref<16x64xf32, #tpu.memory_space<vmem>>, vector<16x4xf32>,
    %711 = vector.extract_strided_slice %661 {offsets = [0, 2], sizes = [16, 1], strides = [1, 1]} : vector<16x4xf32> to vector<16x1xf32>
    %712 = vector.extract_strided_slice %663 {offsets = [2, 0], sizes = [1, 16], strides = [1, 1]} : vector<4x16xf32> to vector<1x16xf32>
    %713 = vector.broadcast %711 : vector<16x1xf32> to vector<16x16xf32>
    %714 = vector.broadcast %712 : vector<1x16xf32> to vector<16x16xf32>
    %715 = arith.addf %713, %714 : vector<16x16xf32>
    %cst_197 = arith.constant 2.000000e-01 : f32
    %716 = vector.broadcast %cst_197 : f32 to vector<16x16xf32>
    %717 = arith.mulf %716, %715 : vector<16x16xf32>
    %718 = arith.maximumf %715, %717 : vector<16x16xf32>
    %719 = arith.addf %718, %0 : vector<16x16xf32>
    %cst_198 = arith.constant dense<0xFF800000> : vector<16xf32>
    %720 = vector.multi_reduction <maximumf>, %719, %cst_198 [1] : vector<16x16xf32> to vector<16xf32>
    %721 = vector.shape_cast %720 : vector<16xf32> to vector<16x1xf32>
    %722 = vector.broadcast %721 : vector<16x1xf32> to vector<16x16xf32>
    %723 = arith.subf %719, %722 : vector<16x16xf32>
    %724 = math.exp %723 : vector<16x16xf32>
    %cst_199 = arith.constant dense<0.000000e+00> : vector<16xf32>
    %725 = vector.multi_reduction <add>, %724, %cst_199 [1] : vector<16x16xf32> to vector<16xf32>
    %726 = vector.shape_cast %725 : vector<16xf32> to vector<16x1xf32>
    %727 = tpu.reciprocal %726 {approx = true} : vector<16x1xf32> -> vector<16x1xf32>
    %728 = vector.broadcast %727 : vector<16x1xf32> to vector<16x16xf32>
    %729 = arith.mulf %724, %728 : vector<16x16xf32>
    %730 = arith.addf %707, %729 : vector<16x16xf32>
    %731 = vector.extract_strided_slice %660 {offsets = [0, 8], sizes = [16, 4], strides = [1, 1]} : vector<16x16xf32> to vector<16x4xf32>
    %cst_200 = arith.constant dense<0.000000e+00> : vector<16x4xf32>
    %732 = tpu.matmul %729, %731, %cst_200 {dimension_numbers = #tpu.dot_dimension_numbers<[1], [0], [0], [1], [0, 0, 1, 1], [], []>} : vector<16x16xf32>, vector<16x4xf32>, vector<16x4xf32> -> vector<16x4xf32>
    %c0_201 = arith.constant 0 : index
    %c8_202 = arith.constant 8 : index
    %733 = vector.load %arg18[%c0_201, %c8_202] : memref<16x64xf32, #tpu.memory_space<vmem>>, vector<16x4xf32>
    tpu.vector_store %arg18[%c0_201, %c8_202], %732 {strides = array<i32>} : memref<16x64xf32, #tpu.memory_space<vmem>>, vector<16x4xf32>,
    %734 = vector.extract_strided_slice %661 {offsets = [0, 3], sizes = [16, 1], strides = [1, 1]} : vector<16x4xf32> to vector<16x1xf32>
    %735 = vector.extract_strided_slice %663 {offsets = [3, 0], sizes = [1, 16], strides = [1, 1]} : vector<4x16xf32> to vector<1x16xf32>
    %736 = vector.broadcast %734 : vector<16x1xf32> to vector<16x16xf32>
    %737 = vector.broadcast %735 : vector<1x16xf32> to vector<16x16xf32>
    %738 = arith.addf %736, %737 : vector<16x16xf32>
    %cst_203 = arith.constant 2.000000e-01 : f32
    %739 = vector.broadcast %cst_203 : f32 to vector<16x16xf32>
    %740 = arith.mulf %739, %738 : vector<16x16xf32>
    %741 = arith.maximumf %738, %740 : vector<16x16xf32>
    %742 = arith.addf %741, %0 : vector<16x16xf32>
    %cst_204 = arith.constant dense<0xFF800000> : vector<16xf32>
    %743 = vector.multi_reduction <maximumf>, %742, %cst_204 [1] : vector<16x16xf32> to vector<16xf32>
    %744 = vector.shape_cast %743 : vector<16xf32> to vector<16x1xf32>
    %745 = vector.broadcast %744 : vector<16x1xf32> to vector<16x16xf32>
    %746 = arith.subf %742, %745 : vector<16x16xf32>
    %747 = math.exp %746 : vector<16x16xf32>
    %cst_205 = arith.constant dense<0.000000e+00> : vector<16xf32>
    %748 = vector.multi_reduction <add>, %747, %cst_205 [1] : vector<16x16xf32> to vector<16xf32>
    %749 = vector.shape_cast %748 : vector<16xf32> to vector<16x1xf32>
    %750 = tpu.reciprocal %749 {approx = true} : vector<16x1xf32> -> vector<16x1xf32>
    %751 = vector.broadcast %750 : vector<16x1xf32> to vector<16x16xf32>
    %752 = arith.mulf %747, %751 : vector<16x16xf32>
    %753 = arith.addf %730, %752 : vector<16x16xf32>
    %754 = vector.extract_strided_slice %660 {offsets = [0, 12], sizes = [16, 4], strides = [1, 1]} : vector<16x16xf32> to vector<16x4xf32>
    %cst_206 = arith.constant dense<0.000000e+00> : vector<16x4xf32>
    %755 = tpu.matmul %752, %754, %cst_206 {dimension_numbers = #tpu.dot_dimension_numbers<[1], [0], [0], [1], [0, 0, 1, 1], [], []>} : vector<16x16xf32>, vector<16x4xf32>, vector<16x4xf32> -> vector<16x4xf32>
    %c0_207 = arith.constant 0 : index
    %c12_208 = arith.constant 12 : index
    %756 = vector.load %arg18[%c0_207, %c12_208] : memref<16x64xf32, #tpu.memory_space<vmem>>, vector<16x4xf32>
    tpu.vector_store %arg18[%c0_207, %c12_208], %755 {strides = array<i32>} : memref<16x64xf32, #tpu.memory_space<vmem>>, vector<16x4xf32>,
    %c0_209 = arith.constant 0 : index
    %c0_210 = arith.constant 0 : index
    %757 = vector.load %arg18[%c0_209, %c0_210] : memref<16x64xf32, #tpu.memory_space<vmem>>, vector<16x16xf32>
    %c0_211 = arith.constant 0 : index
    %c0_212 = arith.constant 0 : index
    %758 = vector.load %arg13[%c0_211, %c0_212] : memref<1x16xf32, #tpu.memory_space<vmem>>, vector<1x16xf32>
    %759 = vector.broadcast %758 : vector<1x16xf32> to vector<16x16xf32>
    %760 = arith.addf %757, %759 : vector<16x16xf32>
    %cst_213 = arith.constant 0.000000e+00 : f32
    %761 = vector.broadcast %cst_213 : f32 to vector<16x16xf32>
    %762 = arith.cmpf ogt, %760, %761 : vector<16x16xf32>
    %cst_214 = arith.constant 0.000000e+00 : f32
    %763 = vector.broadcast %cst_214 : f32 to vector<16x16xf32>
    %764 = arith.minimumf %760, %763 : vector<16x16xf32>
    %765 = math.exp %764 : vector<16x16xf32>
    %cst_215 = arith.constant 1.000000e+00 : f32
    %766 = vector.broadcast %cst_215 : f32 to vector<16x16xf32>
    %767 = arith.subf %765, %766 : vector<16x16xf32>
    %768 = arith.select %762, %760, %767 : vector<16x16xi1>, vector<16x16xf32>
    %cst_216 = arith.constant dense<0.000000e+00> : vector<16xf32>
    %769 = vector.multi_reduction <add>, %768, %cst_216 [1] : vector<16x16xf32> to vector<16xf32>
    %770 = vector.shape_cast %769 : vector<16xf32> to vector<16x1xf32>
    %cst_217 = arith.constant 1.600000e+01 : f32
    %771 = vector.broadcast %cst_217 : f32 to vector<16x1xf32>
    %772 = arith.divf %770, %771 : vector<16x1xf32>
    %773 = vector.broadcast %772 : vector<16x1xf32> to vector<16x16xf32>
    %774 = arith.subf %768, %773 : vector<16x16xf32>
    %775 = arith.mulf %774, %774 : vector<16x16xf32>
    %cst_218 = arith.constant dense<0.000000e+00> : vector<16xf32>
    %776 = vector.multi_reduction <add>, %775, %cst_218 [1] : vector<16x16xf32> to vector<16xf32>
    %777 = vector.shape_cast %776 : vector<16xf32> to vector<16x1xf32>
    %cst_219 = arith.constant 1.600000e+01 : f32
    %778 = vector.broadcast %cst_219 : f32 to vector<16x1xf32>
    %779 = arith.divf %777, %778 : vector<16x1xf32>
    %780 = vector.broadcast %772 : vector<16x1xf32> to vector<16x16xf32>
    %781 = arith.subf %768, %780 : vector<16x16xf32>
    %cst_220 = arith.constant 9.99999974E-6 : f32
    %782 = vector.broadcast %cst_220 : f32 to vector<16x1xf32>
    %783 = arith.addf %779, %782 : vector<16x1xf32>
    %784 = math.rsqrt %783 : vector<16x1xf32>
    %785 = vector.broadcast %784 : vector<16x1xf32> to vector<16x16xf32>
    %786 = arith.mulf %781, %785 : vector<16x16xf32>
    %c0_221 = arith.constant 0 : index
    %c0_222 = arith.constant 0 : index
    %787 = vector.load %arg14[%c0_221, %c0_222] : memref<1x16xf32, #tpu.memory_space<vmem>>, vector<1x16xf32>
    %788 = vector.broadcast %787 : vector<1x16xf32> to vector<16x16xf32>
    %789 = arith.mulf %786, %788 : vector<16x16xf32>
    %c0_223 = arith.constant 0 : index
    %c0_224 = arith.constant 0 : index
    %790 = vector.load %arg15[%c0_223, %c0_224] : memref<1x16xf32, #tpu.memory_space<vmem>>, vector<1x16xf32>
    %791 = vector.broadcast %790 : vector<1x16xf32> to vector<16x16xf32>
    %792 = arith.addf %789, %791 : vector<16x16xf32>
    %cst_225 = arith.constant 2.500000e-01 : f32
    %793 = vector.broadcast %cst_225 : f32 to vector<16x16xf32>
    %794 = arith.mulf %753, %793 : vector<16x16xf32>
    %cst_226 = arith.constant dense<0.000000e+00> : vector<16x32xf32>
    %795 = tpu.matmul %794, %1, %cst_226 {dimension_numbers = #tpu.dot_dimension_numbers<[1], [0], [0], [1], [0, 0, 1, 1], [], []>} : vector<16x16xf32>, vector<16x32xf32>, vector<16x32xf32> -> vector<16x32xf32>
    %796 = arith.mulf %795, %2 : vector<16x32xf32>
    %cst_227 = arith.constant dense<0.000000e+00> : vector<32xf32>
    %797 = vector.multi_reduction <add>, %796, %cst_227 [0] : vector<16x32xf32> to vector<32xf32>
    %798 = vector.shape_cast %797 : vector<32xf32> to vector<1x32xf32>
    %c0_228 = arith.constant 0 : index
    %c0_229 = arith.constant 0 : index
    %799 = vector.load %arg16[%c0_228, %c0_229] : memref<16x16xf32, #tpu.memory_space<vmem>>, vector<16x16xf32>
    tpu.vector_store %arg16[%c0_228, %c0_229], %792 {strides = array<i32>} : memref<16x16xf32, #tpu.memory_space<vmem>>, vector<16x16xf32>,
    %800 = tpu.concatenate %422, %657, %798 in 0 : vector<1x32xf32>, vector<1x32xf32>, vector<1x32xf32> -> vector<3x32xf32>
    %cst_230 = arith.constant 2.000000e+00 : f32
    %801 = vector.broadcast %cst_230 : f32 to vector<3x32xf32>
    %802 = arith.mulf %800, %801 : vector<3x32xf32>
    %cst_231 = arith.constant dense<0xFF800000> : vector<3xf32>
    %803 = vector.multi_reduction <maximumf>, %802, %cst_231 [1] : vector<3x32xf32> to vector<3xf32>
    %804 = vector.shape_cast %803 : vector<3xf32> to vector<3x1xf32>
    %805 = vector.broadcast %804 : vector<3x1xf32> to vector<3x32xf32>
    %806 = arith.subf %802, %805 : vector<3x32xf32>
    %807 = math.exp %806 : vector<3x32xf32>
    %cst_232 = arith.constant dense<0.000000e+00> : vector<3xf32>
    %808 = vector.multi_reduction <add>, %807, %cst_232 [1] : vector<3x32xf32> to vector<3xf32>
    %809 = vector.shape_cast %808 : vector<3xf32> to vector<3x1xf32>
    %810 = tpu.reciprocal %809 {approx = true} : vector<3x1xf32> -> vector<3x1xf32>
    %811 = vector.broadcast %810 : vector<3x1xf32> to vector<3x32xf32>
    %812 = arith.mulf %807, %811 : vector<3x32xf32>
    %c0_233 = arith.constant 0 : index
    %c0_234 = arith.constant 0 : index
    %813 = vector.load %arg17[%c0_233, %c0_234] : memref<3x32xf32, #tpu.memory_space<vmem>>, vector<3x32xf32>
    tpu.vector_store %arg17[%c0_233, %c0_234], %812 {strides = array<i32>} : memref<3x32xf32, #tpu.memory_space<vmem>>, vector<3x32xf32>,
    return
  }
}

</mosaic_0001>

<llo_original>
// kernel: gatnet_forward.1
$region0: #{gatnet_forward.1}
  #allocation0 [shape = 'u32[]', space=smem, size = 0x4, offset = 0x4, fixed_abs, tag = 'smem constant byte address 0x4 - core index']
  #allocation1 [shape = 'u32[144,128]{1,0:T(1,128)}', space=vmem, size = 0x12000, scoped, tag = 'internal scratch']
  #allocation2 [shape = 'f32[16,64]{1,0:T(8,128)}', space=vmem, size = 0x2000, scoped, tag = 'scratch operand']
  %s0 = inlined_call_operand.vmem [shape: f32[16,84], index: 0, kind: input, shape index: {}]
  %s1 = inlined_call_operand.vmem [shape: f32[16,16], index: 1, kind: input, shape index: {}]
  %s2 = inlined_call_operand.vmem [shape: f32[16,32], index: 2, kind: input, shape index: {}]
  %s3 = inlined_call_operand.vmem [shape: f32[16,32], index: 3, kind: input, shape index: {}]
  %s4 = inlined_call_operand.vmem [shape: f32[84,160], index: 4, kind: input, shape index: {}]
  %s5 = inlined_call_operand.vmem [shape: f32[1,64], index: 5, kind: input, shape index: {}]
  %s6 = inlined_call_operand.vmem [shape: f32[1,64], index: 6, kind: input, shape index: {}]
  %s7 = inlined_call_operand.vmem [shape: f32[1,64], index: 7, kind: input, shape index: {}]
  %s8 = inlined_call_operand.vmem [shape: f32[64,80], index: 8, kind: input, shape index: {}]
  %s9 = inlined_call_operand.vmem [shape: f32[1,32], index: 9, kind: input, shape index: {}]
  %s10 = inlined_call_operand.vmem [shape: f32[1,32], index: 10, kind: input, shape index: {}]
  %s11 = inlined_call_operand.vmem [shape: f32[1,32], index: 11, kind: input, shape index: {}]
  %s12 = inlined_call_operand.vmem [shape: f32[32,24], index: 12, kind: input, shape index: {}]
  %s13 = inlined_call_operand.vmem [shape: f32[1,16], index: 13, kind: input, shape index: {}]
  %s14 = inlined_call_operand.vmem [shape: f32[1,16], index: 14, kind: input, shape index: {}]
  %s15 = inlined_call_operand.vmem [shape: f32[1,16], index: 15, kind: input, shape index: {}]
  %s16 = inlined_call_operand.hbm [shape: f32[16,16], index: 16, kind: output, shape index: {0}]
  %s17 = inlined_call_operand.vmem [shape: f32[3,32], index: 17, kind: output, shape index: {1}]
  %18 = xla_tuple %s16, %s17
  %s19 = sld [smem:[#allocation0]]
  $region82: #{gatnet_forward.1} parent=0
    _
  %s21 = ssub.s32 1, %s19
  %s22 = scalar_select 0, %s21, %s19
  $region1: #{gatnet_forward.1} parent=0
    #allocation3 [shape = 'u8[8192]{0}', space=vmem, size = 0x2000, scoped, tag = 'output window, operand 0, single buffered']
    #allocation4 [shape = 's32[1]{0}', space=sflag, size = 0x4, scoped, tag = 'scoped memory for gatnet_forward.1']
    %23 = vsyncpa [#allocation4], 0
    // Predicated region
    $region2: #{gatnet_forward.1} parent=1 // pred_check
      _
    $region3: #{gatnet_forward.1} parent=1 // pred_check_branch
      %25 = sbr.rel (0) target = $region5
    $region4: #{gatnet_forward.1} parent=1 // pred_region
      _
    $region5: #{gatnet_forward.1} parent=1 // pred_fallthru
      _
    // Predicated region
    $region6: #{gatnet_forward.1} parent=1 // pred_check
      _
    $region7: #{gatnet_forward.1} parent=1 // pred_check_branch
      %27 = sbr.rel (0) target = $region9
    $region8: #{gatnet_forward.1} parent=1 // pred_region
      _
    $region9: #{gatnet_forward.1} parent=1 // pred_fallthru
      _
    // Predicated region
    $region10: #{gatnet_forward.1} parent=1 // pred_check
      _
    $region11: #{gatnet_forward.1} parent=1 // pred_check_branch
      %29 = sbr.rel (0) target = $region13
    $region12: #{gatnet_forward.1} parent=1 // pred_region
      _
    $region13: #{gatnet_forward.1} parent=1 // pred_fallthru
      _
    // Predicated region
    $region14: #{gatnet_forward.1} parent=1 // pred_check
      _
    $region15: #{gatnet_forward.1} parent=1 // pred_check_branch
      %31 = sbr.rel (0) target = $region17
    $region16: #{gatnet_forward.1} parent=1 // pred_region
      _
    $region17: #{gatnet_forward.1} parent=1 // pred_fallthru
      _
    // Predicated region
    $region18: #{gatnet_forward.1} parent=1 // pred_check
      _
    $region19: #{gatnet_forward.1} parent=1 // pred_check_branch
      %33 = sbr.rel (0) target = $region21
    $region20: #{gatnet_forward.1} parent=1 // pred_region
      _
    $region21: #{gatnet_forward.1} parent=1 // pred_fallthru
      _
    // Predicated region
    $region22: #{gatnet_forward.1} parent=1 // pred_check
      _
    $region23: #{gatnet_forward.1} parent=1 // pred_check_branch
      %35 = sbr.rel (0) target = $region25
    $region24: #{gatnet_forward.1} parent=1 // pred_region
      _
    $region25: #{gatnet_forward.1} parent=1 // pred_fallthru
      _
    // Predicated region
    $region26: #{gatnet_forward.1} parent=1 // pred_check
      _
    $region27: #{gatnet_forward.1} parent=1 // pred_check_branch
      %37 = sbr.rel (0) target = $region29
    $region28: #{gatnet_forward.1} parent=1 // pred_region
      _
    $region29: #{gatnet_forward.1} parent=1 // pred_fallthru
      _
    // Predicated region
    $region30: #{gatnet_forward.1} parent=1 // pred_check
      _
    $region31: #{gatnet_forward.1} parent=1 // pred_check_branch
      %39 = sbr.rel (0) target = $region33
    $region32: #{gatnet_forward.1} parent=1 // pred_region
      _
    $region33: #{gatnet_forward.1} parent=1 // pred_fallthru
      _
    // Predicated region
    $region34: #{gatnet_forward.1} parent=1 // pred_check
      _
    $region35: #{gatnet_forward.1} parent=1 // pred_check_branch
      %41 = sbr.rel (0) target = $region37
    $region36: #{gatnet_forward.1} parent=1 // pred_region
      _
    $region37: #{gatnet_forward.1} parent=1 // pred_fallthru
      _
    // Predicated region
    $region38: #{gatnet_forward.1} parent=1 // pred_check
      _
    $region39: #{gatnet_forward.1} parent=1 // pred_check_branch
      %43 = sbr.rel (0) target = $region41
    $region40: #{gatnet_forward.1} parent=1 // pred_region
      _
    $region41: #{gatnet_forward.1} parent=1 // pred_fallthru
      _
    // Predicated region
    $region42: #{gatnet_forward.1} parent=1 // pred_check
      _
    $region43: #{gatnet_forward.1} parent=1 // pred_check_branch
      %45 = sbr.rel (0) target = $region45
    $region44: #{gatnet_forward.1} parent=1 // pred_region
      _
    $region45: #{gatnet_forward.1} parent=1 // pred_fallthru
      _
    // Predicated region
    $region46: #{gatnet_forward.1} parent=1 // pred_check
      _
    $region47: #{gatnet_forward.1} parent=1 // pred_check_branch
      %47 = sbr.rel (0) target = $region49
    $region48: #{gatnet_forward.1} parent=1 // pred_region
      _
    $region49: #{gatnet_forward.1} parent=1 // pred_fallthru
      _
    // Predicated region
    $region50: #{gatnet_forward.1} parent=1 // pred_check
      _
    $region51: #{gatnet_forward.1} parent=1 // pred_check_branch
      %49 = sbr.rel (0) target = $region53
    $region52: #{gatnet_forward.1} parent=1 // pred_region
      _
    $region53: #{gatnet_forward.1} parent=1 // pred_fallthru
      _
    // Predicated region
    $region54: #{gatnet_forward.1} parent=1 // pred_check
      _
    $region55: #{gatnet_forward.1} parent=1 // pred_check_branch
      %51 = sbr.rel (0) target = $region57
    $region56: #{gatnet_forward.1} parent=1 // pred_region
      _
    $region57: #{gatnet_forward.1} parent=1 // pred_fallthru
      _
    // Predicated region
    $region58: #{gatnet_forward.1} parent=1 // pred_check
      _
    $region59: #{gatnet_forward.1} parent=1 // pred_check_branch
      %53 = sbr.rel (0) target = $region61
    $region60: #{gatnet_forward.1} parent=1 // pred_region
      _
    $region61: #{gatnet_forward.1} parent=1 // pred_fallthru
      _
    // Predicated region
    $region62: #{gatnet_forward.1} parent=1 // pred_check
      _
    $region63: #{gatnet_forward.1} parent=1 // pred_check_branch
      %55 = sbr.rel (0) target = $region65
    $region64: #{gatnet_forward.1} parent=1 // pred_region
      _
    $region65: #{gatnet_forward.1} parent=1 // pred_fallthru
      _
    %v56 = vld [vmem:[%s1] sm:$0xff]
    %v57 = vld [vmem:[%s1 + $0x8] sm:$0xff]
    %v58 = vld [vmem:[%s2] sm:$0xff]
    %v59 = vld [vmem:[%s2 + $0x8] sm:$0xff]
    %v60 = vld [vmem:[%s3] sm:$0xff]
    %v61 = vld [vmem:[%s3 + $0x8] sm:$0xff]
    %v62 = vld [vmem:[%s0] sm:$0xff]
    %v63 = vld [vmem:[%s0 + $0x8] sm:$0xff]
    %v64 = vld [vmem:[%s4] sm:$0xff]
    %v65 = vld [vmem:[%s4 + $0x8] sm:$0xff]
    %v66 = vld [vmem:[%s4 + $0x10] sm:$0xff]
    %v67 = vld [vmem:[%s4 + $0x18] sm:$0xff]
    %v68 = vld [vmem:[%s4 + $0x20] sm:$0xff]
    %v69 = vld [vmem:[%s4 + $0x28] sm:$0xff]
    %v70 = vld [vmem:[%s4 + $0x30] sm:$0xff]
    %v71 = vld [vmem:[%s4 + $0x38] sm:$0xff]
    %v72 = vld [vmem:[%s4 + $0x40] sm:$0xff]
    %v73 = vld [vmem:[%s4 + $0x48] sm:$0xff]
    %v74 = vld [vmem:[%s4 + $0x50] sm:$0xff]
    %v75 = vld [vmem:[%s4 + $0x58] sm:$0xff]
    %v76 = vld [vmem:[%s4 + $0x60] sm:$0xff]
    %v77 = vld [vmem:[%s4 + $0x68] sm:$0xff]
    %v78 = vld [vmem:[%s4 + $0x70] sm:$0xff]
    %v79 = vld [vmem:[%s4 + $0x78] sm:$0xff]
    %v80 = vld [vmem:[%s4 + $0x80] sm:$0xff]
    %v81 = vld [vmem:[%s4 + $0x88] sm:$0xff]
    %v82 = vld [vmem:[%s4 + $0x90] sm:$0xff]
    %v83 = vld [vmem:[%s4 + $0x98] sm:$0xff]
    %v84 = vld [vmem:[%s4 + $0xa0] sm:$0xf]
    %v85 = vld [vmem:[%s4 + $0xa8] sm:$0xf]
    %vm86 = vcmask 687104
    %v88 = vsel %vm86, %v62, 0
    %v91 = vsel %vm86, %v63, 0
    %vm93 = vcmask 1043456
    %v95 = vsel %vm93, %v84, 0
    %v98 = vsel %vm93, %v85, 0
    %100 = vmatprep.subr.mxu0 %v65
    %101 = vmatpush1.msra.mxu0 %v64
    %102 = vmatprep.subr.mxu0 %v67
    %103 = vmatpush1.msra.mxu0 %v66
    %104 = vmatprep.subr.mxu0 %v69
    %105 = vmatpush1.msra.mxu0 %v68
    %106 = vmatprep.subr.mxu0 %v71
    %107 = vmatpush1.msra.mxu0 %v70
    %108 = vmatprep.subr.mxu0 %v73
    %109 = vmatpush1.msra.mxu0 %v72
    %110 = vmatprep.subr.mxu0 %v75
    %111 = vmatpush1.msra.mxu0 %v74
    %112 = vmatprep.subr.mxu0 %v77
    %113 = vmatpush1.msra.mxu0 %v76
    %114 = vmatprep.subr.mxu0 %v79
    %115 = vmatpush1.msra.mxu0 %v78
    %116 = vmatprep.subr.mxu0 %v81
    %117 = vmatpush1.msra.mxu0 %v80
    %118 = vmatprep.subr.mxu0 %v83
    %119 = vmatpush1.msra.mxu0 %v82
    %120 = vmatprep.subr.mxu0 %v98
    %121 = vmatpush1.msra.mxu0 %v95
    %122 = vmatprep.subr.mxu0 0.0
    %123 = vmatpush1.msra.mxu0 0.0
    %124 = vmatprep.subr.mxu0 0.0
    %125 = vmatpush1.msra.mxu0 0.0
    %126 = vmatprep.subr.mxu0 0.0
    %127 = vmatpush1.msra.mxu0 0.0
    %128 = vmatprep.subr.mxu0 0.0
    %129 = vmatpush1.msra.mxu0 0.0
    %130 = vmatprep.subr.mxu0 0.0
    %131 = vmatpush1.msra.mxu0 0.0
    %132 = vmatprep.subr.mxu0 0.0
    %133 = vmatpush1.msra.mxu0 0.0
    %134 = vmatprep.subr.mxu0 0.0
    %135 = vmatpush1.msra.mxu0 0.0
    %136 = vmatprep.subr.mxu0 0.0
    %137 = vmatpush1.msra.mxu0 0.0
    %138 = vmatprep.subr.mxu0 0.0
    %139 = vmatpush1.msra.mxu0 0.0
    %140 = vmatprep.subr.mxu0 0.0
    %141 = vmatpush1.msra.mxu0 0.0
    %142 = vmatprep.subr.mxu0 0.0
    %143 = vmatpush1.msra.mxu0 0.0
    %144 = vmatprep.subr.mxu0 0.0
    %145 = vmatpush1.msra.mxu0 0.0
    %146 = vmatprep.subr.mxu0 0.0
    %147 = vmatpush1.msra.mxu0 0.0
    %148 = vmatprep.subr.mxu0 0.0
    %149 = vmatpush1.msra.mxu0 0.0
    %150 = vmatprep.subr.mxu0 0.0
    %151 = vmatpush1.msra.mxu0 0.0
    %152 = vmatprep.subr.mxu0 0.0
    %153 = vmatpush1.msra.mxu0 0.0
    %154 = vmatprep.subr.mxu0 0.0
    %155 = vmatpush1.msra.mxu0 0.0
    %156 = vmatprep.subr.mxu0 0.0
    %157 = vmatpush1.msra.mxu0 0.0
    %158 = vmatprep.subr.mxu0 0.0
    %159 = vmatpush1.msra.mxu0 0.0
    %160 = vmatprep.subr.mxu0 0.0
    %161 = vmatpush1.msra.mxu0 0.0
    %162 = vmatprep.subr.mxu0 0.0
    %163 = vmatpush1.msra.mxu0 0.0
    %164 = vmatprep.mubr.f32.mxu0 0.0
    %165 = vmatmul.mubr.f32.gmra.mrb[0].mxu0 %v88
    %v166 = vpop.f32.mrb[0].mxu0
    %v167 = vadd.f32 0.0, %v166
    %v168 = vpop.f32.mrb[0].mxu0
    %v169 = vadd.f32 0.0, %v168
    %170 = vmatprep.mubr.f32.mxu0 0.0
    %171 = vmatmul.mubr.f32.gmra.mrb[0].mxu0 %v91
    %v172 = vpop.f32.mrb[0].mxu0
    %v173 = vadd.f32 0.0, %v172
    %v174 = vpop.f32.mrb[0].mxu0
    %v175 = vadd.f32 0.0, %v174
    %176 = vdwg.mxu0
    %179 = vrot.lane.b32.xlu0 %v167, 48
    %v180 = vpop.permute.xlu0 %179
    %181 = vrot.lane.b32.xlu0 %v173, 48
    %v182 = vpop.permute.xlu0 %181
    %185 = vxpose.xlu0.b32.start [1/16] %v180, 128
    %186 = vxpose.xlu0.b32.cont [2/16] %v182, 128
    %187 = vxpose.xlu0.b32.cont [3/16] 0.0, 128
    %188 = vxpose.xlu0.b32.cont [4/16] 0.0, 128
    %189 = vxpose.xlu0.b32.cont [5/16] 0.0, 128
    %190 = vxpose.xlu0.b32.cont [6/16] 0.0, 128
    %191 = vxpose.xlu0.b32.cont [7/16] 0.0, 128
    %192 = vxpose.xlu0.b32.cont [8/16] 0.0, 128
    %193 = vxpose.xlu0.b32.cont [9/16] 0.0, 128
    %194 = vxpose.xlu0.b32.cont [10/16] 0.0, 128
    %195 = vxpose.xlu0.b32.cont [11/16] 0.0, 128
    %196 = vxpose.xlu0.b32.cont [12/16] 0.0, 128
    %197 = vxpose.xlu0.b32.cont [13/16] 0.0, 128
    %198 = vxpose.xlu0.b32.cont [14/16] 0.0, 128
    %199 = vxpose.xlu0.b32.cont [15/16] 0.0, 128
    %200 = vxpose.xlu0.b32.end [16/16] 0.0, 128
    %v201 = vpop.trf.xlu0
    %v202 = vpop.trf.xlu0
    %v203 = vpop.trf.xlu0
    %v204 = vpop.trf.xlu0
    %v205 = vpop.trf.xlu0
    %v206 = vpop.trf.xlu0
    %v207 = vpop.trf.xlu0
    %v208 = vpop.trf.xlu0
    %v209 = vpop.trf.xlu0
    %v210 = vpop.trf.xlu0
    %v211 = vpop.trf.xlu0
    %v212 = vpop.trf.xlu0
    %v213 = vpop.trf.xlu0
    %v214 = vpop.trf.xlu0
    %v215 = vpop.trf.xlu0
    %v216 = vpop.trf.xlu0
    %217 = vset.pattern.permute.xlu0 64
    %218 = vperm.xlu0 %217, %v167
    %v219 = vpop.permute.xlu0 %218
    %221 = vset.pattern.permute.xlu0 64
    %222 = vperm.xlu0 %221, %v173
    %v223 = vpop.permute.xlu0 %222
    %v225 = vlaneseq
    %v226 = vshrl.u32 %v225, 7
    %v227 = vsub.s32 0, %v226
    %v228 = vrot.slane %v201, %v227
    %v229 = vadd.f32 %v219, %v228
    %v230 = vadd.f32 %v223, %v228
    %v231 = vmul.f32 %v229, 0.2
    %v232 = vmul.f32 %v230, 0.2
    %v233 = vmax.f32 %v229, %v231
    %v234 = vmax.f32 %v230, %v232
    %v235 = vadd.f32 %v233, %v56
    %v236 = vadd.f32 %v234, %v57
    %vm237 = vcmask 130048
    %v238 = vsel %vm237, %v235, -inf
    %239 = vmax.xlane.f32.xlu0 %v238
    %v240 = vpop.xlane.xlu0 %239
    %v241 = vsel %vm237, %v236, -inf
    %242 = vmax.xlane.f32.xlu0 %v241
    %v243 = vpop.xlane.xlu0 %242
    %v244 = vsub.f32 %v235, %v240
    %v245 = vsub.f32 %v236, %v243
    %v246 = vmul.f32 %v244, 1.442695
    %v247 = vpow.pop %v246
    %v248 = vmul.f32 %v245, 1.442695
    %v249 = vpow.pop %v248
    %v250 = vsel %vm237, %v247, 0.0
    %251 = vadd.xlane.f32.xlu0 %v250
    %v252 = vpop.xlane.xlu0 %251
    %v253 = vsel %vm237, %v249, 0.0
    %254 = vadd.xlane.f32.xlu0 %v253
    %v255 = vpop.xlane.xlu0 %254
    %v256 = vrcp.pop %v252
    %v257 = vrcp.pop %v255
    %v258 = vmul.f32 %v247, %v256
    %v259 = vmul.f32 %v249, %v257
    %v260 = vadd.f32 %v258, 0.0
    %v261 = vadd.f32 %v259, 0.0
    %v263 = vsel %vm237, %v258, 0
    %v266 = vsel %vm237, %v259, 0
    %268 = vmatprep.subr.mxu0 0.0
    %269 = vmatpush1.msra.mxu0 %v167
    %270 = vmatprep.subr.mxu0 0.0
    %271 = vmatpush1.msra.mxu0 %v173
    %272 = vmatprep.subr.mxu0 0.0
    %273 = vmatpush1.msra.mxu0 0.0
    %274 = vmatprep.subr.mxu0 0.0
    %275 = vmatpush1.msra.mxu0 0.0
    %276 = vmatprep.subr.mxu0 0.0
    %277 = vmatpush1.msra.mxu0 0.0
    %278 = vmatprep.subr.mxu0 0.0
    %279 = vmatpush1.msra.mxu0 0.0
    %280 = vmatprep.subr.mxu0 0.0
    %281 = vmatpush1.msra.mxu0 0.0
    %282 = vmatprep.subr.mxu0 0.0
    %283 = vmatpush1.msra.mxu0 0.0
    %284 = vmatprep.subr.mxu0 0.0
    %285 = vmatpush1.msra.mxu0 0.0
    %286 = vmatprep.subr.mxu0 0.0
    %287 = vmatpush1.msra.mxu0 0.0
    %288 = vmatprep.subr.mxu0 0.0
    %289 = vmatpush1.msra.mxu0 0.0
    %290 = vmatprep.subr.mxu0 0.0
    %291 = vmatpush1.msra.mxu0 0.0
    %292 = vmatprep.subr.mxu0 0.0
    %293 = vmatpush1.msra.mxu0 0.0
    %294 = vmatprep.subr.mxu0 0.0
    %295 = vmatpush1.msra.mxu0 0.0
    %296 = vmatprep.subr.mxu0 0.0
    %297 = vmatpush1.msra.mxu0 0.0
    %298 = vmatprep.subr.mxu0 0.0
    %299 = vmatpush1.msra.mxu0 0.0
    %300 = vmatprep.subr.mxu0 0.0
    %301 = vmatpush1.msra.mxu0 0.0
    %302 = vmatprep.subr.mxu0 0.0
    %303 = vmatpush1.msra.mxu0 0.0
    %304 = vmatprep.subr.mxu0 0.0
    %305 = vmatpush1.msra.mxu0 0.0
    %306 = vmatprep.subr.mxu0 0.0
    %307 = vmatpush1.msra.mxu0 0.0
    %308 = vmatprep.subr.mxu0 0.0
    %309 = vmatpush1.msra.mxu0 0.0
    %310 = vmatprep.subr.mxu0 0.0
    %311 = vmatpush1.msra.mxu0 0.0
    %312 = vmatprep.subr.mxu0 0.0
    %313 = vmatpush1.msra.mxu0 0.0
    %314 = vmatprep.subr.mxu0 0.0
    %315 = vmatpush1.msra.mxu0 0.0
    %316 = vmatprep.subr.mxu0 0.0
    %317 = vmatpush1.msra.mxu0 0.0
    %318 = vmatprep.subr.mxu0 0.0
    %319 = vmatpush1.msra.mxu0 0.0
    %320 = vmatprep.subr.mxu0 0.0
    %321 = vmatpush1.msra.mxu0 0.0
    %322 = vmatprep.subr.mxu0 0.0
    %323 = vmatpush1.msra.mxu0 0.0
    %324 = vmatprep.subr.mxu0 0.0
    %325 = vmatpush1.msra.mxu0 0.0
    %326 = vmatprep.subr.mxu0 0.0
    %327 = vmatpush1.msra.mxu0 0.0
    %328 = vmatprep.subr.mxu0 0.0
    %329 = vmatpush1.msra.mxu0 0.0
    %330 = vmatprep.subr.mxu0 0.0
    %331 = vmatpush1.msra.mxu0 0.0
    %332 = vmatprep.mubr.f32.mxu0 0.0
    %333 = vmatmul.mubr.f32.gmra.mrb[0].mxu0 %v263
    %v334 = vpop.f32.mrb[0].mxu0
    %v335 = vadd.f32 0.0, %v334
    %v336 = vpop.f32.mrb[0].mxu0
    %337 = vmatprep.mubr.f32.mxu0 0.0
    %338 = vmatmul.mubr.f32.gmra.mrb[0].mxu0 %v266
    %v339 = vpop.f32.mrb[0].mxu0
    %v340 = vadd.f32 0.0, %v339
    %v341 = vpop.f32.mrb[0].mxu0
    %342 = vdwg.mxu0
    %vm343 = vcmask 31744
    %344 = vst.msk [vmem:[#allocation2] sm:$0xff] %vm343, %v335
    %345 = vst.msk [vmem:[#allocation2 + $0x8] sm:$0xff] %vm343, %v340
    %346 = vset.pattern.permute.xlu0 65
    %347 = vperm.xlu0 %346, %v167
    %v348 = vpop.permute.xlu0 %347
    %350 = vset.pattern.permute.xlu0 65
    %351 = vperm.xlu0 %350, %v173
    %v352 = vpop.permute.xlu0 %351
    %v354 = vlaneseq
    %v355 = vshrl.u32 %v354, 7
    %v356 = vsub.s32 1, %v355
    %v357 = vrot.slane %v201, %v356
    %v358 = vadd.f32 %v348, %v357
    %v359 = vadd.f32 %v352, %v357
    %v360 = vmul.f32 %v358, 0.2
    %v361 = vmul.f32 %v359, 0.2
    %v362 = vmax.f32 %v358, %v360
    %v363 = vmax.f32 %v359, %v361
    %v364 = vadd.f32 %v362, %v56
    %v365 = vadd.f32 %v363, %v57
    %v366 = vsel %vm237, %v364, -inf
    %367 = vmax.xlane.f32.xlu0 %v366
    %v368 = vpop.xlane.xlu0 %367
    %v369 = vsel %vm237, %v365, -inf
    %370 = vmax.xlane.f32.xlu0 %v369
    %v371 = vpop.xlane.xlu0 %370
    %v372 = vsub.f32 %v364, %v368
    %v373 = vsub.f32 %v365, %v371
    %v374 = vmul.f32 %v372, 1.442695
    %v375 = vpow.pop %v374
    %v376 = vmul.f32 %v373, 1.442695
    %v377 = vpow.pop %v376
    %v378 = vsel %vm237, %v375, 0.0
    %379 = vadd.xlane.f32.xlu0 %v378
    %v380 = vpop.xlane.xlu0 %379
    %v381 = vsel %vm237, %v377, 0.0
    %382 = vadd.xlane.f32.xlu0 %v381
    %v383 = vpop.xlane.xlu0 %382
    %v384 = vrcp.pop %v380
    %v385 = vrcp.pop %v383
    %v386 = vmul.f32 %v375, %v384
    %v387 = vmul.f32 %v377, %v385
    %v388 = vadd.f32 %v260, %v386
    %v389 = vadd.f32 %v261, %v387
    %390 = vrot.lane.b32.xlu0 %v167, 124
    %v391 = vpop.permute.xlu0 %390
    %392 = vrot.lane.b32.xlu0 %v173, 124
    %v393 = vpop.permute.xlu0 %392
    %v397 = vsel %vm237, %v386, 0
    %v400 = vsel %vm237, %v387, 0
    %402 = vmatprep.subr.mxu0 0.0
    %403 = vmatpush1.msra.mxu0 %v391
    %404 = vmatprep.subr.mxu0 0.0
    %405 = vmatpush1.msra.mxu0 %v393
    %406 = vmatprep.subr.mxu0 0.0
    %407 = vmatpush1.msra.mxu0 0.0
    %408 = vmatprep.subr.mxu0 0.0
    %409 = vmatpush1.msra.mxu0 0.0
    %410 = vmatprep.subr.mxu0 0.0
    %411 = vmatpush1.msra.mxu0 0.0
    %412 = vmatprep.subr.mxu0 0.0
    %413 = vmatpush1.msra.mxu0 0.0
    %414 = vmatprep.subr.mxu0 0.0
    %415 = vmatpush1.msra.mxu0 0.0
    %416 = vmatprep.subr.mxu0 0.0
    %417 = vmatpush1.msra.mxu0 0.0
    %418 = vmatprep.subr.mxu0 0.0
    %419 = vmatpush1.msra.mxu0 0.0
    %420 = vmatprep.subr.mxu0 0.0
    %421 = vmatpush1.msra.mxu0 0.0
    %422 = vmatprep.subr.mxu0 0.0
    %423 = vmatpush1.msra.mxu0 0.0
    %424 = vmatprep.subr.mxu0 0.0
    %425 = vmatpush1.msra.mxu0 0.0
    %426 = vmatprep.subr.mxu0 0.0
    %427 = vmatpush1.msra.mxu0 0.0
    %428 = vmatprep.subr.mxu0 0.0
    %429 = vmatpush1.msra.mxu0 0.0
    %430 = vmatprep.subr.mxu0 0.0
    %431 = vmatpush1.msra.mxu0 0.0
    %432 = vmatprep.subr.mxu0 0.0
    %433 = vmatpush1.msra.mxu0 0.0
    %434 = vmatprep.subr.mxu0 0.0
    %435 = vmatpush1.msra.mxu0 0.0
    %436 = vmatprep.subr.mxu0 0.0
    %437 = vmatpush1.msra.mxu0 0.0
    %438 = vmatprep.subr.mxu0 0.0
    %439 = vmatpush1.msra.mxu0 0.0
    %440 = vmatprep.subr.mxu0 0.0
    %441 = vmatpush1.msra.mxu0 0.0
    %442 = vmatprep.subr.mxu0 0.0
    %443 = vmatpush1.msra.mxu0 0.0
    %444 = vmatprep.subr.mxu0 0.0
    %445 = vmatpush1.msra.mxu0 0.0
    %446 = vmatprep.subr.mxu0 0.0
    %447 = vmatpush1.msra.mxu0 0.0
    %448 = vmatprep.subr.mxu0 0.0
    %449 = vmatpush1.msra.mxu0 0.0
    %450 = vmatprep.subr.mxu0 0.0
    %451 = vmatpush1.msra.mxu0 0.0
    %452 = vmatprep.subr.mxu0 0.0
    %453 = vmatpush1.msra.mxu0 0.0
    %454 = vmatprep.subr.mxu0 0.0
    %455 = vmatpush1.msra.mxu0 0.0
    %456 = vmatprep.subr.mxu0 0.0
    %457 = vmatpush1.msra.mxu0 0.0
    %458 = vmatprep.subr.mxu0 0.0
    %459 = vmatpush1.msra.mxu0 0.0
    %460 = vmatprep.subr.mxu0 0.0
    %461 = vmatpush1.msra.mxu0 0.0
    %462 = vmatprep.subr.mxu0 0.0
    %463 = vmatpush1.msra.mxu0 0.0
    %464 = vmatprep.subr.mxu0 0.0
    %465 = vmatpush1.msra.mxu0 0.0
    %466 = vmatprep.mubr.f32.mxu0 0.0
    %467 = vmatmul.mubr.f32.gmra.mrb[0].mxu0 %v397
    %v468 = vpop.f32.mrb[0].mxu0
    %v469 = vadd.f32 0.0, %v468
    %v470 = vpop.f32.mrb[0].mxu0
    %471 = vmatprep.mubr.f32.mxu0 0.0
    %472 = vmatmul.mubr.f32.gmra.mrb[0].mxu0 %v400
    %v473 = vpop.f32.mrb[0].mxu0
    %v474 = vadd.f32 0.0, %v473
    %v475 = vpop.f32.mrb[0].mxu0
    %476 = vdwg.mxu0
    %479 = vrot.lane.b32.xlu0 %v469, 4
    %v480 = vpop.permute.xlu0 %479
    %481 = vrot.lane.b32.xlu0 %v474, 4
    %v482 = vpop.permute.xlu0 %481
    %vm485 = vcmask 64544
    %486 = vst.msk [vmem:[#allocation2] sm:$0xff] %vm485, %v480
    %487 = vst.msk [vmem:[#allocation2 + $0x8] sm:$0xff] %vm485, %v482
    %488 = vset.pattern.permute.xlu0 66
    %489 = vperm.xlu0 %488, %v167
    %v490 = vpop.permute.xlu0 %489
    %492 = vset.pattern.permute.xlu0 66
    %493 = vperm.xlu0 %492, %v173
    %v494 = vpop.permute.xlu0 %493
    %v496 = vlaneseq
    %v497 = vshrl.u32 %v496, 7
    %v498 = vsub.s32 2, %v497
    %v499 = vrot.slane %v201, %v498
    %v500 = vadd.f32 %v490, %v499
    %v501 = vadd.f32 %v494, %v499
    %v502 = vmul.f32 %v500, 0.2
    %v503 = vmul.f32 %v501, 0.2
    %v504 = vmax.f32 %v500, %v502
    %v505 = vmax.f32 %v501, %v503
    %v506 = vadd.f32 %v504, %v56
    %v507 = vadd.f32 %v505, %v57
    %v508 = vsel %vm237, %v506, -inf
    %509 = vmax.xlane.f32.xlu0 %v508
    %v510 = vpop.xlane.xlu0 %509
    %v511 = vsel %vm237, %v507, -inf
    %512 = vmax.xlane.f32.xlu0 %v511
    %v513 = vpop.xlane.xlu0 %512
    %v514 = vsub.f32 %v506, %v510
    %v515 = vsub.f32 %v507, %v513
    %v516 = vmul.f32 %v514, 1.442695
    %v517 = vpow.pop %v516
    %v518 = vmul.f32 %v515, 1.442695
    %v519 = vpow.pop %v518
    %v520 = vsel %vm237, %v517, 0.0
    %521 = vadd.xlane.f32.xlu0 %v520
    %v522 = vpop.xlane.xlu0 %521
    %v523 = vsel %vm237, %v519, 0.0
    %524 = vadd.xlane.f32.xlu0 %v523
    %v525 = vpop.xlane.xlu0 %524
    %v526 = vrcp.pop %v522
    %v527 = vrcp.pop %v525
    %v528 = vmul.f32 %v517, %v526
    %v529 = vmul.f32 %v519, %v527
    %v530 = vadd.f32 %v388, %v528
    %v531 = vadd.f32 %v389, %v529
    %532 = vrot.lane.b32.xlu0 %v167, 120
    %v533 = vpop.permute.xlu0 %532
    %534 = vrot.lane.b32.xlu0 %v173, 120
    %v535 = vpop.permute.xlu0 %534
    %v539 = vsel %vm237, %v528, 0
    %v542 = vsel %vm237, %v529, 0
    %544 = vmatprep.subr.mxu0 0.0
    %545 = vmatpush1.msra.mxu0 %v533
    %546 = vmatprep.subr.mxu0 0.0
    %547 = vmatpush1.msra.mxu0 %v535
    %548 = vmatprep.subr.mxu0 0.0
    %549 = vmatpush1.msra.mxu0 0.0
    %550 = vmatprep.subr.mxu0 0.0
    %551 = vmatpush1.msra.mxu0 0.0
    %552 = vmatprep.subr.mxu0 0.0
    %553 = vmatpush1.msra.mxu0 0.0
    %554 = vmatprep.subr.mxu0 0.0
    %555 = vmatpush1.msra.mxu0 0.0
    %556 = vmatprep.subr.mxu0 0.0
    %557 = vmatpush1.msra.mxu0 0.0
    %558 = vmatprep.subr.mxu0 0.0
    %559 = vmatpush1.msra.mxu0 0.0
    %560 = vmatprep.subr.mxu0 0.0
    %561 = vmatpush1.msra.mxu0 0.0
    %562 = vmatprep.subr.mxu0 0.0
    %563 = vmatpush1.msra.mxu0 0.0
    %564 = vmatprep.subr.mxu0 0.0
    %565 = vmatpush1.msra.mxu0 0.0
    %566 = vmatprep.subr.mxu0 0.0
    %567 = vmatpush1.msra.mxu0 0.0
    %568 = vmatprep.subr.mxu0 0.0
    %569 = vmatpush1.msra.mxu0 0.0
    %570 = vmatprep.subr.mxu0 0.0
    %571 = vmatpush1.msra.mxu0 0.0
    %572 = vmatprep.subr.mxu0 0.0
    %573 = vmatpush1.msra.mxu0 0.0
    %574 = vmatprep.subr.mxu0 0.0
    %575 = vmatpush1.msra.mxu0 0.0
    %576 = vmatprep.subr.mxu0 0.0
    %577 = vmatpush1.msra.mxu0 0.0
    %578 = vmatprep.subr.mxu0 0.0
    %579 = vmatpush1.msra.mxu0 0.0
    %580 = vmatprep.subr.mxu0 0.0
    %581 = vmatpush1.msra.mxu0 0.0
    %582 = vmatprep.subr.mxu0 0.0
    %583 = vmatpush1.msra.mxu0 0.0
    %584 = vmatprep.subr.mxu0 0.0
    %585 = vmatpush1.msra.mxu0 0.0
    %586 = vmatprep.subr.mxu0 0.0
    %587 = vmatpush1.msra.mxu0 0.0
    %588 = vmatprep.subr.mxu0 0.0
    %589 = vmatpush1.msra.mxu0 0.0
    %590 = vmatprep.subr.mxu0 0.0
    %591 = vmatpush1.msra.mxu0 0.0
    %592 = vmatprep.subr.mxu0 0.0
    %593 = vmatpush1.msra.mxu0 0.0
    %594 = vmatprep.subr.mxu0 0.0
    %595 = vmatpush1.msra.mxu0 0.0
    %596 = vmatprep.subr.mxu0 0.0
    %597 = vmatpush1.msra.mxu0 0.0
    %598 = vmatprep.subr.mxu0 0.0
    %599 = vmatpush1.msra.mxu0 0.0
    %600 = vmatprep.subr.mxu0 0.0
    %601 = vmatpush1.msra.mxu0 0.0
    %602 = vmatprep.subr.mxu0 0.0
    %603 = vmatpush1.msra.mxu0 0.0
    %604 = vmatprep.subr.mxu0 0.0
    %605 = vmatpush1.msra.mxu0 0.0
    %606 = vmatprep.subr.mxu0 0.0
    %607 = vmatpush1.msra.mxu0 0.0
    %608 = vmatprep.mubr.f32.mxu0 0.0
    %609 = vmatmul.mubr.f32.gmra.mrb[0].mxu0 %v539
    %v610 = vpop.f32.mrb[0].mxu0
    %v611 = vadd.f32 0.0, %v610
    %v612 = vpop.f32.mrb[0].mxu0
    %613 = vmatprep.mubr.f32.mxu0 0.0
    %614 = vmatmul.mubr.f32.gmra.mrb[0].mxu0 %v542
    %v615 = vpop.f32.mrb[0].mxu0
    %v616 = vadd.f32 0.0, %v615
    %v617 = vpop.f32.mrb[0].mxu0
    %618 = vdwg.mxu0
    %621 = vrot.lane.b32.xlu0 %v611, 8
    %v622 = vpop.permute.xlu0 %621
    %623 = vrot.lane.b32.xlu0 %v616, 8
    %v624 = vpop.permute.xlu0 %623
    %vm627 = vcmask 97344
    %628 = vst.msk [vmem:[#allocation2] sm:$0xff] %vm627, %v622
    %629 = vst.msk [vmem:[#allocation2 + $0x8] sm:$0xff] %vm627, %v624
    %630 = vset.pattern.permute.xlu0 67
    %631 = vperm.xlu0 %630, %v167
    %v632 = vpop.permute.xlu0 %631
    %634 = vset.pattern.permute.xlu0 67
    %635 = vperm.xlu0 %634, %v173
    %v636 = vpop.permute.xlu0 %635
    %v638 = vlaneseq
    %v639 = vshrl.u32 %v638, 7
    %v640 = vsub.s32 3, %v639
    %v641 = vrot.slane %v201, %v640
    %v642 = vadd.f32 %v632, %v641
    %v643 = vadd.f32 %v636, %v641
    %v644 = vmul.f32 %v642, 0.2
    %v645 = vmul.f32 %v643, 0.2
    %v646 = vmax.f32 %v642, %v644
    %v647 = vmax.f32 %v643, %v645
    %v648 = vadd.f32 %v646, %v56
    %v649 = vadd.f32 %v647, %v57
    %v650 = vsel %vm237, %v648, -inf
    %651 = vmax.xlane.f32.xlu0 %v650
    %v652 = vpop.xlane.xlu0 %651
    %v653 = vsel %vm237, %v649, -inf
    %654 = vmax.xlane.f32.xlu0 %v653
    %v655 = vpop.xlane.xlu0 %654
    %v656 = vsub.f32 %v648, %v652
    %v657 = vsub.f32 %v649, %v655
    %v658 = vmul.f32 %v656, 1.442695
    %v659 = vpow.pop %v658
    %v660 = vmul.f32 %v657, 1.442695
    %v661 = vpow.pop %v660
    %v662 = vsel %vm237, %v659, 0.0
    %663 = vadd.xlane.f32.xlu0 %v662
    %v664 = vpop.xlane.xlu0 %663
    %v665 = vsel %vm237, %v661, 0.0
    %666 = vadd.xlane.f32.xlu0 %v665
    %v667 = vpop.xlane.xlu0 %666
    %v668 = vrcp.pop %v664
    %v669 = vrcp.pop %v667
    %v670 = vmul.f32 %v659, %v668
    %v671 = vmul.f32 %v661, %v669
    %v672 = vadd.f32 %v530, %v670
    %v673 = vadd.f32 %v531, %v671
    %674 = vrot.lane.b32.xlu0 %v167, 116
    %v675 = vpop.permute.xlu0 %674
    %676 = vrot.lane.b32.xlu0 %v173, 116
    %v677 = vpop.permute.xlu0 %676
    %v681 = vsel %vm237, %v670, 0
    %v684 = vsel %vm237, %v671, 0
    %686 = vmatprep.subr.mxu0 0.0
    %687 = vmatpush1.msra.mxu0 %v675
    %688 = vmatprep.subr.mxu0 0.0
    %689 = vmatpush1.msra.mxu0 %v677
    %690 = vmatprep.subr.mxu0 0.0
    %691 = vmatpush1.msra.mxu0 0.0
    %692 = vmatprep.subr.mxu0 0.0
    %693 = vmatpush1.msra.mxu0 0.0
    %694 = vmatprep.subr.mxu0 0.0
    %695 = vmatpush1.msra.mxu0 0.0
    %696 = vmatprep.subr.mxu0 0.0
    %697 = vmatpush1.msra.mxu0 0.0
    %698 = vmatprep.subr.mxu0 0.0
    %699 = vmatpush1.msra.mxu0 0.0
    %700 = vmatprep.subr.mxu0 0.0
    %701 = vmatpush1.msra.mxu0 0.0
    %702 = vmatprep.subr.mxu0 0.0
    %703 = vmatpush1.msra.mxu0 0.0
    %704 = vmatprep.subr.mxu0 0.0
    %705 = vmatpush1.msra.mxu0 0.0
    %706 = vmatprep.subr.mxu0 0.0
    %707 = vmatpush1.msra.mxu0 0.0
    %708 = vmatprep.subr.mxu0 0.0
    %709 = vmatpush1.msra.mxu0 0.0
    %710 = vmatprep.subr.mxu0 0.0
    %711 = vmatpush1.msra.mxu0 0.0
    %712 = vmatprep.subr.mxu0 0.0
    %713 = vmatpush1.msra.mxu0 0.0
    %714 = vmatprep.subr.mxu0 0.0
    %715 = vmatpush1.msra.mxu0 0.0
    %716 = vmatprep.subr.mxu0 0.0
    %717 = vmatpush1.msra.mxu0 0.0
    %718 = vmatprep.subr.mxu0 0.0
    %719 = vmatpush1.msra.mxu0 0.0
    %720 = vmatprep.subr.mxu0 0.0
    %721 = vmatpush1.msra.mxu0 0.0
    %722 = vmatprep.subr.mxu0 0.0
    %723 = vmatpush1.msra.mxu0 0.0
    %724 = vmatprep.subr.mxu0 0.0
    %725 = vmatpush1.msra.mxu0 0.0
    %726 = vmatprep.subr.mxu0 0.0
    %727 = vmatpush1.msra.mxu0 0.0
    %728 = vmatprep.subr.mxu0 0.0
    %729 = vmatpush1.msra.mxu0 0.0
    %730 = vmatprep.subr.mxu0 0.0
    %731 = vmatpush1.msra.mxu0 0.0
    %732 = vmatprep.subr.mxu0 0.0
    %733 = vmatpush1.msra.mxu0 0.0
    %734 = vmatprep.subr.mxu0 0.0
    %735 = vmatpush1.msra.mxu0 0.0
    %736 = vmatprep.subr.mxu0 0.0
    %737 = vmatpush1.msra.mxu0 0.0
    %738 = vmatprep.subr.mxu0 0.0
    %739 = vmatpush1.msra.mxu0 0.0
    %740 = vmatprep.subr.mxu0 0.0
    %741 = vmatpush1.msra.mxu0 0.0
    %742 = vmatprep.subr.mxu0 0.0
    %743 = vmatpush1.msra.mxu0 0.0
    %744 = vmatprep.subr.mxu0 0.0
    %745 = vmatpush1.msra.mxu0 0.0
    %746 = vmatprep.subr.mxu0 0.0
    %747 = vmatpush1.msra.mxu0 0.0
    %748 = vmatprep.subr.mxu0 0.0
    %749 = vmatpush1.msra.mxu0 0.0
    %750 = vmatprep.mubr.f32.mxu0 0.0
    %751 = vmatmul.mubr.f32.gmra.mrb[0].mxu0 %v681
    %v752 = vpop.f32.mrb[0].mxu0
    %v753 = vadd.f32 0.0, %v752
    %v754 = vpop.f32.mrb[0].mxu0
    %755 = vmatprep.mubr.f32.mxu0 0.0
    %756 = vmatmul.mubr.f32.gmra.mrb[0].mxu0 %v684
    %v757 = vpop.f32.mrb[0].mxu0
    %v758 = vadd.f32 0.0, %v757
    %v759 = vpop.f32.mrb[0].mxu0
    %760 = vdwg.mxu0
    %763 = vrot.lane.b32.xlu0 %v753, 12
    %v764 = vpop.permute.xlu0 %763
    %765 = vrot.lane.b32.xlu0 %v758, 12
    %v766 = vpop.permute.xlu0 %765
    %vm769 = vcmask 130144
    %770 = vst.msk [vmem:[#allocation2] sm:$0xff] %vm769, %v764
    %771 = vst.msk [vmem:[#allocation2 + $0x8] sm:$0xff] %vm769, %v766
    %772 = vset.pattern.permute.xlu0 68
    %773 = vperm.xlu0 %772, %v167
    %v774 = vpop.permute.xlu0 %773
    %776 = vset.pattern.permute.xlu0 68
    %777 = vperm.xlu0 %776, %v173
    %v778 = vpop.permute.xlu0 %777
    %v780 = vlaneseq
    %v781 = vshrl.u32 %v780, 7
    %v782 = vsub.s32 4, %v781
    %v783 = vrot.slane %v201, %v782
    %v784 = vadd.f32 %v774, %v783
    %v785 = vadd.f32 %v778, %v783
    %v786 = vmul.f32 %v784, 0.2
    %v787 = vmul.f32 %v785, 0.2
    %v788 = vmax.f32 %v784, %v786
    %v789 = vmax.f32 %v785, %v787
    %v790 = vadd.f32 %v788, %v56
    %v791 = vadd.f32 %v789, %v57
    %v792 = vsel %vm237, %v790, -inf
    %793 = vmax.xlane.f32.xlu0 %v792
    %v794 = vpop.xlane.xlu0 %793
    %v795 = vsel %vm237, %v791, -inf
    %796 = vmax.xlane.f32.xlu0 %v795
    %v797 = vpop.xlane.xlu0 %796
    %v798 = vsub.f32 %v790, %v794
    %v799 = vsub.f32 %v791, %v797
    %v800 = vmul.f32 %v798, 1.442695
    %v801 = vpow.pop %v800
    %v802 = vmul.f32 %v799, 1.442695
    %v803 = vpow.pop %v802
    %v804 = vsel %vm237, %v801, 0.0
    %805 = vadd.xlane.f32.xlu0 %v804
    %v806 = vpop.xlane.xlu0 %805
    %v807 = vsel %vm237, %v803, 0.0
    %808 = vadd.xlane.f32.xlu0 %v807
    %v809 = vpop.xlane.xlu0 %808
    %v810 = vrcp.pop %v806
    %v811 = vrcp.pop %v809
    %v812 = vmul.f32 %v801, %v810
    %v813 = vmul.f32 %v803, %v811
    %v814 = vadd.f32 %v672, %v812
    %v815 = vadd.f32 %v673, %v813
    %816 = vrot.lane.b32.xlu0 %v167, 112
    %v817 = vpop.permute.xlu0 %816
    %818 = vrot.lane.b32.xlu0 %v173, 112
    %v819 = vpop.permute.xlu0 %818
    %v823 = vsel %vm237, %v812, 0
    %v826 = vsel %vm237, %v813, 0
    %828 = vmatprep.subr.mxu0 0.0
    %829 = vmatpush1.msra.mxu0 %v817
    %830 = vmatprep.subr.mxu0 0.0
    %831 = vmatpush1.msra.mxu0 %v819
    %832 = vmatprep.subr.mxu0 0.0
    %833 = vmatpush1.msra.mxu0 0.0
    %834 = vmatprep.subr.mxu0 0.0
    %835 = vmatpush1.msra.mxu0 0.0
    %836 = vmatprep.subr.mxu0 0.0
    %837 = vmatpush1.msra.mxu0 0.0
    %838 = vmatprep.subr.mxu0 0.0
    %839 = vmatpush1.msra.mxu0 0.0
    %840 = vmatprep.subr.mxu0 0.0
    %841 = vmatpush1.msra.mxu0 0.0
    %842 = vmatprep.subr.mxu0 0.0
    %843 = vmatpush1.msra.mxu0 0.0
    %844 = vmatprep.subr.mxu0 0.0
    %845 = vmatpush1.msra.mxu0 0.0
    %846 = vmatprep.subr.mxu0 0.0
    %847 = vmatpush1.msra.mxu0 0.0
    %848 = vmatprep.subr.mxu0 0.0
    %849 = vmatpush1.msra.mxu0 0.0
    %850 = vmatprep.subr.mxu0 0.0
    %851 = vmatpush1.msra.mxu0 0.0
    %852 = vmatprep.subr.mxu0 0.0
    %853 = vmatpush1.msra.mxu0 0.0
    %854 = vmatprep.subr.mxu0 0.0
    %855 = vmatpush1.msra.mxu0 0.0
    %856 = vmatprep.subr.mxu0 0.0
    %857 = vmatpush1.msra.mxu0 0.0
    %858 = vmatprep.subr.mxu0 0.0
    %859 = vmatpush1.msra.mxu0 0.0
    %860 = vmatprep.subr.mxu0 0.0
    %861 = vmatpush1.msra.mxu0 0.0
    %862 = vmatprep.subr.mxu0 0.0
    %863 = vmatpush1.msra.mxu0 0.0
    %864 = vmatprep.subr.mxu0 0.0
    %865 = vmatpush1.msra.mxu0 0.0
    %866 = vmatprep.subr.mxu0 0.0
    %867 = vmatpush1.msra.mxu0 0.0
    %868 = vmatprep.subr.mxu0 0.0
    %869 = vmatpush1.msra.mxu0 0.0
    %870 = vmatprep.subr.mxu0 0.0
    %871 = vmatpush1.msra.mxu0 0.0
    %872 = vmatprep.subr.mxu0 0.0
    %873 = vmatpush1.msra.mxu0 0.0
    %874 = vmatprep.subr.mxu0 0.0
    %875 = vmatpush1.msra.mxu0 0.0
    %876 = vmatprep.subr.mxu0 0.0
    %877 = vmatpush1.msra.mxu0 0.0
    %878 = vmatprep.subr.mxu0 0.0
    %879 = vmatpush1.msra.mxu0 0.0
    %880 = vmatprep.subr.mxu0 0.0
    %881 = vmatpush1.msra.mxu0 0.0
    %882 = vmatprep.subr.mxu0 0.0
    %883 = vmatpush1.msra.mxu0 0.0
    %884 = vmatprep.subr.mxu0 0.0
    %885 = vmatpush1.msra.mxu0 0.0
    %886 = vmatprep.subr.mxu0 0.0
    %887 = vmatpush1.msra.mxu0 0.0
    %888 = vmatprep.subr.mxu0 0.0
    %889 = vmatpush1.msra.mxu0 0.0
    %890 = vmatprep.subr.mxu0 0.0
    %891 = vmatpush1.msra.mxu0 0.0
    %892 = vmatprep.mubr.f32.mxu0 0.0
    %893 = vmatmul.mubr.f32.gmra.mrb[0].mxu0 %v823
    %v894 = vpop.f32.mrb[0].mxu0
    %v895 = vadd.f32 0.0, %v894
    %v896 = vpop.f32.mrb[0].mxu0
    %897 = vmatprep.mubr.f32.mxu0 0.0
    %898 = vmatmul.mubr.f32.gmra.mrb[0].mxu0 %v826
    %v899 = vpop.f32.mrb[0].mxu0
    %v900 = vadd.f32 0.0, %v899
    %v901 = vpop.f32.mrb[0].mxu0
    %902 = vdwg.mxu0
    %905 = vrot.lane.b32.xlu0 %v895, 16
    %v906 = vpop.permute.xlu0 %905
    %907 = vrot.lane.b32.xlu0 %v900, 16
    %v908 = vpop.permute.xlu0 %907
    %vm911 = vcmask 162944
    %912 = vst.msk [vmem:[#allocation2] sm:$0xff] %vm911, %v906
    %913 = vst.msk [vmem:[#allocation2 + $0x8] sm:$0xff] %vm911, %v908
    %914 = vset.pattern.permute.xlu0 69
    %915 = vperm.xlu0 %914, %v167
    %v916 = vpop.permute.xlu0 %915
    %918 = vset.pattern.permute.xlu0 69
    %919 = vperm.xlu0 %918, %v173
    %v920 = vpop.permute.xlu0 %919
    %v922 = vlaneseq
    %v923 = vshrl.u32 %v922, 7
    %v924 = vsub.s32 5, %v923
    %v925 = vrot.slane %v201, %v924
    %v926 = vadd.f32 %v916, %v925
    %v927 = vadd.f32 %v920, %v925
    %v928 = vmul.f32 %v926, 0.2
    %v929 = vmul.f32 %v927, 0.2
    %v930 = vmax.f32 %v926, %v928
    %v931 = vmax.f32 %v927, %v929
    %v932 = vadd.f32 %v930, %v56
    %v933 = vadd.f32 %v931, %v57
    %v934 = vsel %vm237, %v932, -inf
    %935 = vmax.xlane.f32.xlu0 %v934
    %v936 = vpop.xlane.xlu0 %935
    %v937 = vsel %vm237, %v933, -inf
    %938 = vmax.xlane.f32.xlu0 %v937
    %v939 = vpop.xlane.xlu0 %938
    %v940 = vsub.f32 %v932, %v936
    %v941 = vsub.f32 %v933, %v939
    %v942 = vmul.f32 %v940, 1.442695
    %v943 = vpow.pop %v942
    %v944 = vmul.f32 %v941, 1.442695
    %v945 = vpow.pop %v944
    %v946 = vsel %vm237, %v943, 0.0
    %947 = vadd.xlane.f32.xlu0 %v946
    %v948 = vpop.xlane.xlu0 %947
    %v949 = vsel %vm237, %v945, 0.0
    %950 = vadd.xlane.f32.xlu0 %v949
    %v951 = vpop.xlane.xlu0 %950
    %v952 = vrcp.pop %v948
    %v953 = vrcp.pop %v951
    %v954 = vmul.f32 %v943, %v952
    %v955 = vmul.f32 %v945, %v953
    %v956 = vadd.f32 %v814, %v954
    %v957 = vadd.f32 %v815, %v955
    %958 = vrot.lane.b32.xlu0 %v167, 108
    %v959 = vpop.permute.xlu0 %958
    %960 = vrot.lane.b32.xlu0 %v173, 108
    %v961 = vpop.permute.xlu0 %960
    %v965 = vsel %vm237, %v954, 0
    %v968 = vsel %vm237, %v955, 0
    %970 = vmatprep.subr.mxu0 0.0
    %971 = vmatpush1.msra.mxu0 %v959
    %972 = vmatprep.subr.mxu0 0.0
    %973 = vmatpush1.msra.mxu0 %v961
    %974 = vmatprep.subr.mxu0 0.0
    %975 = vmatpush1.msra.mxu0 0.0
    %976 = vmatprep.subr.mxu0 0.0
    %977 = vmatpush1.msra.mxu0 0.0
    %978 = vmatprep.subr.mxu0 0.0
    %979 = vmatpush1.msra.mxu0 0.0
    %980 = vmatprep.subr.mxu0 0.0
    %981 = vmatpush1.msra.mxu0 0.0
    %982 = vmatprep.subr.mxu0 0.0
    %983 = vmatpush1.msra.mxu0 0.0
    %984 = vmatprep.subr.mxu0 0.0
    %985 = vmatpush1.msra.mxu0 0.0
    %986 = vmatprep.subr.mxu0 0.0
    %987 = vmatpush1.msra.mxu0 0.0
    %988 = vmatprep.subr.mxu0 0.0
    %989 = vmatpush1.msra.mxu0 0.0
    %990 = vmatprep.subr.mxu0 0.0
    %991 = vmatpush1.msra.mxu0 0.0
    %992 = vmatprep.subr.mxu0 0.0
    %993 = vmatpush1.msra.mxu0 0.0
    %994 = vmatprep.subr.mxu0 0.0
    %995 = vmatpush1.msra.mxu0 0.0
    %996 = vmatprep.subr.mxu0 0.0
    %997 = vmatpush1.msra.mxu0 0.0
    %998 = vmatprep.subr.mxu0 0.0
    %999 = vmatpush1.msra.mxu0 0.0
    %1000 = vmatprep.subr.mxu0 0.0
    %1001 = vmatpush1.msra.mxu0 0.0
    %1002 = vmatprep.subr.mxu0 0.0
    %1003 = vmatpush1.msra.mxu0 0.0
    %1004 = vmatprep.subr.mxu0 0.0
    %1005 = vmatpush1.msra.mxu0 0.0
    %1006 = vmatprep.subr.mxu0 0.0
    %1007 = vmatpush1.msra.mxu0 0.0
    %1008 = vmatprep.subr.mxu0 0.0
    %1009 = vmatpush1.msra.mxu0 0.0
    %1010 = vmatprep.subr.mxu0 0.0
    %1011 = vmatpush1.msra.mxu0 0.0
    %1012 = vmatprep.subr.mxu0 0.0
    %1013 = vmatpush1.msra.mxu0 0.0
    %1014 = vmatprep.subr.mxu0 0.0
    %1015 = vmatpush1.msra.mxu0 0.0
    %1016 = vmatprep.subr.mxu0 0.0
    %1017 = vmatpush1.msra.mxu0 0.0
    %1018 = vmatprep.subr.mxu0 0.0
    %1019 = vmatpush1.msra.mxu0 0.0
    %1020 = vmatprep.subr.mxu0 0.0
    %1021 = vmatpush1.msra.mxu0 0.0
    %1022 = vmatprep.subr.mxu0 0.0
    %1023 = vmatpush1.msra.mxu0 0.0
    %1024 = vmatprep.subr.mxu0 0.0
    %1025 = vmatpush1.msra.mxu0 0.0
    %1026 = vmatprep.subr.mxu0 0.0
    %1027 = vmatpush1.msra.mxu0 0.0
    %1028 = vmatprep.subr.mxu0 0.0
    %1029 = vmatpush1.msra.mxu0 0.0
    %1030 = vmatprep.subr.mxu0 0.0
    %1031 = vmatpush1.msra.mxu0 0.0
    %1032 = vmatprep.subr.mxu0 0.0
    %1033 = vmatpush1.msra.mxu0 0.0
    %1034 = vmatprep.mubr.f32.mxu0 0.0
    %1035 = vmatmul.mubr.f32.gmra.mrb[0].mxu0 %v965
    %v1036 = vpop.f32.mrb[0].mxu0
    %v1037 = vadd.f32 0.0, %v1036
    %v1038 = vpop.f32.mrb[0].mxu0
    %1039 = vmatprep.mubr.f32.mxu0 0.0
    %1040 = vmatmul.mubr.f32.gmra.mrb[0].mxu0 %v968
    %v1041 = vpop.f32.mrb[0].mxu0
    %v1042 = vadd.f32 0.0, %v1041
    %v1043 = vpop.f32.mrb[0].mxu0
    %1044 = vdwg.mxu0
    %1047 = vrot.lane.b32.xlu0 %v1037, 20
    %v1048 = vpop.permute.xlu0 %1047
    %1049 = vrot.lane.b32.xlu0 %v1042, 20
    %v1050 = vpop.permute.xlu0 %1049
    %vm1053 = vcmask 195744
    %1054 = vst.msk [vmem:[#allocation2] sm:$0xff] %vm1053, %v1048
    %1055 = vst.msk [vmem:[#allocation2 + $0x8] sm:$0xff] %vm1053, %v1050
    %1056 = vset.pattern.permute.xlu0 70
    %1057 = vperm.xlu0 %1056, %v167
    %v1058 = vpop.permute.xlu0 %1057
    %1060 = vset.pattern.permute.xlu0 70
    %1061 = vperm.xlu0 %1060, %v173
    %v1062 = vpop.permute.xlu0 %1061
    %v1064 = vlaneseq
    %v1065 = vshrl.u32 %v1064, 7
    %v1066 = vsub.s32 6, %v1065
    %v1067 = vrot.slane %v201, %v1066
    %v1068 = vadd.f32 %v1058, %v1067
    %v1069 = vadd.f32 %v1062, %v1067
    %v1070 = vmul.f32 %v1068, 0.2
    %v1071 = vmul.f32 %v1069, 0.2
    %v1072 = vmax.f32 %v1068, %v1070
    %v1073 = vmax.f32 %v1069, %v1071
    %v1074 = vadd.f32 %v1072, %v56
    %v1075 = vadd.f32 %v1073, %v57
    %v1076 = vsel %vm237, %v1074, -inf
    %1077 = vmax.xlane.f32.xlu0 %v1076
    %v1078 = vpop.xlane.xlu0 %1077
    %v1079 = vsel %vm237, %v1075, -inf
    %1080 = vmax.xlane.f32.xlu0 %v1079
    %v1081 = vpop.xlane.xlu0 %1080
    %v1082 = vsub.f32 %v1074, %v1078
    %v1083 = vsub.f32 %v1075, %v1081
    %v1084 = vmul.f32 %v1082, 1.442695
    %v1085 = vpow.pop %v1084
    %v1086 = vmul.f32 %v1083, 1.442695
    %v1087 = vpow.pop %v1086
    %v1088 = vsel %vm237, %v1085, 0.0
    %1089 = vadd.xlane.f32.xlu0 %v1088
    %v1090 = vpop.xlane.xlu0 %1089
    %v1091 = vsel %vm237, %v1087, 0.0
    %1092 = vadd.xlane.f32.xlu0 %v1091
    %v1093 = vpop.xlane.xlu0 %1092
    %v1094 = vrcp.pop %v1090
    %v1095 = vrcp.pop %v1093
    %v1096 = vmul.f32 %v1085, %v1094
    %v1097 = vmul.f32 %v1087, %v1095
    %v1098 = vadd.f32 %v956, %v1096
    %v1099 = vadd.f32 %v957, %v1097
    %1100 = vrot.lane.b32.xlu0 %v167, 104
    %v1101 = vpop.permute.xlu0 %1100
    %1102 = vrot.lane.b32.xlu0 %v173, 104
    %v1103 = vpop.permute.xlu0 %1102
    %v1107 = vsel %vm237, %v1096, 0
    %v1110 = vsel %vm237, %v1097, 0
    %1112 = vmatprep.subr.mxu0 0.0
    %1113 = vmatpush1.msra.mxu0 %v1101
    %1114 = vmatprep.subr.mxu0 0.0
    %1115 = vmatpush1.msra.mxu0 %v1103
    %1116 = vmatprep.subr.mxu0 0.0
    %1117 = vmatpush1.msra.mxu0 0.0
    %1118 = vmatprep.subr.mxu0 0.0
    %1119 = vmatpush1.msra.mxu0 0.0
    %1120 = vmatprep.subr.mxu0 0.0
    %1121 = vmatpush1.msra.mxu0 0.0
    %1122 = vmatprep.subr.mxu0 0.0
    %1123 = vmatpush1.msra.mxu0 0.0
    %1124 = vmatprep.subr.mxu0 0.0
    %1125 = vmatpush1.msra.mxu0 0.0
    %1126 = vmatprep.subr.mxu0 0.0
    %1127 = vmatpush1.msra.mxu0 0.0
    %1128 = vmatprep.subr.mxu0 0.0
    %1129 = vmatpush1.msra.mxu0 0.0
    %1130 = vmatprep.subr.mxu0 0.0
    %1131 = vmatpush1.msra.mxu0 0.0
    %1132 = vmatprep.subr.mxu0 0.0
    %1133 = vmatpush1.msra.mxu0 0.0
    %1134 = vmatprep.subr.mxu0 0.0
    %1135 = vmatpush1.msra.mxu0 0.0
    %1136 = vmatprep.subr.mxu0 0.0
    %1137 = vmatpush1.msra.mxu0 0.0
    %1138 = vmatprep.subr.mxu0 0.0
    %1139 = vmatpush1.msra.mxu0 0.0
    %1140 = vmatprep.subr.mxu0 0.0
    %1141 = vmatpush1.msra.mxu0 0.0
    %1142 = vmatprep.subr.mxu0 0.0
    %1143 = vmatpush1.msra.mxu0 0.0
    %1144 = vmatprep.subr.mxu0 0.0
    %1145 = vmatpush1.msra.mxu0 0.0
    %1146 = vmatprep.subr.mxu0 0.0
    %1147 = vmatpush1.msra.mxu0 0.0
    %1148 = vmatprep.subr.mxu0 0.0
    %1149 = vmatpush1.msra.mxu0 0.0
    %1150 = vmatprep.subr.mxu0 0.0
    %1151 = vmatpush1.msra.mxu0 0.0
    %1152 = vmatprep.subr.mxu0 0.0
    %1153 = vmatpush1.msra.mxu0 0.0
    %1154 = vmatprep.subr.mxu0 0.0
    %1155 = vmatpush1.msra.mxu0 0.0
    %1156 = vmatprep.subr.mxu0 0.0
    %1157 = vmatpush1.msra.mxu0 0.0
    %1158 = vmatprep.subr.mxu0 0.0
    %1159 = vmatpush1.msra.mxu0 0.0
    %1160 = vmatprep.subr.mxu0 0.0
    %1161 = vmatpush1.msra.mxu0 0.0
    %1162 = vmatprep.subr.mxu0 0.0
    %1163 = vmatpush1.msra.mxu0 0.0
    %1164 = vmatprep.subr.mxu0 0.0
    %1165 = vmatpush1.msra.mxu0 0.0
    %1166 = vmatprep.subr.mxu0 0.0
    %1167 = vmatpush1.msra.mxu0 0.0
    %1168 = vmatprep.subr.mxu0 0.0
    %1169 = vmatpush1.msra.mxu0 0.0
    %1170 = vmatprep.subr.mxu0 0.0
    %1171 = vmatpush1.msra.mxu0 0.0
    %1172 = vmatprep.subr.mxu0 0.0
    %1173 = vmatpush1.msra.mxu0 0.0
    %1174 = vmatprep.subr.mxu0 0.0
    %1175 = vmatpush1.msra.mxu0 0.0
    %1176 = vmatprep.mubr.f32.mxu0 0.0
    %1177 = vmatmul.mubr.f32.gmra.mrb[0].mxu0 %v1107
    %v1178 = vpop.f32.mrb[0].mxu0
    %v1179 = vadd.f32 0.0, %v1178
    %v1180 = vpop.f32.mrb[0].mxu0
    %1181 = vmatprep.mubr.f32.mxu0 0.0
    %1182 = vmatmul.mubr.f32.gmra.mrb[0].mxu0 %v1110
    %v1183 = vpop.f32.mrb[0].mxu0
    %v1184 = vadd.f32 0.0, %v1183
    %v1185 = vpop.f32.mrb[0].mxu0
    %1186 = vdwg.mxu0
    %1189 = vrot.lane.b32.xlu0 %v1179, 24
    %v1190 = vpop.permute.xlu0 %1189
    %1191 = vrot.lane.b32.xlu0 %v1184, 24
    %v1192 = vpop.permute.xlu0 %1191
    %vm1195 = vcmask 228544
    %1196 = vst.msk [vmem:[#allocation2] sm:$0xff] %vm1195, %v1190
    %1197 = vst.msk [vmem:[#allocation2 + $0x8] sm:$0xff] %vm1195, %v1192
    %1198 = vset.pattern.permute.xlu0 71
    %1199 = vperm.xlu0 %1198, %v167
    %v1200 = vpop.permute.xlu0 %1199
    %1202 = vset.pattern.permute.xlu0 71
    %1203 = vperm.xlu0 %1202, %v173
    %v1204 = vpop.permute.xlu0 %1203
    %v1206 = vlaneseq
    %v1207 = vshrl.u32 %v1206, 7
    %v1208 = vsub.s32 7, %v1207
    %v1209 = vrot.slane %v201, %v1208
    %v1210 = vadd.f32 %v1200, %v1209
    %v1211 = vadd.f32 %v1204, %v1209
    %v1212 = vmul.f32 %v1210, 0.2
    %v1213 = vmul.f32 %v1211, 0.2
    %v1214 = vmax.f32 %v1210, %v1212
    %v1215 = vmax.f32 %v1211, %v1213
    %v1216 = vadd.f32 %v1214, %v56
    %v1217 = vadd.f32 %v1215, %v57
    %v1218 = vsel %vm237, %v1216, -inf
    %1219 = vmax.xlane.f32.xlu0 %v1218
    %v1220 = vpop.xlane.xlu0 %1219
    %v1221 = vsel %vm237, %v1217, -inf
    %1222 = vmax.xlane.f32.xlu0 %v1221
    %v1223 = vpop.xlane.xlu0 %1222
    %v1224 = vsub.f32 %v1216, %v1220
    %v1225 = vsub.f32 %v1217, %v1223
    %v1226 = vmul.f32 %v1224, 1.442695
    %v1227 = vpow.pop %v1226
    %v1228 = vmul.f32 %v1225, 1.442695
    %v1229 = vpow.pop %v1228
    %v1230 = vsel %vm237, %v1227, 0.0
    %1231 = vadd.xlane.f32.xlu0 %v1230
    %v1232 = vpop.xlane.xlu0 %1231
    %v1233 = vsel %vm237, %v1229, 0.0
    %1234 = vadd.xlane.f32.xlu0 %v1233
    %v1235 = vpop.xlane.xlu0 %1234
    %v1236 = vrcp.pop %v1232
    %v1237 = vrcp.pop %v1235
    %v1238 = vmul.f32 %v1227, %v1236
    %v1239 = vmul.f32 %v1229, %v1237
    %v1240 = vadd.f32 %v1098, %v1238
    %v1241 = vadd.f32 %v1099, %v1239
    %1242 = vrot.lane.b32.xlu0 %v167, 100
    %v1243 = vpop.permute.xlu0 %1242
    %1244 = vrot.lane.b32.xlu0 %v173, 100
    %v1245 = vpop.permute.xlu0 %1244
    %v1249 = vsel %vm237, %v1238, 0
    %v1252 = vsel %vm237, %v1239, 0
    %1254 = vmatprep.subr.mxu0 0.0
    %1255 = vmatpush1.msra.mxu0 %v1243
    %1256 = vmatprep.subr.mxu0 0.0
    %1257 = vmatpush1.msra.mxu0 %v1245
    %1258 = vmatprep.subr.mxu0 0.0
    %1259 = vmatpush1.msra.mxu0 0.0
    %1260 = vmatprep.subr.mxu0 0.0
    %1261 = vmatpush1.msra.mxu0 0.0
    %1262 = vmatprep.subr.mxu0 0.0
    %1263 = vmatpush1.msra.mxu0 0.0
    %1264 = vmatprep.subr.mxu0 0.0
    %1265 = vmatpush1.msra.mxu0 0.0
    %1266 = vmatprep.subr.mxu0 0.0
    %1267 = vmatpush1.msra.mxu0 0.0
    %1268 = vmatprep.subr.mxu0 0.0
    %1269 = vmatpush1.msra.mxu0 0.0
    %1270 = vmatprep.subr.mxu0 0.0
    %1271 = vmatpush1.msra.mxu0 0.0
    %1272 = vmatprep.subr.mxu0 0.0
    %1273 = vmatpush1.msra.mxu0 0.0
    %1274 = vmatprep.subr.mxu0 0.0
    %1275 = vmatpush1.msra.mxu0 0.0
    %1276 = vmatprep.subr.mxu0 0.0
    %1277 = vmatpush1.msra.mxu0 0.0
    %1278 = vmatprep.subr.mxu0 0.0
    %1279 = vmatpush1.msra.mxu0 0.0
    %1280 = vmatprep.subr.mxu0 0.0
    %1281 = vmatpush1.msra.mxu0 0.0
    %1282 = vmatprep.subr.mxu0 0.0
    %1283 = vmatpush1.msra.mxu0 0.0
    %1284 = vmatprep.subr.mxu0 0.0
    %1285 = vmatpush1.msra.mxu0 0.0
    %1286 = vmatprep.subr.mxu0 0.0
    %1287 = vmatpush1.msra.mxu0 0.0
    %1288 = vmatprep.subr.mxu0 0.0
    %1289 = vmatpush1.msra.mxu0 0.0
    %1290 = vmatprep.subr.mxu0 0.0
    %1291 = vmatpush1.msra.mxu0 0.0
    %1292 = vmatprep.subr.mxu0 0.0
    %1293 = vmatpush1.msra.mxu0 0.0
    %1294 = vmatprep.subr.mxu0 0.0
    %1295 = vmatpush1.msra.mxu0 0.0
    %1296 = vmatprep.subr.mxu0 0.0
    %1297 = vmatpush1.msra.mxu0 0.0
    %1298 = vmatprep.subr.mxu0 0.0
    %1299 = vmatpush1.msra.mxu0 0.0
    %1300 = vmatprep.subr.mxu0 0.0
    %1301 = vmatpush1.msra.mxu0 0.0
    %1302 = vmatprep.subr.mxu0 0.0
    %1303 = vmatpush1.msra.mxu0 0.0
    %1304 = vmatprep.subr.mxu0 0.0
    %1305 = vmatpush1.msra.mxu0 0.0
    %1306 = vmatprep.subr.mxu0 0.0
    %1307 = vmatpush1.msra.mxu0 0.0
    %1308 = vmatprep.subr.mxu0 0.0
    %1309 = vmatpush1.msra.mxu0 0.0
    %1310 = vmatprep.subr.mxu0 0.0
    %1311 = vmatpush1.msra.mxu0 0.0
    %1312 = vmatprep.subr.mxu0 0.0
    %1313 = vmatpush1.msra.mxu0 0.0
    %1314 = vmatprep.subr.mxu0 0.0
    %1315 = vmatpush1.msra.mxu0 0.0
    %1316 = vmatprep.subr.mxu0 0.0
    %1317 = vmatpush1.msra.mxu0 0.0
    %1318 = vmatprep.mubr.f32.mxu0 0.0
    %1319 = vmatmul.mubr.f32.gmra.mrb[0].mxu0 %v1249
    %v1320 = vpop.f32.mrb[0].mxu0
    %v1321 = vadd.f32 0.0, %v1320
    %v1322 = vpop.f32.mrb[0].mxu0
    %1323 = vmatprep.mubr.f32.mxu0 0.0
    %1324 = vmatmul.mubr.f32.gmra.mrb[0].mxu0 %v1252
    %v1325 = vpop.f32.mrb[0].mxu0
    %v1326 = vadd.f32 0.0, %v1325
    %v1327 = vpop.f32.mrb[0].mxu0
    %1328 = vdwg.mxu0
    %1331 = vrot.lane.b32.xlu0 %v1321, 28
    %v1332 = vpop.permute.xlu0 %1331
    %1333 = vrot.lane.b32.xlu0 %v1326, 28
    %v1334 = vpop.permute.xlu0 %1333
    %vm1337 = vcmask 261344
    %1338 = vst.msk [vmem:[#allocation2] sm:$0xff] %vm1337, %v1332
    %1339 = vst.msk [vmem:[#allocation2 + $0x8] sm:$0xff] %vm1337, %v1334
    %1340 = vset.pattern.permute.xlu0 72
    %1341 = vperm.xlu0 %1340, %v167
    %v1342 = vpop.permute.xlu0 %1341
    %1344 = vset.pattern.permute.xlu0 72
    %1345 = vperm.xlu0 %1344, %v173
    %v1346 = vpop.permute.xlu0 %1345
    %v1348 = vlaneseq
    %v1349 = vshrl.u32 %v1348, 7
    %v1350 = vsub.s32 0, %v1349
    %v1351 = vrot.slane %v202, %v1350
    %v1352 = vadd.f32 %v1342, %v1351
    %v1353 = vadd.f32 %v1346, %v1351
    %v1354 = vmul.f32 %v1352, 0.2
    %v1355 = vmul.f32 %v1353, 0.2
    %v1356 = vmax.f32 %v1352, %v1354
    %v1357 = vmax.f32 %v1353, %v1355
    %v1358 = vadd.f32 %v1356, %v56
    %v1359 = vadd.f32 %v1357, %v57
    %v1360 = vsel %vm237, %v1358, -inf
    %1361 = vmax.xlane.f32.xlu0 %v1360
    %v1362 = vpop.xlane.xlu0 %1361
    %v1363 = vsel %vm237, %v1359, -inf
    %1364 = vmax.xlane.f32.xlu0 %v1363
    %v1365 = vpop.xlane.xlu0 %1364
    %v1366 = vsub.f32 %v1358, %v1362
    %v1367 = vsub.f32 %v1359, %v1365
    %v1368 = vmul.f32 %v1366, 1.442695
    %v1369 = vpow.pop %v1368
    %v1370 = vmul.f32 %v1367, 1.442695
    %v1371 = vpow.pop %v1370
    %v1372 = vsel %vm237, %v1369, 0.0
    %1373 = vadd.xlane.f32.xlu0 %v1372
    %v1374 = vpop.xlane.xlu0 %1373
    %v1375 = vsel %vm237, %v1371, 0.0
    %1376 = vadd.xlane.f32.xlu0 %v1375
    %v1377 = vpop.xlane.xlu0 %1376
    %v1378 = vrcp.pop %v1374
    %v1379 = vrcp.pop %v1377
    %v1380 = vmul.f32 %v1369, %v1378
    %v1381 = vmul.f32 %v1371, %v1379
    %v1382 = vadd.f32 %v1240, %v1380
    %v1383 = vadd.f32 %v1241, %v1381
    %1384 = vrot.lane.b32.xlu0 %v167, 96
    %v1385 = vpop.permute.xlu0 %1384
    %1386 = vrot.lane.b32.xlu0 %v173, 96
    %v1387 = vpop.permute.xlu0 %1386
    %v1391 = vsel %vm237, %v1380, 0
    %v1394 = vsel %vm237, %v1381, 0
    %1396 = vmatprep.subr.mxu0 0.0
    %1397 = vmatpush1.msra.mxu0 %v1385
    %1398 = vmatprep.subr.mxu0 0.0
    %1399 = vmatpush1.msra.mxu0 %v1387
    %1400 = vmatprep.subr.mxu0 0.0
    %1401 = vmatpush1.msra.mxu0 0.0
    %1402 = vmatprep.subr.mxu0 0.0
    %1403 = vmatpush1.msra.mxu0 0.0
    %1404 = vmatprep.subr.mxu0 0.0
    %1405 = vmatpush1.msra.mxu0 0.0
    %1406 = vmatprep.subr.mxu0 0.0
    %1407 = vmatpush1.msra.mxu0 0.0
    %1408 = vmatprep.subr.mxu0 0.0
    %1409 = vmatpush1.msra.mxu0 0.0
    %1410 = vmatprep.subr.mxu0 0.0
    %1411 = vmatpush1.msra.mxu0 0.0
    %1412 = vmatprep.subr.mxu0 0.0
    %1413 = vmatpush1.msra.mxu0 0.0
    %1414 = vmatprep.subr.mxu0 0.0
    %1415 = vmatpush1.msra.mxu0 0.0
    %1416 = vmatprep.subr.mxu0 0.0
    %1417 = vmatpush1.msra.mxu0 0.0
    %1418 = vmatprep.subr.mxu0 0.0
    %1419 = vmatpush1.msra.mxu0 0.0
    %1420 = vmatprep.subr.mxu0 0.0
    %1421 = vmatpush1.msra.mxu0 0.0
    %1422 = vmatprep.subr.mxu0 0.0
    %1423 = vmatpush1.msra.mxu0 0.0
    %1424 = vmatprep.subr.mxu0 0.0
    %1425 = vmatpush1.msra.mxu0 0.0
    %1426 = vmatprep.subr.mxu0 0.0
    %1427 = vmatpush1.msra.mxu0 0.0
    %1428 = vmatprep.subr.mxu0 0.0
    %1429 = vmatpush1.msra.mxu0 0.0
    %1430 = vmatprep.subr.mxu0 0.0
    %1431 = vmatpush1.msra.mxu0 0.0
    %1432 = vmatprep.subr.mxu0 0.0
    %1433 = vmatpush1.msra.mxu0 0.0
    %1434 = vmatprep.subr.mxu0 0.0
    %1435 = vmatpush1.msra.mxu0 0.0
    %1436 = vmatprep.subr.mxu0 0.0
    %1437 = vmatpush1.msra.mxu0 0.0
    %1438 = vmatprep.subr.mxu0 0.0
    %1439 = vmatpush1.msra.mxu0 0.0
    %1440 = vmatprep.subr.mxu0 0.0
    %1441 = vmatpush1.msra.mxu0 0.0
    %1442 = vmatprep.subr.mxu0 0.0
    %1443 = vmatpush1.msra.mxu0 0.0
    %1444 = vmatprep.subr.mxu0 0.0
    %1445 = vmatpush1.msra.mxu0 0.0
    %1446 = vmatprep.subr.mxu0 0.0
    %1447 = vmatpush1.msra.mxu0 0.0
    %1448 = vmatprep.subr.mxu0 0.0
    %1449 = vmatpush1.msra.mxu0 0.0
    %1450 = vmatprep.subr.mxu0 0.0
    %1451 = vmatpush1.msra.mxu0 0.0
    %1452 = vmatprep.subr.mxu0 0.0
    %1453 = vmatpush1.msra.mxu0 0.0
    %1454 = vmatprep.subr.mxu0 0.0
    %1455 = vmatpush1.msra.mxu0 0.0
    %1456 = vmatprep.subr.mxu0 0.0
    %1457 = vmatpush1.msra.mxu0 0.0
    %1458 = vmatprep.subr.mxu0 0.0
    %1459 = vmatpush1.msra.mxu0 0.0
    %1460 = vmatprep.mubr.f32.mxu0 0.0
    %1461 = vmatmul.mubr.f32.gmra.mrb[0].mxu0 %v1391
    %v1462 = vpop.f32.mrb[0].mxu0
    %v1463 = vadd.f32 0.0, %v1462
    %v1464 = vpop.f32.mrb[0].mxu0
    %1465 = vmatprep.mubr.f32.mxu0 0.0
    %1466 = vmatmul.mubr.f32.gmra.mrb[0].mxu0 %v1394
    %v1467 = vpop.f32.mrb[0].mxu0
    %v1468 = vadd.f32 0.0, %v1467
    %v1469 = vpop.f32.mrb[0].mxu0
    %1470 = vdwg.mxu0
    %1473 = vrot.lane.b32.xlu0 %v1463, 32
    %v1474 = vpop.permute.xlu0 %1473
    %1475 = vrot.lane.b32.xlu0 %v1468, 32
    %v1476 = vpop.permute.xlu0 %1475
    %vm1479 = vcmask 294144
    %1480 = vst.msk [vmem:[#allocation2] sm:$0xff] %vm1479, %v1474
    %1481 = vst.msk [vmem:[#allocation2 + $0x8] sm:$0xff] %vm1479, %v1476
    %1482 = vset.pattern.permute.xlu0 73
    %1483 = vperm.xlu0 %1482, %v167
    %v1484 = vpop.permute.xlu0 %1483
    %1486 = vset.pattern.permute.xlu0 73
    %1487 = vperm.xlu0 %1486, %v173
    %v1488 = vpop.permute.xlu0 %1487
    %v1490 = vlaneseq
    %v1491 = vshrl.u32 %v1490, 7
    %v1492 = vsub.s32 1, %v1491
    %v1493 = vrot.slane %v202, %v1492
    %v1494 = vadd.f32 %v1484, %v1493
    %v1495 = vadd.f32 %v1488, %v1493
    %v1496 = vmul.f32 %v1494, 0.2
    %v1497 = vmul.f32 %v1495, 0.2
    %v1498 = vmax.f32 %v1494, %v1496
    %v1499 = vmax.f32 %v1495, %v1497
    %v1500 = vadd.f32 %v1498, %v56
    %v1501 = vadd.f32 %v1499, %v57
    %v1502 = vsel %vm237, %v1500, -inf
    %1503 = vmax.xlane.f32.xlu0 %v1502
    %v1504 = vpop.xlane.xlu0 %1503
    %v1505 = vsel %vm237, %v1501, -inf
    %1506 = vmax.xlane.f32.xlu0 %v1505
    %v1507 = vpop.xlane.xlu0 %1506
    %v1508 = vsub.f32 %v1500, %v1504
    %v1509 = vsub.f32 %v1501, %v1507
    %v1510 = vmul.f32 %v1508, 1.442695
    %v1511 = vpow.pop %v1510
    %v1512 = vmul.f32 %v1509, 1.442695
    %v1513 = vpow.pop %v1512
    %v1514 = vsel %vm237, %v1511, 0.0
    %1515 = vadd.xlane.f32.xlu0 %v1514
    %v1516 = vpop.xlane.xlu0 %1515
    %v1517 = vsel %vm237, %v1513, 0.0
    %1518 = vadd.xlane.f32.xlu0 %v1517
    %v1519 = vpop.xlane.xlu0 %1518
    %v1520 = vrcp.pop %v1516
    %v1521 = vrcp.pop %v1519
    %v1522 = vmul.f32 %v1511, %v1520
    %v1523 = vmul.f32 %v1513, %v1521
    %v1524 = vadd.f32 %v1382, %v1522
    %v1525 = vadd.f32 %v1383, %v1523
    %1526 = vrot.lane.b32.xlu0 %v167, 92
    %v1527 = vpop.permute.xlu0 %1526
    %1528 = vrot.lane.b32.xlu0 %v173, 92
    %v1529 = vpop.permute.xlu0 %1528
    %v1533 = vsel %vm237, %v1522, 0
    %v1536 = vsel %vm237, %v1523, 0
    %1538 = vmatprep.subr.mxu0 0.0
    %1539 = vmatpush1.msra.mxu0 %v1527
    %1540 = vmatprep.subr.mxu0 0.0
    %1541 = vmatpush1.msra.mxu0 %v1529
    %1542 = vmatprep.subr.mxu0 0.0
    %1543 = vmatpush1.msra.mxu0 0.0
    %1544 = vmatprep.subr.mxu0 0.0
    %1545 = vmatpush1.msra.mxu0 0.0
    %1546 = vmatprep.subr.mxu0 0.0
    %1547 = vmatpush1.msra.mxu0 0.0
    %1548 = vmatprep.subr.mxu0 0.0
    %1549 = vmatpush1.msra.mxu0 0.0
    %1550 = vmatprep.subr.mxu0 0.0
    %1551 = vmatpush1.msra.mxu0 0.0
    %1552 = vmatprep.subr.mxu0 0.0
    %1553 = vmatpush1.msra.mxu0 0.0
    %1554 = vmatprep.subr.mxu0 0.0
    %1555 = vmatpush1.msra.mxu0 0.0
    %1556 = vmatprep.subr.mxu0 0.0
    %1557 = vmatpush1.msra.mxu0 0.0
    %1558 = vmatprep.subr.mxu0 0.0
    %1559 = vmatpush1.msra.mxu0 0.0
    %1560 = vmatprep.subr.mxu0 0.0
    %1561 = vmatpush1.msra.mxu0 0.0
    %1562 = vmatprep.subr.mxu0 0.0
    %1563 = vmatpush1.msra.mxu0 0.0
    %1564 = vmatprep.subr.mxu0 0.0
    %1565 = vmatpush1.msra.mxu0 0.0
    %1566 = vmatprep.subr.mxu0 0.0
    %1567 = vmatpush1.msra.mxu0 0.0
    %1568 = vmatprep.subr.mxu0 0.0
    %1569 = vmatpush1.msra.mxu0 0.0
    %1570 = vmatprep.subr.mxu0 0.0
    %1571 = vmatpush1.msra.mxu0 0.0
    %1572 = vmatprep.subr.mxu0 0.0
    %1573 = vmatpush1.msra.mxu0 0.0
    %1574 = vmatprep.subr.mxu0 0.0
    %1575 = vmatpush1.msra.mxu0 0.0
    %1576 = vmatprep.subr.mxu0 0.0
    %1577 = vmatpush1.msra.mxu0 0.0
    %1578 = vmatprep.subr.mxu0 0.0
    %1579 = vmatpush1.msra.mxu0 0.0
    %1580 = vmatprep.subr.mxu0 0.0
    %1581 = vmatpush1.msra.mxu0 0.0
    %1582 = vmatprep.subr.mxu0 0.0
    %1583 = vmatpush1.msra.mxu0 0.0
    %1584 = vmatprep.subr.mxu0 0.0
    %1585 = vmatpush1.msra.mxu0 0.0
    %1586 = vmatprep.subr.mxu0 0.0
    %1587 = vmatpush1.msra.mxu0 0.0
    %1588 = vmatprep.subr.mxu0 0.0
    %1589 = vmatpush1.msra.mxu0 0.0
    %1590 = vmatprep.subr.mxu0 0.0
    %1591 = vmatpush1.msra.mxu0 0.0
    %1592 = vmatprep.subr.mxu0 0.0
    %1593 = vmatpush1.msra.mxu0 0.0
    %1594 = vmatprep.subr.mxu0 0.0
    %1595 = vmatpush1.msra.mxu0 0.0
    %1596 = vmatprep.subr.mxu0 0.0
    %1597 = vmatpush1.msra.mxu0 0.0
    %1598 = vmatprep.subr.mxu0 0.0
    %1599 = vmatpush1.msra.mxu0 0.0
    %1600 = vmatprep.subr.mxu0 0.0
    %1601 = vmatpush1.msra.mxu0 0.0
    %1602 = vmatprep.mubr.f32.mxu0 0.0
    %1603 = vmatmul.mubr.f32.gmra.mrb[0].mxu0 %v1533
    %v1604 = vpop.f32.mrb[0].mxu0
    %v1605 = vadd.f32 0.0, %v1604
    %v1606 = vpop.f32.mrb[0].mxu0
    %1607 = vmatprep.mubr.f32.mxu0 0.0
    %1608 = vmatmul.mubr.f32.gmra.mrb[0].mxu0 %v1536
    %v1609 = vpop.f32.mrb[0].mxu0
    %v1610 = vadd.f32 0.0, %v1609
    %v1611 = vpop.f32.mrb[0].mxu0
    %1612 = vdwg.mxu0
    %1615 = vrot.lane.b32.xlu0 %v1605, 36
    %v1616 = vpop.permute.xlu0 %1615
    %1617 = vrot.lane.b32.xlu0 %v1610, 36
    %v1618 = vpop.permute.xlu0 %1617
    %vm1621 = vcmask 326944
    %1622 = vst.msk [vmem:[#allocation2] sm:$0xff] %vm1621, %v1616
    %1623 = vst.msk [vmem:[#allocation2 + $0x8] sm:$0xff] %vm1621, %v1618
    %1624 = vset.pattern.permute.xlu0 74
    %1625 = vperm.xlu0 %1624, %v167
    %v1626 = vpop.permute.xlu0 %1625
    %1628 = vset.pattern.permute.xlu0 74
    %1629 = vperm.xlu0 %1628, %v173
    %v1630 = vpop.permute.xlu0 %1629
    %v1632 = vlaneseq
    %v1633 = vshrl.u32 %v1632, 7
    %v1634 = vsub.s32 2, %v1633
    %v1635 = vrot.slane %v202, %v1634
    %v1636 = vadd.f32 %v1626, %v1635
    %v1637 = vadd.f32 %v1630, %v1635
    %v1638 = vmul.f32 %v1636, 0.2
    %v1639 = vmul.f32 %v1637, 0.2
    %v1640 = vmax.f32 %v1636, %v1638
    %v1641 = vmax.f32 %v1637, %v1639
    %v1642 = vadd.f32 %v1640, %v56
    %v1643 = vadd.f32 %v1641, %v57
    %v1644 = vsel %vm237, %v1642, -inf
    %1645 = vmax.xlane.f32.xlu0 %v1644
    %v1646 = vpop.xlane.xlu0 %1645
    %v1647 = vsel %vm237, %v1643, -inf
    %1648 = vmax.xlane.f32.xlu0 %v1647
    %v1649 = vpop.xlane.xlu0 %1648
    %v1650 = vsub.f32 %v1642, %v1646
    %v1651 = vsub.f32 %v1643, %v1649
    %v1652 = vmul.f32 %v1650, 1.442695
    %v1653 = vpow.pop %v1652
    %v1654 = vmul.f32 %v1651, 1.442695
    %v1655 = vpow.pop %v1654
    %v1656 = vsel %vm237, %v1653, 0.0
    %1657 = vadd.xlane.f32.xlu0 %v1656
    %v1658 = vpop.xlane.xlu0 %1657
    %v1659 = vsel %vm237, %v1655, 0.0
    %1660 = vadd.xlane.f32.xlu0 %v1659
    %v1661 = vpop.xlane.xlu0 %1660
    %v1662 = vrcp.pop %v1658
    %v1663 = vrcp.pop %v1661
    %v1664 = vmul.f32 %v1653, %v1662
    %v1665 = vmul.f32 %v1655, %v1663
    %v1666 = vadd.f32 %v1524, %v1664
    %v1667 = vadd.f32 %v1525, %v1665
    %1668 = vrot.lane.b32.xlu0 %v167, 88
    %v1669 = vpop.permute.xlu0 %1668
    %1670 = vrot.lane.b32.xlu0 %v173, 88
    %v1671 = vpop.permute.xlu0 %1670
    %v1675 = vsel %vm237, %v1664, 0
    %v1678 = vsel %vm237, %v1665, 0
    %1680 = vmatprep.subr.mxu0 0.0
    %1681 = vmatpush1.msra.mxu0 %v1669
    %1682 = vmatprep.subr.mxu0 0.0
    %1683 = vmatpush1.msra.mxu0 %v1671
    %1684 = vmatprep.subr.mxu0 0.0
    %1685 = vmatpush1.msra.mxu0 0.0
    %1686 = vmatprep.subr.mxu0 0.0
    %1687 = vmatpush1.msra.mxu0 0.0
    %1688 = vmatprep.subr.mxu0 0.0
    %1689 = vmatpush1.msra.mxu0 0.0
    %1690 = vmatprep.subr.mxu0 0.0
    %1691 = vmatpush1.msra.mxu0 0.0
    %1692 = vmatprep.subr.mxu0 0.0
    %1693 = vmatpush1.msra.mxu0 0.0
    %1694 = vmatprep.subr.mxu0 0.0
    %1695 = vmatpush1.msra.mxu0 0.0
    %1696 = vmatprep.subr.mxu0 0.0
    %1697 = vmatpush1.msra.mxu0 0.0
    %1698 = vmatprep.subr.mxu0 0.0
    %1699 = vmatpush1.msra.mxu0 0.0
    %1700 = vmatprep.subr.mxu0 0.0
    %1701 = vmatpush1.msra.mxu0 0.0
    %1702 = vmatprep.subr.mxu0 0.0
    %1703 = vmatpush1.msra.mxu0 0.0
    %1704 = vmatprep.subr.mxu0 0.0
    %1705 = vmatpush1.msra.mxu0 0.0
    %1706 = vmatprep.subr.mxu0 0.0
    %1707 = vmatpush1.msra.mxu0 0.0
    %1708 = vmatprep.subr.mxu0 0.0
    %1709 = vmatpush1.msra.mxu0 0.0
    %1710 = vmatprep.subr.mxu0 0.0
    %1711 = vmatpush1.msra.mxu0 0.0
    %1712 = vmatprep.subr.mxu0 0.0
    %1713 = vmatpush1.msra.mxu0 0.0
    %1714 = vmatprep.subr.mxu0 0.0
    %1715 = vmatpush1.msra.mxu0 0.0
    %1716 = vmatprep.subr.mxu0 0.0
    %1717 = vmatpush1.msra.mxu0 0.0
    %1718 = vmatprep.subr.mxu0 0.0
    %1719 = vmatpush1.msra.mxu0 0.0
    %1720 = vmatprep.subr.mxu0 0.0
    %1721 = vmatpush1.msra.mxu0 0.0
    %1722 = vmatprep.subr.mxu0 0.0
    %1723 = vmatpush1.msra.mxu0 0.0
    %1724 = vmatprep.subr.mxu0 0.0
    %1725 = vmatpush1.msra.mxu0 0.0
    %1726 = vmatprep.subr.mxu0 0.0
    %1727 = vmatpush1.msra.mxu0 0.0
    %1728 = vmatprep.subr.mxu0 0.0
    %1729 = vmatpush1.msra.mxu0 0.0
    %1730 = vmatprep.subr.mxu0 0.0
    %1731 = vmatpush1.msra.mxu0 0.0
    %1732 = vmatprep.subr.mxu0 0.0
    %1733 = vmatpush1.msra.mxu0 0.0
    %1734 = vmatprep.subr.mxu0 0.0
    %1735 = vmatpush1.msra.mxu0 0.0
    %1736 = vmatprep.subr.mxu0 0.0
    %1737 = vmatpush1.msra.mxu0 0.0
    %1738 = vmatprep.subr.mxu0 0.0
    %1739 = vmatpush1.msra.mxu0 0.0
    %1740 = vmatprep.subr.mxu0 0.0
    %1741 = vmatpush1.msra.mxu0 0.0
    %1742 = vmatprep.subr.mxu0 0.0
    %1743 = vmatpush1.msra.mxu0 0.0
    %1744 = vmatprep.mubr.f32.mxu0 0.0
    %1745 = vmatmul.mubr.f32.gmra.mrb[0].mxu0 %v1675
    %v1746 = vpop.f32.mrb[0].mxu0
    %v1747 = vadd.f32 0.0, %v1746
    %v1748 = vpop.f32.mrb[0].mxu0
    %1749 = vmatprep.mubr.f32.mxu0 0.0
    %1750 = vmatmul.mubr.f32.gmra.mrb[0].mxu0 %v1678
    %v1751 = vpop.f32.mrb[0].mxu0
    %v1752 = vadd.f32 0.0, %v1751
    %v1753 = vpop.f32.mrb[0].mxu0
    %1754 = vdwg.mxu0
    %1757 = vrot.lane.b32.xlu0 %v1747, 40
    %v1758 = vpop.permute.xlu0 %1757
    %1759 = vrot.lane.b32.xlu0 %v1752, 40
    %v1760 = vpop.permute.xlu0 %1759
    %vm1763 = vcmask 359744
    %1764 = vst.msk [vmem:[#allocation2] sm:$0xff] %vm1763, %v1758
    %1765 = vst.msk [vmem:[#allocation2 + $0x8] sm:$0xff] %vm1763, %v1760
    %1766 = vset.pattern.permute.xlu0 75
    %1767 = vperm.xlu0 %1766, %v167
    %v1768 = vpop.permute.xlu0 %1767
    %1770 = vset.pattern.permute.xlu0 75
    %1771 = vperm.xlu0 %1770, %v173
    %v1772 = vpop.permute.xlu0 %1771
    %v1774 = vlaneseq
    %v1775 = vshrl.u32 %v1774, 7
    %v1776 = vsub.s32 3, %v1775
    %v1777 = vrot.slane %v202, %v1776
    %v1778 = vadd.f32 %v1768, %v1777
    %v1779 = vadd.f32 %v1772, %v1777
    %v1780 = vmul.f32 %v1778, 0.2
    %v1781 = vmul.f32 %v1779, 0.2
    %v1782 = vmax.f32 %v1778, %v1780
    %v1783 = vmax.f32 %v1779, %v1781
    %v1784 = vadd.f32 %v1782, %v56
    %v1785 = vadd.f32 %v1783, %v57
    %v1786 = vsel %vm237, %v1784, -inf
    %1787 = vmax.xlane.f32.xlu0 %v1786
    %v1788 = vpop.xlane.xlu0 %1787
    %v1789 = vsel %vm237, %v1785, -inf
    %1790 = vmax.xlane.f32.xlu0 %v1789
    %v1791 = vpop.xlane.xlu0 %1790
    %v1792 = vsub.f32 %v1784, %v1788
    %v1793 = vsub.f32 %v1785, %v1791
    %v1794 = vmul.f32 %v1792, 1.442695
    %v1795 = vpow.pop %v1794
    %v1796 = vmul.f32 %v1793, 1.442695
    %v1797 = vpow.pop %v1796
    %v1798 = vsel %vm237, %v1795, 0.0
    %1799 = vadd.xlane.f32.xlu0 %v1798
    %v1800 = vpop.xlane.xlu0 %1799
    %v1801 = vsel %vm237, %v1797, 0.0
    %1802 = vadd.xlane.f32.xlu0 %v1801
    %v1803 = vpop.xlane.xlu0 %1802
    %v1804 = vrcp.pop %v1800
    %v1805 = vrcp.pop %v1803
    %v1806 = vmul.f32 %v1795, %v1804
    %v1807 = vmul.f32 %v1797, %v1805
    %v1808 = vadd.f32 %v1666, %v1806
    %v1809 = vadd.f32 %v1667, %v1807
    %1810 = vrot.lane.b32.xlu0 %v167, 84
    %v1811 = vpop.permute.xlu0 %1810
    %1812 = vrot.lane.b32.xlu0 %v173, 84
    %v1813 = vpop.permute.xlu0 %1812
    %v1817 = vsel %vm237, %v1806, 0
    %v1820 = vsel %vm237, %v1807, 0
    %1822 = vmatprep.subr.mxu0 0.0
    %1823 = vmatpush1.msra.mxu0 %v1811
    %1824 = vmatprep.subr.mxu0 0.0
    %1825 = vmatpush1.msra.mxu0 %v1813
    %1826 = vmatprep.subr.mxu0 0.0
    %1827 = vmatpush1.msra.mxu0 0.0
    %1828 = vmatprep.subr.mxu0 0.0
    %1829 = vmatpush1.msra.mxu0 0.0
    %1830 = vmatprep.subr.mxu0 0.0
    %1831 = vmatpush1.msra.mxu0 0.0
    %1832 = vmatprep.subr.mxu0 0.0
    %1833 = vmatpush1.msra.mxu0 0.0
    %1834 = vmatprep.subr.mxu0 0.0
    %1835 = vmatpush1.msra.mxu0 0.0
    %1836 = vmatprep.subr.mxu0 0.0
    %1837 = vmatpush1.msra.mxu0 0.0
    %1838 = vmatprep.subr.mxu0 0.0
    %1839 = vmatpush1.msra.mxu0 0.0
    %1840 = vmatprep.subr.mxu0 0.0
    %1841 = vmatpush1.msra.mxu0 0.0
    %1842 = vmatprep.subr.mxu0 0.0
    %1843 = vmatpush1.msra.mxu0 0.0
    %1844 = vmatprep.subr.mxu0 0.0
    %1845 = vmatpush1.msra.mxu0 0.0
    %1846 = vmatprep.subr.mxu0 0.0
    %1847 = vmatpush1.msra.mxu0 0.0
    %1848 = vmatprep.subr.mxu0 0.0
    %1849 = vmatpush1.msra.mxu0 0.0
    %1850 = vmatprep.subr.mxu0 0.0
    %1851 = vmatpush1.msra.mxu0 0.0
    %1852 = vmatprep.subr.mxu0 0.0
    %1853 = vmatpush1.msra.mxu0 0.0
    %1854 = vmatprep.subr.mxu0 0.0
    %1855 = vmatpush1.msra.mxu0 0.0
    %1856 = vmatprep.subr.mxu0 0.0
    %1857 = vmatpush1.msra.mxu0 0.0
    %1858 = vmatprep.subr.mxu0 0.0
    %1859 = vmatpush1.msra.mxu0 0.0
    %1860 = vmatprep.subr.mxu0 0.0
    %1861 = vmatpush1.msra.mxu0 0.0
    %1862 = vmatprep.subr.mxu0 0.0
    %1863 = vmatpush1.msra.mxu0 0.0
    %1864 = vmatprep.subr.mxu0 0.0
    %1865 = vmatpush1.msra.mxu0 0.0
    %1866 = vmatprep.subr.mxu0 0.0
    %1867 = vmatpush1.msra.mxu0 0.0
    %1868 = vmatprep.subr.mxu0 0.0
    %1869 = vmatpush1.msra.mxu0 0.0
    %1870 = vmatprep.subr.mxu0 0.0
    %1871 = vmatpush1.msra.mxu0 0.0
    %1872 = vmatprep.subr.mxu0 0.0
    %1873 = vmatpush1.msra.mxu0 0.0
    %1874 = vmatprep.subr.mxu0 0.0
    %1875 = vmatpush1.msra.mxu0 0.0
    %1876 = vmatprep.subr.mxu0 0.0
    %1877 = vmatpush1.msra.mxu0 0.0
    %1878 = vmatprep.subr.mxu0 0.0
    %1879 = vmatpush1.msra.mxu0 0.0
    %1880 = vmatprep.subr.mxu0 0.0
    %1881 = vmatpush1.msra.mxu0 0.0
    %1882 = vmatprep.subr.mxu0 0.0
    %1883 = vmatpush1.msra.mxu0 0.0
    %1884 = vmatprep.subr.mxu0 0.0
    %1885 = vmatpush1.msra.mxu0 0.0
    %1886 = vmatprep.mubr.f32.mxu0 0.0
    %1887 = vmatmul.mubr.f32.gmra.mrb[0].mxu0 %v1817
    %v1888 = vpop.f32.mrb[0].mxu0
    %v1889 = vadd.f32 0.0, %v1888
    %v1890 = vpop.f32.mrb[0].mxu0
    %1891 = vmatprep.mubr.f32.mxu0 0.0
    %1892 = vmatmul.mubr.f32.gmra.mrb[0].mxu0 %v1820
    %v1893 = vpop.f32.mrb[0].mxu0
    %v1894 = vadd.f32 0.0, %v1893
    %v1895 = vpop.f32.mrb[0].mxu0
    %1896 = vdwg.mxu0
    %1899 = vrot.lane.b32.xlu0 %v1889, 44
    %v1900 = vpop.permute.xlu0 %1899
    %1901 = vrot.lane.b32.xlu0 %v1894, 44
    %v1902 = vpop.permute.xlu0 %1901
    %vm1905 = vcmask 392544
    %1906 = vst.msk [vmem:[#allocation2] sm:$0xff] %vm1905, %v1900
    %1907 = vst.msk [vmem:[#allocation2 + $0x8] sm:$0xff] %vm1905, %v1902
    %1908 = vset.pattern.permute.xlu0 76
    %1909 = vperm.xlu0 %1908, %v167
    %v1910 = vpop.permute.xlu0 %1909
    %1912 = vset.pattern.permute.xlu0 76
    %1913 = vperm.xlu0 %1912, %v173
    %v1914 = vpop.permute.xlu0 %1913
    %v1916 = vlaneseq
    %v1917 = vshrl.u32 %v1916, 7
    %v1918 = vsub.s32 4, %v1917
    %v1919 = vrot.slane %v202, %v1918
    %v1920 = vadd.f32 %v1910, %v1919
    %v1921 = vadd.f32 %v1914, %v1919
    %v1922 = vmul.f32 %v1920, 0.2
    %v1923 = vmul.f32 %v1921, 0.2
    %v1924 = vmax.f32 %v1920, %v1922
    %v1925 = vmax.f32 %v1921, %v1923
    %v1926 = vadd.f32 %v1924, %v56
    %v1927 = vadd.f32 %v1925, %v57
    %v1928 = vsel %vm237, %v1926, -inf
    %1929 = vmax.xlane.f32.xlu0 %v1928
    %v1930 = vpop.xlane.xlu0 %1929
    %v1931 = vsel %vm237, %v1927, -inf
    %1932 = vmax.xlane.f32.xlu0 %v1931
    %v1933 = vpop.xlane.xlu0 %1932
    %v1934 = vsub.f32 %v1926, %v1930
    %v1935 = vsub.f32 %v1927, %v1933
    %v1936 = vmul.f32 %v1934, 1.442695
    %v1937 = vpow.pop %v1936
    %v1938 = vmul.f32 %v1935, 1.442695
    %v1939 = vpow.pop %v1938
    %v1940 = vsel %vm237, %v1937, 0.0
    %1941 = vadd.xlane.f32.xlu0 %v1940
    %v1942 = vpop.xlane.xlu0 %1941
    %v1943 = vsel %vm237, %v1939, 0.0
    %1944 = vadd.xlane.f32.xlu0 %v1943
    %v1945 = vpop.xlane.xlu0 %1944
    %v1946 = vrcp.pop %v1942
    %v1947 = vrcp.pop %v1945
    %v1948 = vmul.f32 %v1937, %v1946
    %v1949 = vmul.f32 %v1939, %v1947
    %v1950 = vadd.f32 %v1808, %v1948
    %v1951 = vadd.f32 %v1809, %v1949
    %1952 = vrot.lane.b32.xlu0 %v167, 80
    %v1953 = vpop.permute.xlu0 %1952
    %1954 = vrot.lane.b32.xlu0 %v173, 80
    %v1955 = vpop.permute.xlu0 %1954
    %v1959 = vsel %vm237, %v1948, 0
    %v1962 = vsel %vm237, %v1949, 0
    %1964 = vmatprep.subr.mxu0 0.0
    %1965 = vmatpush1.msra.mxu0 %v1953
    %1966 = vmatprep.subr.mxu0 0.0
    %1967 = vmatpush1.msra.mxu0 %v1955
    %1968 = vmatprep.subr.mxu0 0.0
    %1969 = vmatpush1.msra.mxu0 0.0
    %1970 = vmatprep.subr.mxu0 0.0
    %1971 = vmatpush1.msra.mxu0 0.0
    %1972 = vmatprep.subr.mxu0 0.0
    %1973 = vmatpush1.msra.mxu0 0.0
    %1974 = vmatprep.subr.mxu0 0.0
    %1975 = vmatpush1.msra.mxu0 0.0
    %1976 = vmatprep.subr.mxu0 0.0
    %1977 = vmatpush1.msra.mxu0 0.0
    %1978 = vmatprep.subr.mxu0 0.0
    %1979 = vmatpush1.msra.mxu0 0.0
    %1980 = vmatprep.subr.mxu0 0.0
    %1981 = vmatpush1.msra.mxu0 0.0
    %1982 = vmatprep.subr.mxu0 0.0
    %1983 = vmatpush1.msra.mxu0 0.0
    %1984 = vmatprep.subr.mxu0 0.0
    %1985 = vmatpush1.msra.mxu0 0.0
    %1986 = vmatprep.subr.mxu0 0.0
    %1987 = vmatpush1.msra.mxu0 0.0
    %1988 = vmatprep.subr.mxu0 0.0
    %1989 = vmatpush1.msra.mxu0 0.0
    %1990 = vmatprep.subr.mxu0 0.0
    %1991 = vmatpush1.msra.mxu0 0.0
    %1992 = vmatprep.subr.mxu0 0.0
    %1993 = vmatpush1.msra.mxu0 0.0
    %1994 = vmatprep.subr.mxu0 0.0
    %1995 = vmatpush1.msra.mxu0 0.0
    %1996 = vmatprep.subr.mxu0 0.0
    %1997 = vmatpush1.msra.mxu0 0.0
    %1998 = vmatprep.subr.mxu0 0.0
    %1999 = vmatpush1.msra.mxu0 0.0
    %2000 = vmatprep.subr.mxu0 0.0
    %2001 = vmatpush1.msra.mxu0 0.0
    %2002 = vmatprep.subr.mxu0 0.0
    %2003 = vmatpush1.msra.mxu0 0.0
    %2004 = vmatprep.subr.mxu0 0.0
    %2005 = vmatpush1.msra.mxu0 0.0
    %2006 = vmatprep.subr.mxu0 0.0
    %2007 = vmatpush1.msra.mxu0 0.0
    %2008 = vmatprep.subr.mxu0 0.0
    %2009 = vmatpush1.msra.mxu0 0.0
    %2010 = vmatprep.subr.mxu0 0.0
    %2011 = vmatpush1.msra.mxu0 0.0
    %2012 = vmatprep.subr.mxu0 0.0
    %2013 = vmatpush1.msra.mxu0 0.0
    %2014 = vmatprep.subr.mxu0 0.0
    %2015 = vmatpush1.msra.mxu0 0.0
    %2016 = vmatprep.subr.mxu0 0.0
    %2017 = vmatpush1.msra.mxu0 0.0
    %2018 = vmatprep.subr.mxu0 0.0
    %2019 = vmatpush1.msra.mxu0 0.0
    %2020 = vmatprep.subr.mxu0 0.0
    %2021 = vmatpush1.msra.mxu0 0.0
    %2022 = vmatprep.subr.mxu0 0.0
    %2023 = vmatpush1.msra.mxu0 0.0
    %2024 = vmatprep.subr.mxu0 0.0
    %2025 = vmatpush1.msra.mxu0 0.0
    %2026 = vmatprep.subr.mxu0 0.0
    %2027 = vmatpush1.msra.mxu0 0.0
    %2028 = vmatprep.mubr.f32.mxu0 0.0
    %2029 = vmatmul.mubr.f32.gmra.mrb[0].mxu0 %v1959
    %v2030 = vpop.f32.mrb[0].mxu0
    %v2031 = vadd.f32 0.0, %v2030
    %v2032 = vpop.f32.mrb[0].mxu0
    %2033 = vmatprep.mubr.f32.mxu0 0.0
    %2034 = vmatmul.mubr.f32.gmra.mrb[0].mxu0 %v1962
    %v2035 = vpop.f32.mrb[0].mxu0
    %v2036 = vadd.f32 0.0, %v2035
    %v2037 = vpop.f32.mrb[0].mxu0
    %2038 = vdwg.mxu0
    %2041 = vrot.lane.b32.xlu0 %v2031, 48
    %v2042 = vpop.permute.xlu0 %2041
    %2043 = vrot.lane.b32.xlu0 %v2036, 48
    %v2044 = vpop.permute.xlu0 %2043
    %vm2047 = vcmask 425344
    %2048 = vst.msk [vmem:[#allocation2] sm:$0xff] %vm2047, %v2042
    %2049 = vst.msk [vmem:[#allocation2 + $0x8] sm:$0xff] %vm2047, %v2044
    %2050 = vset.pattern.permute.xlu0 77
    %2051 = vperm.xlu0 %2050, %v167
    %v2052 = vpop.permute.xlu0 %2051
    %2054 = vset.pattern.permute.xlu0 77
    %2055 = vperm.xlu0 %2054, %v173
    %v2056 = vpop.permute.xlu0 %2055
    %v2058 = vlaneseq
    %v2059 = vshrl.u32 %v2058, 7
    %v2060 = vsub.s32 5, %v2059
    %v2061 = vrot.slane %v202, %v2060
    %v2062 = vadd.f32 %v2052, %v2061
    %v2063 = vadd.f32 %v2056, %v2061
    %v2064 = vmul.f32 %v2062, 0.2
    %v2065 = vmul.f32 %v2063, 0.2
    %v2066 = vmax.f32 %v2062, %v2064
    %v2067 = vmax.f32 %v2063, %v2065
    %v2068 = vadd.f32 %v2066, %v56
    %v2069 = vadd.f32 %v2067, %v57
    %v2070 = vsel %vm237, %v2068, -inf
    %2071 = vmax.xlane.f32.xlu0 %v2070
    %v2072 = vpop.xlane.xlu0 %2071
    %v2073 = vsel %vm237, %v2069, -inf
    %2074 = vmax.xlane.f32.xlu0 %v2073
    %v2075 = vpop.xlane.xlu0 %2074
    %v2076 = vsub.f32 %v2068, %v2072
    %v2077 = vsub.f32 %v2069, %v2075
    %v2078 = vmul.f32 %v2076, 1.442695
    %v2079 = vpow.pop %v2078
    %v2080 = vmul.f32 %v2077, 1.442695
    %v2081 = vpow.pop %v2080
    %v2082 = vsel %vm237, %v2079, 0.0
    %2083 = vadd.xlane.f32.xlu0 %v2082
    %v2084 = vpop.xlane.xlu0 %2083
    %v2085 = vsel %vm237, %v2081, 0.0
    %2086 = vadd.xlane.f32.xlu0 %v2085
    %v2087 = vpop.xlane.xlu0 %2086
    %v2088 = vrcp.pop %v2084
    %v2089 = vrcp.pop %v2087
    %v2090 = vmul.f32 %v2079, %v2088
    %v2091 = vmul.f32 %v2081, %v2089
    %v2092 = vadd.f32 %v1950, %v2090
    %v2093 = vadd.f32 %v1951, %v2091
    %2094 = vrot.lane.b32.xlu0 %v167, 76
    %v2095 = vpop.permute.xlu0 %2094
    %2096 = vrot.lane.b32.xlu0 %v173, 76
    %v2097 = vpop.permute.xlu0 %2096
    %v2101 = vsel %vm237, %v2090, 0
    %v2104 = vsel %vm237, %v2091, 0
    %2106 = vmatprep.subr.mxu0 0.0
    %2107 = vmatpush1.msra.mxu0 %v2095
    %2108 = vmatprep.subr.mxu0 0.0
    %2109 = vmatpush1.msra.mxu0 %v2097
    %2110 = vmatprep.subr.mxu0 0.0
    %2111 = vmatpush1.msra.mxu0 0.0
    %2112 = vmatprep.subr.mxu0 0.0
    %2113 = vmatpush1.msra.mxu0 0.0
    %2114 = vmatprep.subr.mxu0 0.0
    %2115 = vmatpush1.msra.mxu0 0.0
    %2116 = vmatprep.subr.mxu0 0.0
    %2117 = vmatpush1.msra.mxu0 0.0
    %2118 = vmatprep.subr.mxu0 0.0
    %2119 = vmatpush1.msra.mxu0 0.0
    %2120 = vmatprep.subr.mxu0 0.0
    %2121 = vmatpush1.msra.mxu0 0.0
    %2122 = vmatprep.subr.mxu0 0.0
    %2123 = vmatpush1.msra.mxu0 0.0
    %2124 = vmatprep.subr.mxu0 0.0
    %2125 = vmatpush1.msra.mxu0 0.0
    %2126 = vmatprep.subr.mxu0 0.0
    %2127 = vmatpush1.msra.mxu0 0.0
    %2128 = vmatprep.subr.mxu0 0.0
    %2129 = vmatpush1.msra.mxu0 0.0
    %2130 = vmatprep.subr.mxu0 0.0
    %2131 = vmatpush1.msra.mxu0 0.0
    %2132 = vmatprep.subr.mxu0 0.0
    %2133 = vmatpush1.msra.mxu0 0.0
    %2134 = vmatprep.subr.mxu0 0.0
    %2135 = vmatpush1.msra.mxu0 0.0
    %2136 = vmatprep.subr.mxu0 0.0
    %2137 = vmatpush1.msra.mxu0 0.0
    %2138 = vmatprep.subr.mxu0 0.0
    %2139 = vmatpush1.msra.mxu0 0.0
    %2140 = vmatprep.subr.mxu0 0.0
    %2141 = vmatpush1.msra.mxu0 0.0
    %2142 = vmatprep.subr.mxu0 0.0
    %2143 = vmatpush1.msra.mxu0 0.0
    %2144 = vmatprep.subr.mxu0 0.0
    %2145 = vmatpush1.msra.mxu0 0.0
    %2146 = vmatprep.subr.mxu0 0.0
    %2147 = vmatpush1.msra.mxu0 0.0
    %2148 = vmatprep.subr.mxu0 0.0
    %2149 = vmatpush1.msra.mxu0 0.0
    %2150 = vmatprep.subr.mxu0 0.0
    %2151 = vmatpush1.msra.mxu0 0.0
    %2152 = vmatprep.subr.mxu0 0.0
    %2153 = vmatpush1.msra.mxu0 0.0
    %2154 = vmatprep.subr.mxu0 0.0
    %2155 = vmatpush1.msra.mxu0 0.0
    %2156 = vmatprep.subr.mxu0 0.0
    %2157 = vmatpush1.msra.mxu0 0.0
    %2158 = vmatprep.subr.mxu0 0.0
    %2159 = vmatpush1.msra.mxu0 0.0
    %2160 = vmatprep.subr.mxu0 0.0
    %2161 = vmatpush1.msra.mxu0 0.0
    %2162 = vmatprep.subr.mxu0 0.0
    %2163 = vmatpush1.msra.mxu0 0.0
    %2164 = vmatprep.subr.mxu0 0.0
    %2165 = vmatpush1.msra.mxu0 0.0
    %2166 = vmatprep.subr.mxu0 0.0
    %2167 = vmatpush1.msra.mxu0 0.0
    %2168 = vmatprep.subr.mxu0 0.0
    %2169 = vmatpush1.msra.mxu0 0.0
    %2170 = vmatprep.mubr.f32.mxu0 0.0
    %2171 = vmatmul.mubr.f32.gmra.mrb[0].mxu0 %v2101
    %v2172 = vpop.f32.mrb[0].mxu0
    %v2173 = vadd.f32 0.0, %v2172
    %v2174 = vpop.f32.mrb[0].mxu0
    %2175 = vmatprep.mubr.f32.mxu0 0.0
    %2176 = vmatmul.mubr.f32.gmra.mrb[0].mxu0 %v2104
    %v2177 = vpop.f32.mrb[0].mxu0
    %v2178 = vadd.f32 0.0, %v2177
    %v2179 = vpop.f32.mrb[0].mxu0
    %2180 = vdwg.mxu0
    %2183 = vrot.lane.b32.xlu0 %v2173, 52
    %v2184 = vpop.permute.xlu0 %2183
    %2185 = vrot.lane.b32.xlu0 %v2178, 52
    %v2186 = vpop.permute.xlu0 %2185
    %vm2189 = vcmask 458144
    %2190 = vst.msk [vmem:[#allocation2] sm:$0xff] %vm2189, %v2184
    %2191 = vst.msk [vmem:[#allocation2 + $0x8] sm:$0xff] %vm2189, %v2186
    %2192 = vset.pattern.permute.xlu0 78
    %2193 = vperm.xlu0 %2192, %v167
    %v2194 = vpop.permute.xlu0 %2193
    %2196 = vset.pattern.permute.xlu0 78
    %2197 = vperm.xlu0 %2196, %v173
    %v2198 = vpop.permute.xlu0 %2197
    %v2200 = vlaneseq
    %v2201 = vshrl.u32 %v2200, 7
    %v2202 = vsub.s32 6, %v2201
    %v2203 = vrot.slane %v202, %v2202
    %v2204 = vadd.f32 %v2194, %v2203
    %v2205 = vadd.f32 %v2198, %v2203
    %v2206 = vmul.f32 %v2204, 0.2
    %v2207 = vmul.f32 %v2205, 0.2
    %v2208 = vmax.f32 %v2204, %v2206
    %v2209 = vmax.f32 %v2205, %v2207
    %v2210 = vadd.f32 %v2208, %v56
    %v2211 = vadd.f32 %v2209, %v57
    %v2212 = vsel %vm237, %v2210, -inf
    %2213 = vmax.xlane.f32.xlu0 %v2212
    %v2214 = vpop.xlane.xlu0 %2213
    %v2215 = vsel %vm237, %v2211, -inf
    %2216 = vmax.xlane.f32.xlu0 %v2215
    %v2217 = vpop.xlane.xlu0 %2216
    %v2218 = vsub.f32 %v2210, %v2214
    %v2219 = vsub.f32 %v2211, %v2217
    %v2220 = vmul.f32 %v2218, 1.442695
    %v2221 = vpow.pop %v2220
    %v2222 = vmul.f32 %v2219, 1.442695
    %v2223 = vpow.pop %v2222
    %v2224 = vsel %vm237, %v2221, 0.0
    %2225 = vadd.xlane.f32.xlu0 %v2224
    %v2226 = vpop.xlane.xlu0 %2225
    %v2227 = vsel %vm237, %v2223, 0.0
    %2228 = vadd.xlane.f32.xlu0 %v2227
    %v2229 = vpop.xlane.xlu0 %2228
    %v2230 = vrcp.pop %v2226
    %v2231 = vrcp.pop %v2229
    %v2232 = vmul.f32 %v2221, %v2230
    %v2233 = vmul.f32 %v2223, %v2231
    %v2234 = vadd.f32 %v2092, %v2232
    %v2235 = vadd.f32 %v2093, %v2233
    %2236 = vrot.lane.b32.xlu0 %v167, 72
    %v2237 = vpop.permute.xlu0 %2236
    %2238 = vrot.lane.b32.xlu0 %v173, 72
    %v2239 = vpop.permute.xlu0 %2238
    %v2243 = vsel %vm237, %v2232, 0
    %v2246 = vsel %vm237, %v2233, 0
    %2248 = vmatprep.subr.mxu0 0.0
    %2249 = vmatpush1.msra.mxu0 %v2237
    %2250 = vmatprep.subr.mxu0 0.0
    %2251 = vmatpush1.msra.mxu0 %v2239
    %2252 = vmatprep.subr.mxu0 0.0
    %2253 = vmatpush1.msra.mxu0 0.0
    %2254 = vmatprep.subr.mxu0 0.0
    %2255 = vmatpush1.msra.mxu0 0.0
    %2256 = vmatprep.subr.mxu0 0.0
    %2257 = vmatpush1.msra.mxu0 0.0
    %2258 = vmatprep.subr.mxu0 0.0
    %2259 = vmatpush1.msra.mxu0 0.0
    %2260 = vmatprep.subr.mxu0 0.0
    %2261 = vmatpush1.msra.mxu0 0.0
    %2262 = vmatprep.subr.mxu0 0.0
    %2263 = vmatpush1.msra.mxu0 0.0
    %2264 = vmatprep.subr.mxu0 0.0
    %2265 = vmatpush1.msra.mxu0 0.0
    %2266 = vmatprep.subr.mxu0 0.0
    %2267 = vmatpush1.msra.mxu0 0.0
    %2268 = vmatprep.subr.mxu0 0.0
    %2269 = vmatpush1.msra.mxu0 0.0
    %2270 = vmatprep.subr.mxu0 0.0
    %2271 = vmatpush1.msra.mxu0 0.0
    %2272 = vmatprep.subr.mxu0 0.0
    %2273 = vmatpush1.msra.mxu0 0.0
    %2274 = vmatprep.subr.mxu0 0.0
    %2275 = vmatpush1.msra.mxu0 0.0
    %2276 = vmatprep.subr.mxu0 0.0
    %2277 = vmatpush1.msra.mxu0 0.0
    %2278 = vmatprep.subr.mxu0 0.0
    %2279 = vmatpush1.msra.mxu0 0.0
    %2280 = vmatprep.subr.mxu0 0.0
    %2281 = vmatpush1.msra.mxu0 0.0
    %2282 = vmatprep.subr.mxu0 0.0
    %2283 = vmatpush1.msra.mxu0 0.0
    %2284 = vmatprep.subr.mxu0 0.0
    %2285 = vmatpush1.msra.mxu0 0.0
    %2286 = vmatprep.subr.mxu0 0.0
    %2287 = vmatpush1.msra.mxu0 0.0
    %2288 = vmatprep.subr.mxu0 0.0
    %2289 = vmatpush1.msra.mxu0 0.0
    %2290 = vmatprep.subr.mxu0 0.0
    %2291 = vmatpush1.msra.mxu0 0.0
    %2292 = vmatprep.subr.mxu0 0.0
    %2293 = vmatpush1.msra.mxu0 0.0
    %2294 = vmatprep.subr.mxu0 0.0
    %2295 = vmatpush1.msra.mxu0 0.0
    %2296 = vmatprep.subr.mxu0 0.0
    %2297 = vmatpush1.msra.mxu0 0.0
    %2298 = vmatprep.subr.mxu0 0.0
    %2299 = vmatpush1.msra.mxu0 0.0
    %2300 = vmatprep.subr.mxu0 0.0
    %2301 = vmatpush1.msra.mxu0 0.0
    %2302 = vmatprep.subr.mxu0 0.0
    %2303 = vmatpush1.msra.mxu0 0.0
    %2304 = vmatprep.subr.mxu0 0.0
    %2305 = vmatpush1.msra.mxu0 0.0
    %2306 = vmatprep.subr.mxu0 0.0
    %2307 = vmatpush1.msra.mxu0 0.0
    %2308 = vmatprep.subr.mxu0 0.0
    %2309 = vmatpush1.msra.mxu0 0.0
    %2310 = vmatprep.subr.mxu0 0.0
    %2311 = vmatpush1.msra.mxu0 0.0
    %2312 = vmatprep.mubr.f32.mxu0 0.0
    %2313 = vmatmul.mubr.f32.gmra.mrb[0].mxu0 %v2243
    %v2314 = vpop.f32.mrb[0].mxu0
    %v2315 = vadd.f32 0.0, %v2314
    %v2316 = vpop.f32.mrb[0].mxu0
    %2317 = vmatprep.mubr.f32.mxu0 0.0
    %2318 = vmatmul.mubr.f32.gmra.mrb[0].mxu0 %v2246
    %v2319 = vpop.f32.mrb[0].mxu0
    %v2320 = vadd.f32 0.0, %v2319
    %v2321 = vpop.f32.mrb[0].mxu0
    %2322 = vdwg.mxu0
    %2325 = vrot.lane.b32.xlu0 %v2315, 56
    %v2326 = vpop.permute.xlu0 %2325
    %2327 = vrot.lane.b32.xlu0 %v2320, 56
    %v2328 = vpop.permute.xlu0 %2327
    %vm2331 = vcmask 490944
    %2332 = vst.msk [vmem:[#allocation2] sm:$0xff] %vm2331, %v2326
    %2333 = vst.msk [vmem:[#allocation2 + $0x8] sm:$0xff] %vm2331, %v2328
    %2334 = vset.pattern.permute.xlu0 79
    %2335 = vperm.xlu0 %2334, %v167
    %v2336 = vpop.permute.xlu0 %2335
    %2338 = vset.pattern.permute.xlu0 79
    %2339 = vperm.xlu0 %2338, %v173
    %v2340 = vpop.permute.xlu0 %2339
    %v2342 = vlaneseq
    %v2343 = vshrl.u32 %v2342, 7
    %v2344 = vsub.s32 7, %v2343
    %v2345 = vrot.slane %v202, %v2344
    %v2346 = vadd.f32 %v2336, %v2345
    %v2347 = vadd.f32 %v2340, %v2345
    %v2348 = vmul.f32 %v2346, 0.2
    %v2349 = vmul.f32 %v2347, 0.2
    %v2350 = vmax.f32 %v2346, %v2348
    %v2351 = vmax.f32 %v2347, %v2349
    %v2352 = vadd.f32 %v2350, %v56
    %v2353 = vadd.f32 %v2351, %v57
    %v2354 = vsel %vm237, %v2352, -inf
    %2355 = vmax.xlane.f32.xlu0 %v2354
    %v2356 = vpop.xlane.xlu0 %2355
    %v2357 = vsel %vm237, %v2353, -inf
    %2358 = vmax.xlane.f32.xlu0 %v2357
    %v2359 = vpop.xlane.xlu0 %2358
    %v2360 = vsub.f32 %v2352, %v2356
    %v2361 = vsub.f32 %v2353, %v2359
    %v2362 = vmul.f32 %v2360, 1.442695
    %v2363 = vpow.pop %v2362
    %v2364 = vmul.f32 %v2361, 1.442695
    %v2365 = vpow.pop %v2364
    %v2366 = vsel %vm237, %v2363, 0.0
    %2367 = vadd.xlane.f32.xlu0 %v2366
    %v2368 = vpop.xlane.xlu0 %2367
    %v2369 = vsel %vm237, %v2365, 0.0
    %2370 = vadd.xlane.f32.xlu0 %v2369
    %v2371 = vpop.xlane.xlu0 %2370
    %v2372 = vrcp.pop %v2368
    %v2373 = vrcp.pop %v2371
    %v2374 = vmul.f32 %v2363, %v2372
    %v2375 = vmul.f32 %v2365, %v2373
    %v2376 = vadd.f32 %v2234, %v2374
    %v2377 = vadd.f32 %v2235, %v2375
    %2378 = vrot.lane.b32.xlu0 %v167, 68
    %v2379 = vpop.permute.xlu0 %2378
    %2380 = vrot.lane.b32.xlu0 %v173, 68
    %v2381 = vpop.permute.xlu0 %2380
    %v2385 = vsel %vm237, %v2374, 0
    %v2388 = vsel %vm237, %v2375, 0
    %2390 = vmatprep.subr.mxu0 0.0
    %2391 = vmatpush1.msra.mxu0 %v2379
    %2392 = vmatprep.subr.mxu0 0.0
    %2393 = vmatpush1.msra.mxu0 %v2381
    %2394 = vmatprep.subr.mxu0 0.0
    %2395 = vmatpush1.msra.mxu0 0.0
    %2396 = vmatprep.subr.mxu0 0.0
    %2397 = vmatpush1.msra.mxu0 0.0
    %2398 = vmatprep.subr.mxu0 0.0
    %2399 = vmatpush1.msra.mxu0 0.0
    %2400 = vmatprep.subr.mxu0 0.0
    %2401 = vmatpush1.msra.mxu0 0.0
    %2402 = vmatprep.subr.mxu0 0.0
    %2403 = vmatpush1.msra.mxu0 0.0
    %2404 = vmatprep.subr.mxu0 0.0
    %2405 = vmatpush1.msra.mxu0 0.0
    %2406 = vmatprep.subr.mxu0 0.0
    %2407 = vmatpush1.msra.mxu0 0.0
    %2408 = vmatprep.subr.mxu0 0.0
    %2409 = vmatpush1.msra.mxu0 0.0
    %2410 = vmatprep.subr.mxu0 0.0
    %2411 = vmatpush1.msra.mxu0 0.0
    %2412 = vmatprep.subr.mxu0 0.0
    %2413 = vmatpush1.msra.mxu0 0.0
    %2414 = vmatprep.subr.mxu0 0.0
    %2415 = vmatpush1.msra.mxu0 0.0
    %2416 = vmatprep.subr.mxu0 0.0
    %2417 = vmatpush1.msra.mxu0 0.0
    %2418 = vmatprep.subr.mxu0 0.0
    %2419 = vmatpush1.msra.mxu0 0.0
    %2420 = vmatprep.subr.mxu0 0.0
    %2421 = vmatpush1.msra.mxu0 0.0
    %2422 = vmatprep.subr.mxu0 0.0
    %2423 = vmatpush1.msra.mxu0 0.0
    %2424 = vmatprep.subr.mxu0 0.0
    %2425 = vmatpush1.msra.mxu0 0.0
    %2426 = vmatprep.subr.mxu0 0.0
    %2427 = vmatpush1.msra.mxu0 0.0
    %2428 = vmatprep.subr.mxu0 0.0
    %2429 = vmatpush1.msra.mxu0 0.0
    %2430 = vmatprep.subr.mxu0 0.0
    %2431 = vmatpush1.msra.mxu0 0.0
    %2432 = vmatprep.subr.mxu0 0.0
    %2433 = vmatpush1.msra.mxu0 0.0
    %2434 = vmatprep.subr.mxu0 0.0
    %2435 = vmatpush1.msra.mxu0 0.0
    %2436 = vmatprep.subr.mxu0 0.0
    %2437 = vmatpush1.msra.mxu0 0.0
    %2438 = vmatprep.subr.mxu0 0.0
    %2439 = vmatpush1.msra.mxu0 0.0
    %2440 = vmatprep.subr.mxu0 0.0
    %2441 = vmatpush1.msra.mxu0 0.0
    %2442 = vmatprep.subr.mxu0 0.0
    %2443 = vmatpush1.msra.mxu0 0.0
    %2444 = vmatprep.subr.mxu0 0.0
    %2445 = vmatpush1.msra.mxu0 0.0
    %2446 = vmatprep.subr.mxu0 0.0
    %2447 = vmatpush1.msra.mxu0 0.0
    %2448 = vmatprep.subr.mxu0 0.0
    %2449 = vmatpush1.msra.mxu0 0.0
    %2450 = vmatprep.subr.mxu0 0.0
    %2451 = vmatpush1.msra.mxu0 0.0
    %2452 = vmatprep.subr.mxu0 0.0
    %2453 = vmatpush1.msra.mxu0 0.0
    %2454 = vmatprep.mubr.f32.mxu0 0.0
    %2455 = vmatmul.mubr.f32.gmra.mrb[0].mxu0 %v2385
    %v2456 = vpop.f32.mrb[0].mxu0
    %v2457 = vadd.f32 0.0, %v2456
    %v2458 = vpop.f32.mrb[0].mxu0
    %2459 = vmatprep.mubr.f32.mxu0 0.0
    %2460 = vmatmul.mubr.f32.gmra.mrb[0].mxu0 %v2388
    %v2461 = vpop.f32.mrb[0].mxu0
    %v2462 = vadd.f32 0.0, %v2461
    %v2463 = vpop.f32.mrb[0].mxu0
    %2464 = vdwg.mxu0
    %2467 = vrot.lane.b32.xlu0 %v2457, 60
    %v2468 = vpop.permute.xlu0 %2467
    %2469 = vrot.lane.b32.xlu0 %v2462, 60
    %v2470 = vpop.permute.xlu0 %2469
    %vm2473 = vcmask 523744
    %2474 = vst.msk [vmem:[#allocation2] sm:$0xff] %vm2473, %v2468
    %2475 = vst.msk [vmem:[#allocation2 + $0x8] sm:$0xff] %vm2473, %v2470
    %v2476 = vld [vmem:[#allocation2] sm:$0xff]
    %v2477 = vld [vmem:[#allocation2 + $0x8] sm:$0xff]
    %v2478 = vld [vmem:[%s5] sm:$0x1]
    %v2480 = vlaneseq
    %v2481 = vshrl.u32 %v2480, 7
    %v2482 = vsub.s32 0, %v2481
    %v2483 = vrot.slane %v2478, %v2482
    %v2485 = vadd.f32 %v2476, %v2483
    %v2486 = vadd.f32 %v2477, %v2483
    %vm2487 = vcmp.gt.f32.partialorder %v2485, 0.0
    %vm2488 = vcmp.gt.f32.partialorder %v2486, 0.0
    %v2489 = vmin.f32 %v2485, 0.0
    %v2490 = vmin.f32 %v2486, 0.0
    %v2491 = vmul.f32 %v2489, 1.442695
    %v2492 = vpow.pop %v2491
    %v2493 = vmul.f32 %v2490, 1.442695
    %v2494 = vpow.pop %v2493
    %v2495 = vsub.f32 %v2492, 1.0
    %v2496 = vsub.f32 %v2494, 1.0
    %v2497 = vsel %vm2487, %v2485, %v2495
    %v2498 = vsel %vm2488, %v2486, %v2496
    %vm2499 = vcmask 523264
    %v2500 = vsel %vm2499, %v2497, 0.0
    %2501 = vadd.xlane.f32.xlu0 %v2500
    %v2502 = vpop.xlane.xlu0 %2501
    %v2503 = vsel %vm2499, %v2498, 0.0
    %2504 = vadd.xlane.f32.xlu0 %v2503
    %v2505 = vpop.xlane.xlu0 %2504
    %v2506 = vrcp.pop 64.0
    %v2507 = vmul.f32 %v2502, %v2506
    %v2508 = vmul.f32 %v2505, %v2506
    %v2509 = vsub.f32 %v2497, %v2507
    %v2510 = vsub.f32 %v2498, %v2508
    %v2511 = vmul.f32 %v2509, %v2509
    %v2512 = vmul.f32 %v2510, %v2510
    %v2513 = vsel %vm2499, %v2511, 0.0
    %2514 = vadd.xlane.f32.xlu0 %v2513
    %v2515 = vpop.xlane.xlu0 %2514
    %v2516 = vsel %vm2499, %v2512, 0.0
    %2517 = vadd.xlane.f32.xlu0 %v2516
    %v2518 = vpop.xlane.xlu0 %2517
    %v2519 = vmul.f32 %v2515, %v2506
    %v2520 = vmul.f32 %v2518, %v2506
    %v2521 = vadd.f32 %v2519, 1e-05
    %v2522 = vadd.f32 %v2520, 1e-05
    %v2523 = vrsqrt.pop %v2521
    %v2524 = vrsqrt.pop %v2522
    %v2525 = vmul.f32 %v2509, %v2523
    %v2526 = vmul.f32 %v2510, %v2524
    %v2527 = vld [vmem:[%s6] sm:$0x1]
    %v2529 = vlaneseq
    %v2530 = vshrl.u32 %v2529, 7
    %v2531 = vsub.s32 0, %v2530
    %v2532 = vrot.slane %v2527, %v2531
    %v2534 = vmul.f32 %v2525, %v2532
    %v2535 = vmul.f32 %v2526, %v2532
    %v2536 = vld [vmem:[%s7] sm:$0x1]
    %v2538 = vlaneseq
    %v2539 = vshrl.u32 %v2538, 7
    %v2540 = vsub.s32 0, %v2539
    %v2541 = vrot.slane %v2536, %v2540
    %v2543 = vadd.f32 %v2534, %v2541
    %v2544 = vadd.f32 %v2535, %v2541
    %2547 = vrot.lane.b32.xlu0 %v167, 32
    %v2548 = vpop.permute.xlu0 %2547
    %2549 = vrot.lane.b32.xlu0 %v169, 32
    %v2550 = vpop.permute.xlu0 %2549
    %2551 = vrot.lane.b32.xlu0 %v173, 32
    %v2552 = vpop.permute.xlu0 %2551
    %2553 = vrot.lane.b32.xlu0 %v175, 32
    %v2554 = vpop.permute.xlu0 %2553
    %vm2555 = vcmask 261120
    %v2556 = vsel %vm2555, %v2548, %v2550
    %v2557 = vsel %vm2555, %v2552, %v2554
    %v2560 = vadd.f32 %v2543, %v2556
    %v2561 = vadd.f32 %v2544, %v2557
    %v2562 = vmul.f32 %v2376, 0.0625
    %v2563 = vmul.f32 %v2377, 0.0625
    %v2565 = vsel %vm237, %v2562, 0
    %v2568 = vsel %vm237, %v2563, 0
    %2570 = vmatprep.subr.mxu0 0.0
    %2571 = vmatpush1.msra.mxu0 %v58
    %2572 = vmatprep.subr.mxu0 0.0
    %2573 = vmatpush1.msra.mxu0 %v59
    %2574 = vmatprep.subr.mxu0 0.0
    %2575 = vmatpush1.msra.mxu0 0.0
    %2576 = vmatprep.subr.mxu0 0.0
    %2577 = vmatpush1.msra.mxu0 0.0
    %2578 = vmatprep.subr.mxu0 0.0
    %2579 = vmatpush1.msra.mxu0 0.0
    %2580 = vmatprep.subr.mxu0 0.0
    %2581 = vmatpush1.msra.mxu0 0.0
    %2582 = vmatprep.subr.mxu0 0.0
    %2583 = vmatpush1.msra.mxu0 0.0
    %2584 = vmatprep.subr.mxu0 0.0
    %2585 = vmatpush1.msra.mxu0 0.0
    %2586 = vmatprep.subr.mxu0 0.0
    %2587 = vmatpush1.msra.mxu0 0.0
    %2588 = vmatprep.subr.mxu0 0.0
    %2589 = vmatpush1.msra.mxu0 0.0
    %2590 = vmatprep.subr.mxu0 0.0
    %2591 = vmatpush1.msra.mxu0 0.0
    %2592 = vmatprep.subr.mxu0 0.0
    %2593 = vmatpush1.msra.mxu0 0.0
    %2594 = vmatprep.subr.mxu0 0.0
    %2595 = vmatpush1.msra.mxu0 0.0
    %2596 = vmatprep.subr.mxu0 0.0
    %2597 = vmatpush1.msra.mxu0 0.0
    %2598 = vmatprep.subr.mxu0 0.0
    %2599 = vmatpush1.msra.mxu0 0.0
    %2600 = vmatprep.subr.mxu0 0.0
    %2601 = vmatpush1.msra.mxu0 0.0
    %2602 = vmatprep.subr.mxu0 0.0
    %2603 = vmatpush1.msra.mxu0 0.0
    %2604 = vmatprep.subr.mxu0 0.0
    %2605 = vmatpush1.msra.mxu0 0.0
    %2606 = vmatprep.subr.mxu0 0.0
    %2607 = vmatpush1.msra.mxu0 0.0
    %2608 = vmatprep.subr.mxu0 0.0
    %2609 = vmatpush1.msra.mxu0 0.0
    %2610 = vmatprep.subr.mxu0 0.0
    %2611 = vmatpush1.msra.mxu0 0.0
    %2612 = vmatprep.subr.mxu0 0.0
    %2613 = vmatpush1.msra.mxu0 0.0
    %2614 = vmatprep.subr.mxu0 0.0
    %2615 = vmatpush1.msra.mxu0 0.0
    %2616 = vmatprep.subr.mxu0 0.0
    %2617 = vmatpush1.msra.mxu0 0.0
    %2618 = vmatprep.subr.mxu0 0.0
    %2619 = vmatpush1.msra.mxu0 0.0
    %2620 = vmatprep.subr.mxu0 0.0
    %2621 = vmatpush1.msra.mxu0 0.0
    %2622 = vmatprep.subr.mxu0 0.0
    %2623 = vmatpush1.msra.mxu0 0.0
    %2624 = vmatprep.subr.mxu0 0.0
    %2625 = vmatpush1.msra.mxu0 0.0
    %2626 = vmatprep.subr.mxu0 0.0
    %2627 = vmatpush1.msra.mxu0 0.0
    %2628 = vmatprep.subr.mxu0 0.0
    %2629 = vmatpush1.msra.mxu0 0.0
    %2630 = vmatprep.subr.mxu0 0.0
    %2631 = vmatpush1.msra.mxu0 0.0
    %2632 = vmatprep.subr.mxu0 0.0
    %2633 = vmatpush1.msra.mxu0 0.0
    %2634 = vmatprep.mubr.f32.mxu0 0.0
    %2635 = vmatmul.mubr.f32.gmra.mrb[0].mxu0 %v2565
    %v2636 = vpop.f32.mrb[0].mxu0
    %v2637 = vadd.f32 0.0, %v2636
    %v2638 = vpop.f32.mrb[0].mxu0
    %2639 = vmatprep.mubr.f32.mxu0 0.0
    %2640 = vmatmul.mubr.f32.gmra.mrb[0].mxu0 %v2568
    %v2641 = vpop.f32.mrb[0].mxu0
    %v2642 = vadd.f32 0.0, %v2641
    %v2643 = vpop.f32.mrb[0].mxu0
    %2644 = vdwg.mxu0
    %v2645 = vmul.f32 %v2637, %v60
    %v2646 = vmul.f32 %v2642, %v61
    %v2647 = vsel %vm2555, %v2645, 0.0
    %v2648 = vsel %vm2555, %v2646, 0.0
    %v2649 = vadd.f32 %v2647, %v2648
    %v2650 = vrot.slane %v2649, 4
    %v2651 = vadd.f32 %v2649, %v2650
    %v2652 = vrot.slane %v2651, 2
    %v2653 = vadd.f32 %v2651, %v2652
    %v2654 = vrot.slane %v2653, 1
    %v2655 = vadd.f32 %v2653, %v2654
    %v2656 = vld [vmem:[%s8] sm:$0xff]
    %v2657 = vld [vmem:[%s8 + $0x8] sm:$0xff]
    %v2658 = vld [vmem:[%s8 + $0x10] sm:$0xff]
    %v2659 = vld [vmem:[%s8 + $0x18] sm:$0xff]
    %v2660 = vld [vmem:[%s8 + $0x20] sm:$0xff]
    %v2661 = vld [vmem:[%s8 + $0x28] sm:$0xff]
    %v2662 = vld [vmem:[%s8 + $0x30] sm:$0xff]
    %v2663 = vld [vmem:[%s8 + $0x38] sm:$0xff]
    %v2665 = vsel %vm2499, %v2560, 0
    %v2668 = vsel %vm2499, %v2561, 0
    %2670 = vmatprep.subr.mxu0 0.0
    %2671 = vmatpush1.msra.mxu0 %v2656
    %2672 = vmatprep.subr.mxu0 0.0
    %2673 = vmatpush1.msra.mxu0 %v2657
    %2674 = vmatprep.subr.mxu0 0.0
    %2675 = vmatpush1.msra.mxu0 %v2658
    %2676 = vmatprep.subr.mxu0 0.0
    %2677 = vmatpush1.msra.mxu0 %v2659
    %2678 = vmatprep.subr.mxu0 0.0
    %2679 = vmatpush1.msra.mxu0 %v2660
    %2680 = vmatprep.subr.mxu0 0.0
    %2681 = vmatpush1.msra.mxu0 %v2661
    %2682 = vmatprep.subr.mxu0 0.0
    %2683 = vmatpush1.msra.mxu0 %v2662
    %2684 = vmatprep.subr.mxu0 0.0
    %2685 = vmatpush1.msra.mxu0 %v2663
    %2686 = vmatprep.subr.mxu0 0.0
    %2687 = vmatpush1.msra.mxu0 0.0
    %2688 = vmatprep.subr.mxu0 0.0
    %2689 = vmatpush1.msra.mxu0 0.0
    %2690 = vmatprep.subr.mxu0 0.0
    %2691 = vmatpush1.msra.mxu0 0.0
    %2692 = vmatprep.subr.mxu0 0.0
    %2693 = vmatpush1.msra.mxu0 0.0
    %2694 = vmatprep.subr.mxu0 0.0
    %2695 = vmatpush1.msra.mxu0 0.0
    %2696 = vmatprep.subr.mxu0 0.0
    %2697 = vmatpush1.msra.mxu0 0.0
    %2698 = vmatprep.subr.mxu0 0.0
    %2699 = vmatpush1.msra.mxu0 0.0
    %2700 = vmatprep.subr.mxu0 0.0
    %2701 = vmatpush1.msra.mxu0 0.0
    %2702 = vmatprep.subr.mxu0 0.0
    %2703 = vmatpush1.msra.mxu0 0.0
    %2704 = vmatprep.subr.mxu0 0.0
    %2705 = vmatpush1.msra.mxu0 0.0
    %2706 = vmatprep.subr.mxu0 0.0
    %2707 = vmatpush1.msra.mxu0 0.0
    %2708 = vmatprep.subr.mxu0 0.0
    %2709 = vmatpush1.msra.mxu0 0.0
    %2710 = vmatprep.subr.mxu0 0.0
    %2711 = vmatpush1.msra.mxu0 0.0
    %2712 = vmatprep.subr.mxu0 0.0
    %2713 = vmatpush1.msra.mxu0 0.0
    %2714 = vmatprep.subr.mxu0 0.0
    %2715 = vmatpush1.msra.mxu0 0.0
    %2716 = vmatprep.subr.mxu0 0.0
    %2717 = vmatpush1.msra.mxu0 0.0
    %2718 = vmatprep.subr.mxu0 0.0
    %2719 = vmatpush1.msra.mxu0 0.0
    %2720 = vmatprep.subr.mxu0 0.0
    %2721 = vmatpush1.msra.mxu0 0.0
    %2722 = vmatprep.subr.mxu0 0.0
    %2723 = vmatpush1.msra.mxu0 0.0
    %2724 = vmatprep.subr.mxu0 0.0
    %2725 = vmatpush1.msra.mxu0 0.0
    %2726 = vmatprep.subr.mxu0 0.0
    %2727 = vmatpush1.msra.mxu0 0.0
    %2728 = vmatprep.subr.mxu0 0.0
    %2729 = vmatpush1.msra.mxu0 0.0
    %2730 = vmatprep.subr.mxu0 0.0
    %2731 = vmatpush1.msra.mxu0 0.0
    %2732 = vmatprep.subr.mxu0 0.0
    %2733 = vmatpush1.msra.mxu0 0.0
    %2734 = vmatprep.mubr.f32.mxu0 0.0
    %2735 = vmatmul.mubr.f32.gmra.mrb[0].mxu0 %v2665
    %v2736 = vpop.f32.mrb[0].mxu0
    %v2737 = vadd.f32 0.0, %v2736
    %v2738 = vpop.f32.mrb[0].mxu0
    %2739 = vmatprep.mubr.f32.mxu0 0.0
    %2740 = vmatmul.mubr.f32.gmra.mrb[0].mxu0 %v2668
    %v2741 = vpop.f32.mrb[0].mxu0
    %v2742 = vadd.f32 0.0, %v2741
    %v2743 = vpop.f32.mrb[0].mxu0
    %2744 = vdwg.mxu0
    %2747 = vrot.lane.b32.xlu0 %v2737, 88
    %v2748 = vpop.permute.xlu0 %2747
    %2749 = vrot.lane.b32.xlu0 %v2742, 88
    %v2750 = vpop.permute.xlu0 %2749
    %2753 = vxpose.xlu0.b32.start [1/16] %v2748, 128
    %2754 = vxpose.xlu0.b32.cont [2/16] %v2750, 128
    %2755 = vxpose.xlu0.b32.cont [3/16] 0.0, 128
    %2756 = vxpose.xlu0.b32.cont [4/16] 0.0, 128
    %2757 = vxpose.xlu0.b32.cont [5/16] 0.0, 128
    %2758 = vxpose.xlu0.b32.cont [6/16] 0.0, 128
    %2759 = vxpose.xlu0.b32.cont [7/16] 0.0, 128
    %2760 = vxpose.xlu0.b32.cont [8/16] 0.0, 128
    %2761 = vxpose.xlu0.b32.cont [9/16] 0.0, 128
    %2762 = vxpose.xlu0.b32.cont [10/16] 0.0, 128
    %2763 = vxpose.xlu0.b32.cont [11/16] 0.0, 128
    %2764 = vxpose.xlu0.b32.cont [12/16] 0.0, 128
    %2765 = vxpose.xlu0.b32.cont [13/16] 0.0, 128
    %2766 = vxpose.xlu0.b32.cont [14/16] 0.0, 128
    %2767 = vxpose.xlu0.b32.cont [15/16] 0.0, 128
    %2768 = vxpose.xlu0.b32.end [16/16] 0.0, 128
    %v2769 = vpop.trf.xlu0
    %v2770 = vpop.trf.xlu0
    %v2771 = vpop.trf.xlu0
    %v2772 = vpop.trf.xlu0
    %v2773 = vpop.trf.xlu0
    %v2774 = vpop.trf.xlu0
    %v2775 = vpop.trf.xlu0
    %v2776 = vpop.trf.xlu0
    %v2777 = vpop.trf.xlu0
    %v2778 = vpop.trf.xlu0
    %v2779 = vpop.trf.xlu0
    %v2780 = vpop.trf.xlu0
    %v2781 = vpop.trf.xlu0
    %v2782 = vpop.trf.xlu0
    %v2783 = vpop.trf.xlu0
    %v2784 = vpop.trf.xlu0
    %2785 = vset.pattern.permute.xlu0 32
    %2786 = vperm.xlu0 %2785, %v2737
    %v2787 = vpop.permute.xlu0 %2786
    %2789 = vset.pattern.permute.xlu0 32
    %2790 = vperm.xlu0 %2789, %v2742
    %v2791 = vpop.permute.xlu0 %2790
    %v2793 = vlaneseq
    %v2794 = vshrl.u32 %v2793, 7
    %v2795 = vsub.s32 0, %v2794
    %v2796 = vrot.slane %v2769, %v2795
    %v2797 = vadd.f32 %v2787, %v2796
    %v2798 = vadd.f32 %v2791, %v2796
    %v2799 = vmul.f32 %v2797, 0.2
    %v2800 = vmul.f32 %v2798, 0.2
    %v2801 = vmax.f32 %v2797, %v2799
    %v2802 = vmax.f32 %v2798, %v2800
    %v2803 = vadd.f32 %v2801, %v56
    %v2804 = vadd.f32 %v2802, %v57
    %v2805 = vsel %vm237, %v2803, -inf
    %2806 = vmax.xlane.f32.xlu0 %v2805
    %v2807 = vpop.xlane.xlu0 %2806
    %v2808 = vsel %vm237, %v2804, -inf
    %2809 = vmax.xlane.f32.xlu0 %v2808
    %v2810 = vpop.xlane.xlu0 %2809
    %v2811 = vsub.f32 %v2803, %v2807
    %v2812 = vsub.f32 %v2804, %v2810
    %v2813 = vmul.f32 %v2811, 1.442695
    %v2814 = vpow.pop %v2813
    %v2815 = vmul.f32 %v2812, 1.442695
    %v2816 = vpow.pop %v2815
    %v2817 = vsel %vm237, %v2814, 0.0
    %2818 = vadd.xlane.f32.xlu0 %v2817
    %v2819 = vpop.xlane.xlu0 %2818
    %v2820 = vsel %vm237, %v2816, 0.0
    %2821 = vadd.xlane.f32.xlu0 %v2820
    %v2822 = vpop.xlane.xlu0 %2821
    %v2823 = vrcp.pop %v2819
    %v2824 = vrcp.pop %v2822
    %v2825 = vmul.f32 %v2814, %v2823
    %v2826 = vmul.f32 %v2816, %v2824
    %v2827 = vadd.f32 %v2825, 0.0
    %v2828 = vadd.f32 %v2826, 0.0
    %v2830 = vsel %vm237, %v2825, 0
    %v2833 = vsel %vm237, %v2826, 0
    %2835 = vmatprep.subr.mxu0 0.0
    %2836 = vmatpush1.msra.mxu0 %v2737
    %2837 = vmatprep.subr.mxu0 0.0
    %2838 = vmatpush1.msra.mxu0 %v2742
    %2839 = vmatprep.subr.mxu0 0.0
    %2840 = vmatpush1.msra.mxu0 0.0
    %2841 = vmatprep.subr.mxu0 0.0
    %2842 = vmatpush1.msra.mxu0 0.0
    %2843 = vmatprep.subr.mxu0 0.0
    %2844 = vmatpush1.msra.mxu0 0.0
    %2845 = vmatprep.subr.mxu0 0.0
    %2846 = vmatpush1.msra.mxu0 0.0
    %2847 = vmatprep.subr.mxu0 0.0
    %2848 = vmatpush1.msra.mxu0 0.0
    %2849 = vmatprep.subr.mxu0 0.0
    %2850 = vmatpush1.msra.mxu0 0.0
    %2851 = vmatprep.subr.mxu0 0.0
    %2852 = vmatpush1.msra.mxu0 0.0
    %2853 = vmatprep.subr.mxu0 0.0
    %2854 = vmatpush1.msra.mxu0 0.0
    %2855 = vmatprep.subr.mxu0 0.0
    %2856 = vmatpush1.msra.mxu0 0.0
    %2857 = vmatprep.subr.mxu0 0.0
    %2858 = vmatpush1.msra.mxu0 0.0
    %2859 = vmatprep.subr.mxu0 0.0
    %2860 = vmatpush1.msra.mxu0 0.0
    %2861 = vmatprep.subr.mxu0 0.0
    %2862 = vmatpush1.msra.mxu0 0.0
    %2863 = vmatprep.subr.mxu0 0.0
    %2864 = vmatpush1.msra.mxu0 0.0
    %2865 = vmatprep.subr.mxu0 0.0
    %2866 = vmatpush1.msra.mxu0 0.0
    %2867 = vmatprep.subr.mxu0 0.0
    %2868 = vmatpush1.msra.mxu0 0.0
    %2869 = vmatprep.subr.mxu0 0.0
    %2870 = vmatpush1.msra.mxu0 0.0
    %2871 = vmatprep.subr.mxu0 0.0
    %2872 = vmatpush1.msra.mxu0 0.0
    %2873 = vmatprep.subr.mxu0 0.0
    %2874 = vmatpush1.msra.mxu0 0.0
    %2875 = vmatprep.subr.mxu0 0.0
    %2876 = vmatpush1.msra.mxu0 0.0
    %2877 = vmatprep.subr.mxu0 0.0
    %2878 = vmatpush1.msra.mxu0 0.0
    %2879 = vmatprep.subr.mxu0 0.0
    %2880 = vmatpush1.msra.mxu0 0.0
    %2881 = vmatprep.subr.mxu0 0.0
    %2882 = vmatpush1.msra.mxu0 0.0
    %2883 = vmatprep.subr.mxu0 0.0
    %2884 = vmatpush1.msra.mxu0 0.0
    %2885 = vmatprep.subr.mxu0 0.0
    %2886 = vmatpush1.msra.mxu0 0.0
    %2887 = vmatprep.subr.mxu0 0.0
    %2888 = vmatpush1.msra.mxu0 0.0
    %2889 = vmatprep.subr.mxu0 0.0
    %2890 = vmatpush1.msra.mxu0 0.0
    %2891 = vmatprep.subr.mxu0 0.0
    %2892 = vmatpush1.msra.mxu0 0.0
    %2893 = vmatprep.subr.mxu0 0.0
    %2894 = vmatpush1.msra.mxu0 0.0
    %2895 = vmatprep.subr.mxu0 0.0
    %2896 = vmatpush1.msra.mxu0 0.0
    %2897 = vmatprep.subr.mxu0 0.0
    %2898 = vmatpush1.msra.mxu0 0.0
    %2899 = vmatprep.mubr.f32.mxu0 0.0
    %2900 = vmatmul.mubr.f32.gmra.mrb[0].mxu0 %v2830
    %v2901 = vpop.f32.mrb[0].mxu0
    %v2902 = vadd.f32 0.0, %v2901
    %v2903 = vpop.f32.mrb[0].mxu0
    %2904 = vmatprep.mubr.f32.mxu0 0.0
    %2905 = vmatmul.mubr.f32.gmra.mrb[0].mxu0 %v2833
    %v2906 = vpop.f32.mrb[0].mxu0
    %v2907 = vadd.f32 0.0, %v2906
    %v2908 = vpop.f32.mrb[0].mxu0
    %2909 = vdwg.mxu0
    %2910 = vst.msk [vmem:[#allocation2] sm:$0xff] %vm343, %v2902
    %2911 = vst.msk [vmem:[#allocation2 + $0x8] sm:$0xff] %vm343, %v2907
    %2912 = vset.pattern.permute.xlu0 33
    %2913 = vperm.xlu0 %2912, %v2737
    %v2914 = vpop.permute.xlu0 %2913
    %2916 = vset.pattern.permute.xlu0 33
    %2917 = vperm.xlu0 %2916, %v2742
    %v2918 = vpop.permute.xlu0 %2917
    %v2920 = vlaneseq
    %v2921 = vshrl.u32 %v2920, 7
    %v2922 = vsub.s32 1, %v2921
    %v2923 = vrot.slane %v2769, %v2922
    %v2924 = vadd.f32 %v2914, %v2923
    %v2925 = vadd.f32 %v2918, %v2923
    %v2926 = vmul.f32 %v2924, 0.2
    %v2927 = vmul.f32 %v2925, 0.2
    %v2928 = vmax.f32 %v2924, %v2926
    %v2929 = vmax.f32 %v2925, %v2927
    %v2930 = vadd.f32 %v2928, %v56
    %v2931 = vadd.f32 %v2929, %v57
    %v2932 = vsel %vm237, %v2930, -inf
    %2933 = vmax.xlane.f32.xlu0 %v2932
    %v2934 = vpop.xlane.xlu0 %2933
    %v2935 = vsel %vm237, %v2931, -inf
    %2936 = vmax.xlane.f32.xlu0 %v2935
    %v2937 = vpop.xlane.xlu0 %2936
    %v2938 = vsub.f32 %v2930, %v2934
    %v2939 = vsub.f32 %v2931, %v2937
    %v2940 = vmul.f32 %v2938, 1.442695
    %v2941 = vpow.pop %v2940
    %v2942 = vmul.f32 %v2939, 1.442695
    %v2943 = vpow.pop %v2942
    %v2944 = vsel %vm237, %v2941, 0.0
    %2945 = vadd.xlane.f32.xlu0 %v2944
    %v2946 = vpop.xlane.xlu0 %2945
    %v2947 = vsel %vm237, %v2943, 0.0
    %2948 = vadd.xlane.f32.xlu0 %v2947
    %v2949 = vpop.xlane.xlu0 %2948
    %v2950 = vrcp.pop %v2946
    %v2951 = vrcp.pop %v2949
    %v2952 = vmul.f32 %v2941, %v2950
    %v2953 = vmul.f32 %v2943, %v2951
    %v2954 = vadd.f32 %v2827, %v2952
    %v2955 = vadd.f32 %v2828, %v2953
    %2956 = vrot.lane.b32.xlu0 %v2737, 124
    %v2957 = vpop.permute.xlu0 %2956
    %2958 = vrot.lane.b32.xlu0 %v2742, 124
    %v2959 = vpop.permute.xlu0 %2958
    %v2963 = vsel %vm237, %v2952, 0
    %v2966 = vsel %vm237, %v2953, 0
    %2968 = vmatprep.subr.mxu0 0.0
    %2969 = vmatpush1.msra.mxu0 %v2957
    %2970 = vmatprep.subr.mxu0 0.0
    %2971 = vmatpush1.msra.mxu0 %v2959
    %2972 = vmatprep.subr.mxu0 0.0
    %2973 = vmatpush1.msra.mxu0 0.0
    %2974 = vmatprep.subr.mxu0 0.0
    %2975 = vmatpush1.msra.mxu0 0.0
    %2976 = vmatprep.subr.mxu0 0.0
    %2977 = vmatpush1.msra.mxu0 0.0
    %2978 = vmatprep.subr.mxu0 0.0
    %2979 = vmatpush1.msra.mxu0 0.0
    %2980 = vmatprep.subr.mxu0 0.0
    %2981 = vmatpush1.msra.mxu0 0.0
    %2982 = vmatprep.subr.mxu0 0.0
    %2983 = vmatpush1.msra.mxu0 0.0
    %2984 = vmatprep.subr.mxu0 0.0
    %2985 = vmatpush1.msra.mxu0 0.0
    %2986 = vmatprep.subr.mxu0 0.0
    %2987 = vmatpush1.msra.mxu0 0.0
    %2988 = vmatprep.subr.mxu0 0.0
    %2989 = vmatpush1.msra.mxu0 0.0
    %2990 = vmatprep.subr.mxu0 0.0
    %2991 = vmatpush1.msra.mxu0 0.0
    %2992 = vmatprep.subr.mxu0 0.0
    %2993 = vmatpush1.msra.mxu0 0.0
    %2994 = vmatprep.subr.mxu0 0.0
    %2995 = vmatpush1.msra.mxu0 0.0
    %2996 = vmatprep.subr.mxu0 0.0
    %2997 = vmatpush1.msra.mxu0 0.0
    %2998 = vmatprep.subr.mxu0 0.0
    %2999 = vmatpush1.msra.mxu0 0.0
    %3000 = vmatprep.subr.mxu0 0.0
    %3001 = vmatpush1.msra.mxu0 0.0
    %3002 = vmatprep.subr.mxu0 0.0
    %3003 = vmatpush1.msra.mxu0 0.0
    %3004 = vmatprep.subr.mxu0 0.0
    %3005 = vmatpush1.msra.mxu0 0.0
    %3006 = vmatprep.subr.mxu0 0.0
    %3007 = vmatpush1.msra.mxu0 0.0
    %3008 = vmatprep.subr.mxu0 0.0
    %3009 = vmatpush1.msra.mxu0 0.0
    %3010 = vmatprep.subr.mxu0 0.0
    %3011 = vmatpush1.msra.mxu0 0.0
    %3012 = vmatprep.subr.mxu0 0.0
    %3013 = vmatpush1.msra.mxu0 0.0
    %3014 = vmatprep.subr.mxu0 0.0
    %3015 = vmatpush1.msra.mxu0 0.0
    %3016 = vmatprep.subr.mxu0 0.0
    %3017 = vmatpush1.msra.mxu0 0.0
    %3018 = vmatprep.subr.mxu0 0.0
    %3019 = vmatpush1.msra.mxu0 0.0
    %3020 = vmatprep.subr.mxu0 0.0
    %3021 = vmatpush1.msra.mxu0 0.0
    %3022 = vmatprep.subr.mxu0 0.0
    %3023 = vmatpush1.msra.mxu0 0.0
    %3024 = vmatprep.subr.mxu0 0.0
    %3025 = vmatpush1.msra.mxu0 0.0
    %3026 = vmatprep.subr.mxu0 0.0
    %3027 = vmatpush1.msra.mxu0 0.0
    %3028 = vmatprep.subr.mxu0 0.0
    %3029 = vmatpush1.msra.mxu0 0.0
    %3030 = vmatprep.subr.mxu0 0.0
    %3031 = vmatpush1.msra.mxu0 0.0
    %3032 = vmatprep.mubr.f32.mxu0 0.0
    %3033 = vmatmul.mubr.f32.gmra.mrb[0].mxu0 %v2963
    %v3034 = vpop.f32.mrb[0].mxu0
    %v3035 = vadd.f32 0.0, %v3034
    %v3036 = vpop.f32.mrb[0].mxu0
    %3037 = vmatprep.mubr.f32.mxu0 0.0
    %3038 = vmatmul.mubr.f32.gmra.mrb[0].mxu0 %v2966
    %v3039 = vpop.f32.mrb[0].mxu0
    %v3040 = vadd.f32 0.0, %v3039
    %v3041 = vpop.f32.mrb[0].mxu0
    %3042 = vdwg.mxu0
    %3045 = vrot.lane.b32.xlu0 %v3035, 4
    %v3046 = vpop.permute.xlu0 %3045
    %3047 = vrot.lane.b32.xlu0 %v3040, 4
    %v3048 = vpop.permute.xlu0 %3047
    %3051 = vst.msk [vmem:[#allocation2] sm:$0xff] %vm485, %v3046
    %3052 = vst.msk [vmem:[#allocation2 + $0x8] sm:$0xff] %vm485, %v3048
    %3053 = vset.pattern.permute.xlu0 34
    %3054 = vperm.xlu0 %3053, %v2737
    %v3055 = vpop.permute.xlu0 %3054
    %3057 = vset.pattern.permute.xlu0 34
    %3058 = vperm.xlu0 %3057, %v2742
    %v3059 = vpop.permute.xlu0 %3058
    %v3061 = vlaneseq
    %v3062 = vshrl.u32 %v3061, 7
    %v3063 = vsub.s32 2, %v3062
    %v3064 = vrot.slane %v2769, %v3063
    %v3065 = vadd.f32 %v3055, %v3064
    %v3066 = vadd.f32 %v3059, %v3064
    %v3067 = vmul.f32 %v3065, 0.2
    %v3068 = vmul.f32 %v3066, 0.2
    %v3069 = vmax.f32 %v3065, %v3067
    %v3070 = vmax.f32 %v3066, %v3068
    %v3071 = vadd.f32 %v3069, %v56
    %v3072 = vadd.f32 %v3070, %v57
    %v3073 = vsel %vm237, %v3071, -inf
    %3074 = vmax.xlane.f32.xlu0 %v3073
    %v3075 = vpop.xlane.xlu0 %3074
    %v3076 = vsel %vm237, %v3072, -inf
    %3077 = vmax.xlane.f32.xlu0 %v3076
    %v3078 = vpop.xlane.xlu0 %3077
    %v3079 = vsub.f32 %v3071, %v3075
    %v3080 = vsub.f32 %v3072, %v3078
    %v3081 = vmul.f32 %v3079, 1.442695
    %v3082 = vpow.pop %v3081
    %v3083 = vmul.f32 %v3080, 1.442695
    %v3084 = vpow.pop %v3083
    %v3085 = vsel %vm237, %v3082, 0.0
    %3086 = vadd.xlane.f32.xlu0 %v3085
    %v3087 = vpop.xlane.xlu0 %3086
    %v3088 = vsel %vm237, %v3084, 0.0
    %3089 = vadd.xlane.f32.xlu0 %v3088
    %v3090 = vpop.xlane.xlu0 %3089
    %v3091 = vrcp.pop %v3087
    %v3092 = vrcp.pop %v3090
    %v3093 = vmul.f32 %v3082, %v3091
    %v3094 = vmul.f32 %v3084, %v3092
    %v3095 = vadd.f32 %v2954, %v3093
    %v3096 = vadd.f32 %v2955, %v3094
    %3097 = vrot.lane.b32.xlu0 %v2737, 120
    %v3098 = vpop.permute.xlu0 %3097
    %3099 = vrot.lane.b32.xlu0 %v2742, 120
    %v3100 = vpop.permute.xlu0 %3099
    %v3104 = vsel %vm237, %v3093, 0
    %v3107 = vsel %vm237, %v3094, 0
    %3109 = vmatprep.subr.mxu0 0.0
    %3110 = vmatpush1.msra.mxu0 %v3098
    %3111 = vmatprep.subr.mxu0 0.0
    %3112 = vmatpush1.msra.mxu0 %v3100
    %3113 = vmatprep.subr.mxu0 0.0
    %3114 = vmatpush1.msra.mxu0 0.0
    %3115 = vmatprep.subr.mxu0 0.0
    %3116 = vmatpush1.msra.mxu0 0.0
    %3117 = vmatprep.subr.mxu0 0.0
    %3118 = vmatpush1.msra.mxu0 0.0
    %3119 = vmatprep.subr.mxu0 0.0
    %3120 = vmatpush1.msra.mxu0 0.0
    %3121 = vmatprep.subr.mxu0 0.0
    %3122 = vmatpush1.msra.mxu0 0.0
    %3123 = vmatprep.subr.mxu0 0.0
    %3124 = vmatpush1.msra.mxu0 0.0
    %3125 = vmatprep.subr.mxu0 0.0
    %3126 = vmatpush1.msra.mxu0 0.0
    %3127 = vmatprep.subr.mxu0 0.0
    %3128 = vmatpush1.msra.mxu0 0.0
    %3129 = vmatprep.subr.mxu0 0.0
    %3130 = vmatpush1.msra.mxu0 0.0
    %3131 = vmatprep.subr.mxu0 0.0
    %3132 = vmatpush1.msra.mxu0 0.0
    %3133 = vmatprep.subr.mxu0 0.0
    %3134 = vmatpush1.msra.mxu0 0.0
    %3135 = vmatprep.subr.mxu0 0.0
    %3136 = vmatpush1.msra.mxu0 0.0
    %3137 = vmatprep.subr.mxu0 0.0
    %3138 = vmatpush1.msra.mxu0 0.0
    %3139 = vmatprep.subr.mxu0 0.0
    %3140 = vmatpush1.msra.mxu0 0.0
    %3141 = vmatprep.subr.mxu0 0.0
    %3142 = vmatpush1.msra.mxu0 0.0
    %3143 = vmatprep.subr.mxu0 0.0
    %3144 = vmatpush1.msra.mxu0 0.0
    %3145 = vmatprep.subr.mxu0 0.0
    %3146 = vmatpush1.msra.mxu0 0.0
    %3147 = vmatprep.subr.mxu0 0.0
    %3148 = vmatpush1.msra.mxu0 0.0
    %3149 = vmatprep.subr.mxu0 0.0
    %3150 = vmatpush1.msra.mxu0 0.0
    %3151 = vmatprep.subr.mxu0 0.0
    %3152 = vmatpush1.msra.mxu0 0.0
    %3153 = vmatprep.subr.mxu0 0.0
    %3154 = vmatpush1.msra.mxu0 0.0
    %3155 = vmatprep.subr.mxu0 0.0
    %3156 = vmatpush1.msra.mxu0 0.0
    %3157 = vmatprep.subr.mxu0 0.0
    %3158 = vmatpush1.msra.mxu0 0.0
    %3159 = vmatprep.subr.mxu0 0.0
    %3160 = vmatpush1.msra.mxu0 0.0
    %3161 = vmatprep.subr.mxu0 0.0
    %3162 = vmatpush1.msra.mxu0 0.0
    %3163 = vmatprep.subr.mxu0 0.0
    %3164 = vmatpush1.msra.mxu0 0.0
    %3165 = vmatprep.subr.mxu0 0.0
    %3166 = vmatpush1.msra.mxu0 0.0
    %3167 = vmatprep.subr.mxu0 0.0
    %3168 = vmatpush1.msra.mxu0 0.0
    %3169 = vmatprep.subr.mxu0 0.0
    %3170 = vmatpush1.msra.mxu0 0.0
    %3171 = vmatprep.subr.mxu0 0.0
    %3172 = vmatpush1.msra.mxu0 0.0
    %3173 = vmatprep.mubr.f32.mxu0 0.0
    %3174 = vmatmul.mubr.f32.gmra.mrb[0].mxu0 %v3104
    %v3175 = vpop.f32.mrb[0].mxu0
    %v3176 = vadd.f32 0.0, %v3175
    %v3177 = vpop.f32.mrb[0].mxu0
    %3178 = vmatprep.mubr.f32.mxu0 0.0
    %3179 = vmatmul.mubr.f32.gmra.mrb[0].mxu0 %v3107
    %v3180 = vpop.f32.mrb[0].mxu0
    %v3181 = vadd.f32 0.0, %v3180
    %v3182 = vpop.f32.mrb[0].mxu0
    %3183 = vdwg.mxu0
    %3186 = vrot.lane.b32.xlu0 %v3176, 8
    %v3187 = vpop.permute.xlu0 %3186
    %3188 = vrot.lane.b32.xlu0 %v3181, 8
    %v3189 = vpop.permute.xlu0 %3188
    %3192 = vst.msk [vmem:[#allocation2] sm:$0xff] %vm627, %v3187
    %3193 = vst.msk [vmem:[#allocation2 + $0x8] sm:$0xff] %vm627, %v3189
    %3194 = vset.pattern.permute.xlu0 35
    %3195 = vperm.xlu0 %3194, %v2737
    %v3196 = vpop.permute.xlu0 %3195
    %3198 = vset.pattern.permute.xlu0 35
    %3199 = vperm.xlu0 %3198, %v2742
    %v3200 = vpop.permute.xlu0 %3199
    %v3202 = vlaneseq
    %v3203 = vshrl.u32 %v3202, 7
    %v3204 = vsub.s32 3, %v3203
    %v3205 = vrot.slane %v2769, %v3204
    %v3206 = vadd.f32 %v3196, %v3205
    %v3207 = vadd.f32 %v3200, %v3205
    %v3208 = vmul.f32 %v3206, 0.2
    %v3209 = vmul.f32 %v3207, 0.2
    %v3210 = vmax.f32 %v3206, %v3208
    %v3211 = vmax.f32 %v3207, %v3209
    %v3212 = vadd.f32 %v3210, %v56
    %v3213 = vadd.f32 %v3211, %v57
    %v3214 = vsel %vm237, %v3212, -inf
    %3215 = vmax.xlane.f32.xlu0 %v3214
    %v3216 = vpop.xlane.xlu0 %3215
    %v3217 = vsel %vm237, %v3213, -inf
    %3218 = vmax.xlane.f32.xlu0 %v3217
    %v3219 = vpop.xlane.xlu0 %3218
    %v3220 = vsub.f32 %v3212, %v3216
    %v3221 = vsub.f32 %v3213, %v3219
    %v3222 = vmul.f32 %v3220, 1.442695
    %v3223 = vpow.pop %v3222
    %v3224 = vmul.f32 %v3221, 1.442695
    %v3225 = vpow.pop %v3224
    %v3226 = vsel %vm237, %v3223, 0.0
    %3227 = vadd.xlane.f32.xlu0 %v3226
    %v3228 = vpop.xlane.xlu0 %3227
    %v3229 = vsel %vm237, %v3225, 0.0
    %3230 = vadd.xlane.f32.xlu0 %v3229
    %v3231 = vpop.xlane.xlu0 %3230
    %v3232 = vrcp.pop %v3228
    %v3233 = vrcp.pop %v3231
    %v3234 = vmul.f32 %v3223, %v3232
    %v3235 = vmul.f32 %v3225, %v3233
    %v3236 = vadd.f32 %v3095, %v3234
    %v3237 = vadd.f32 %v3096, %v3235
    %3238 = vrot.lane.b32.xlu0 %v2737, 116
    %v3239 = vpop.permute.xlu0 %3238
    %3240 = vrot.lane.b32.xlu0 %v2742, 116
    %v3241 = vpop.permute.xlu0 %3240
    %v3245 = vsel %vm237, %v3234, 0
    %v3248 = vsel %vm237, %v3235, 0
    %3250 = vmatprep.subr.mxu0 0.0
    %3251 = vmatpush1.msra.mxu0 %v3239
    %3252 = vmatprep.subr.mxu0 0.0
    %3253 = vmatpush1.msra.mxu0 %v3241
    %3254 = vmatprep.subr.mxu0 0.0
    %3255 = vmatpush1.msra.mxu0 0.0
    %3256 = vmatprep.subr.mxu0 0.0
    %3257 = vmatpush1.msra.mxu0 0.0
    %3258 = vmatprep.subr.mxu0 0.0
    %3259 = vmatpush1.msra.mxu0 0.0
    %3260 = vmatprep.subr.mxu0 0.0
    %3261 = vmatpush1.msra.mxu0 0.0
    %3262 = vmatprep.subr.mxu0 0.0
    %3263 = vmatpush1.msra.mxu0 0.0
    %3264 = vmatprep.subr.mxu0 0.0
    %3265 = vmatpush1.msra.mxu0 0.0
    %3266 = vmatprep.subr.mxu0 0.0
    %3267 = vmatpush1.msra.mxu0 0.0
    %3268 = vmatprep.subr.mxu0 0.0
    %3269 = vmatpush1.msra.mxu0 0.0
    %3270 = vmatprep.subr.mxu0 0.0
    %3271 = vmatpush1.msra.mxu0 0.0
    %3272 = vmatprep.subr.mxu0 0.0
    %3273 = vmatpush1.msra.mxu0 0.0
    %3274 = vmatprep.subr.mxu0 0.0
    %3275 = vmatpush1.msra.mxu0 0.0
    %3276 = vmatprep.subr.mxu0 0.0
    %3277 = vmatpush1.msra.mxu0 0.0
    %3278 = vmatprep.subr.mxu0 0.0
    %3279 = vmatpush1.msra.mxu0 0.0
    %3280 = vmatprep.subr.mxu0 0.0
    %3281 = vmatpush1.msra.mxu0 0.0
    %3282 = vmatprep.subr.mxu0 0.0
    %3283 = vmatpush1.msra.mxu0 0.0
    %3284 = vmatprep.subr.mxu0 0.0
    %3285 = vmatpush1.msra.mxu0 0.0
    %3286 = vmatprep.subr.mxu0 0.0
    %3287 = vmatpush1.msra.mxu0 0.0
    %3288 = vmatprep.subr.mxu0 0.0
    %3289 = vmatpush1.msra.mxu0 0.0
    %3290 = vmatprep.subr.mxu0 0.0
    %3291 = vmatpush1.msra.mxu0 0.0
    %3292 = vmatprep.subr.mxu0 0.0
    %3293 = vmatpush1.msra.mxu0 0.0
    %3294 = vmatprep.subr.mxu0 0.0
    %3295 = vmatpush1.msra.mxu0 0.0
    %3296 = vmatprep.subr.mxu0 0.0
    %3297 = vmatpush1.msra.mxu0 0.0
    %3298 = vmatprep.subr.mxu0 0.0
    %3299 = vmatpush1.msra.mxu0 0.0
    %3300 = vmatprep.subr.mxu0 0.0
    %3301 = vmatpush1.msra.mxu0 0.0
    %3302 = vmatprep.subr.mxu0 0.0
    %3303 = vmatpush1.msra.mxu0 0.0
    %3304 = vmatprep.subr.mxu0 0.0
    %3305 = vmatpush1.msra.mxu0 0.0
    %3306 = vmatprep.subr.mxu0 0.0
    %3307 = vmatpush1.msra.mxu0 0.0
    %3308 = vmatprep.subr.mxu0 0.0
    %3309 = vmatpush1.msra.mxu0 0.0
    %3310 = vmatprep.subr.mxu0 0.0
    %3311 = vmatpush1.msra.mxu0 0.0
    %3312 = vmatprep.subr.mxu0 0.0
    %3313 = vmatpush1.msra.mxu0 0.0
    %3314 = vmatprep.mubr.f32.mxu0 0.0
    %3315 = vmatmul.mubr.f32.gmra.mrb[0].mxu0 %v3245
    %v3316 = vpop.f32.mrb[0].mxu0
    %v3317 = vadd.f32 0.0, %v3316
    %v3318 = vpop.f32.mrb[0].mxu0
    %3319 = vmatprep.mubr.f32.mxu0 0.0
    %3320 = vmatmul.mubr.f32.gmra.mrb[0].mxu0 %v3248
    %v3321 = vpop.f32.mrb[0].mxu0
    %v3322 = vadd.f32 0.0, %v3321
    %v3323 = vpop.f32.mrb[0].mxu0
    %3324 = vdwg.mxu0
    %3327 = vrot.lane.b32.xlu0 %v3317, 12
    %v3328 = vpop.permute.xlu0 %3327
    %3329 = vrot.lane.b32.xlu0 %v3322, 12
    %v3330 = vpop.permute.xlu0 %3329
    %3333 = vst.msk [vmem:[#allocation2] sm:$0xff] %vm769, %v3328
    %3334 = vst.msk [vmem:[#allocation2 + $0x8] sm:$0xff] %vm769, %v3330
    %3335 = vset.pattern.permute.xlu0 36
    %3336 = vperm.xlu0 %3335, %v2737
    %v3337 = vpop.permute.xlu0 %3336
    %3339 = vset.pattern.permute.xlu0 36
    %3340 = vperm.xlu0 %3339, %v2742
    %v3341 = vpop.permute.xlu0 %3340
    %v3343 = vlaneseq
    %v3344 = vshrl.u32 %v3343, 7
    %v3345 = vsub.s32 4, %v3344
    %v3346 = vrot.slane %v2769, %v3345
    %v3347 = vadd.f32 %v3337, %v3346
    %v3348 = vadd.f32 %v3341, %v3346
    %v3349 = vmul.f32 %v3347, 0.2
    %v3350 = vmul.f32 %v3348, 0.2
    %v3351 = vmax.f32 %v3347, %v3349
    %v3352 = vmax.f32 %v3348, %v3350
    %v3353 = vadd.f32 %v3351, %v56
    %v3354 = vadd.f32 %v3352, %v57
    %v3355 = vsel %vm237, %v3353, -inf
    %3356 = vmax.xlane.f32.xlu0 %v3355
    %v3357 = vpop.xlane.xlu0 %3356
    %v3358 = vsel %vm237, %v3354, -inf
    %3359 = vmax.xlane.f32.xlu0 %v3358
    %v3360 = vpop.xlane.xlu0 %3359
    %v3361 = vsub.f32 %v3353, %v3357
    %v3362 = vsub.f32 %v3354, %v3360
    %v3363 = vmul.f32 %v3361, 1.442695
    %v3364 = vpow.pop %v3363
    %v3365 = vmul.f32 %v3362, 1.442695
    %v3366 = vpow.pop %v3365
    %v3367 = vsel %vm237, %v3364, 0.0
    %3368 = vadd.xlane.f32.xlu0 %v3367
    %v3369 = vpop.xlane.xlu0 %3368
    %v3370 = vsel %vm237, %v3366, 0.0
    %3371 = vadd.xlane.f32.xlu0 %v3370
    %v3372 = vpop.xlane.xlu0 %3371
    %v3373 = vrcp.pop %v3369
    %v3374 = vrcp.pop %v3372
    %v3375 = vmul.f32 %v3364, %v3373
    %v3376 = vmul.f32 %v3366, %v3374
    %v3377 = vadd.f32 %v3236, %v3375
    %v3378 = vadd.f32 %v3237, %v3376
    %3379 = vrot.lane.b32.xlu0 %v2737, 112
    %v3380 = vpop.permute.xlu0 %3379
    %3381 = vrot.lane.b32.xlu0 %v2742, 112
    %v3382 = vpop.permute.xlu0 %3381
    %v3386 = vsel %vm237, %v3375, 0
    %v3389 = vsel %vm237, %v3376, 0
    %3391 = vmatprep.subr.mxu0 0.0
    %3392 = vmatpush1.msra.mxu0 %v3380
    %3393 = vmatprep.subr.mxu0 0.0
    %3394 = vmatpush1.msra.mxu0 %v3382
    %3395 = vmatprep.subr.mxu0 0.0
    %3396 = vmatpush1.msra.mxu0 0.0
    %3397 = vmatprep.subr.mxu0 0.0
    %3398 = vmatpush1.msra.mxu0 0.0
    %3399 = vmatprep.subr.mxu0 0.0
    %3400 = vmatpush1.msra.mxu0 0.0
    %3401 = vmatprep.subr.mxu0 0.0
    %3402 = vmatpush1.msra.mxu0 0.0
    %3403 = vmatprep.subr.mxu0 0.0
    %3404 = vmatpush1.msra.mxu0 0.0
    %3405 = vmatprep.subr.mxu0 0.0
    %3406 = vmatpush1.msra.mxu0 0.0
    %3407 = vmatprep.subr.mxu0 0.0
    %3408 = vmatpush1.msra.mxu0 0.0
    %3409 = vmatprep.subr.mxu0 0.0
    %3410 = vmatpush1.msra.mxu0 0.0
    %3411 = vmatprep.subr.mxu0 0.0
    %3412 = vmatpush1.msra.mxu0 0.0
    %3413 = vmatprep.subr.mxu0 0.0
    %3414 = vmatpush1.msra.mxu0 0.0
    %3415 = vmatprep.subr.mxu0 0.0
    %3416 = vmatpush1.msra.mxu0 0.0
    %3417 = vmatprep.subr.mxu0 0.0
    %3418 = vmatpush1.msra.mxu0 0.0
    %3419 = vmatprep.subr.mxu0 0.0
    %3420 = vmatpush1.msra.mxu0 0.0
    %3421 = vmatprep.subr.mxu0 0.0
    %3422 = vmatpush1.msra.mxu0 0.0
    %3423 = vmatprep.subr.mxu0 0.0
    %3424 = vmatpush1.msra.mxu0 0.0
    %3425 = vmatprep.subr.mxu0 0.0
    %3426 = vmatpush1.msra.mxu0 0.0
    %3427 = vmatprep.subr.mxu0 0.0
    %3428 = vmatpush1.msra.mxu0 0.0
    %3429 = vmatprep.subr.mxu0 0.0
    %3430 = vmatpush1.msra.mxu0 0.0
    %3431 = vmatprep.subr.mxu0 0.0
    %3432 = vmatpush1.msra.mxu0 0.0
    %3433 = vmatprep.subr.mxu0 0.0
    %3434 = vmatpush1.msra.mxu0 0.0
    %3435 = vmatprep.subr.mxu0 0.0
    %3436 = vmatpush1.msra.mxu0 0.0
    %3437 = vmatprep.subr.mxu0 0.0
    %3438 = vmatpush1.msra.mxu0 0.0
    %3439 = vmatprep.subr.mxu0 0.0
    %3440 = vmatpush1.msra.mxu0 0.0
    %3441 = vmatprep.subr.mxu0 0.0
    %3442 = vmatpush1.msra.mxu0 0.0
    %3443 = vmatprep.subr.mxu0 0.0
    %3444 = vmatpush1.msra.mxu0 0.0
    %3445 = vmatprep.subr.mxu0 0.0
    %3446 = vmatpush1.msra.mxu0 0.0
    %3447 = vmatprep.subr.mxu0 0.0
    %3448 = vmatpush1.msra.mxu0 0.0
    %3449 = vmatprep.subr.mxu0 0.0
    %3450 = vmatpush1.msra.mxu0 0.0
    %3451 = vmatprep.subr.mxu0 0.0
    %3452 = vmatpush1.msra.mxu0 0.0
    %3453 = vmatprep.subr.mxu0 0.0
    %3454 = vmatpush1.msra.mxu0 0.0
    %3455 = vmatprep.mubr.f32.mxu0 0.0
    %3456 = vmatmul.mubr.f32.gmra.mrb[0].mxu0 %v3386
    %v3457 = vpop.f32.mrb[0].mxu0
    %v3458 = vadd.f32 0.0, %v3457
    %v3459 = vpop.f32.mrb[0].mxu0
    %3460 = vmatprep.mubr.f32.mxu0 0.0
    %3461 = vmatmul.mubr.f32.gmra.mrb[0].mxu0 %v3389
    %v3462 = vpop.f32.mrb[0].mxu0
    %v3463 = vadd.f32 0.0, %v3462
    %v3464 = vpop.f32.mrb[0].mxu0
    %3465 = vdwg.mxu0
    %3468 = vrot.lane.b32.xlu0 %v3458, 16
    %v3469 = vpop.permute.xlu0 %3468
    %3470 = vrot.lane.b32.xlu0 %v3463, 16
    %v3471 = vpop.permute.xlu0 %3470
    %3474 = vst.msk [vmem:[#allocation2] sm:$0xff] %vm911, %v3469
    %3475 = vst.msk [vmem:[#allocation2 + $0x8] sm:$0xff] %vm911, %v3471
    %3476 = vset.pattern.permute.xlu0 37
    %3477 = vperm.xlu0 %3476, %v2737
    %v3478 = vpop.permute.xlu0 %3477
    %3480 = vset.pattern.permute.xlu0 37
    %3481 = vperm.xlu0 %3480, %v2742
    %v3482 = vpop.permute.xlu0 %3481
    %v3484 = vlaneseq
    %v3485 = vshrl.u32 %v3484, 7
    %v3486 = vsub.s32 5, %v3485
    %v3487 = vrot.slane %v2769, %v3486
    %v3488 = vadd.f32 %v3478, %v3487
    %v3489 = vadd.f32 %v3482, %v3487
    %v3490 = vmul.f32 %v3488, 0.2
    %v3491 = vmul.f32 %v3489, 0.2
    %v3492 = vmax.f32 %v3488, %v3490
    %v3493 = vmax.f32 %v3489, %v3491
    %v3494 = vadd.f32 %v3492, %v56
    %v3495 = vadd.f32 %v3493, %v57
    %v3496 = vsel %vm237, %v3494, -inf
    %3497 = vmax.xlane.f32.xlu0 %v3496
    %v3498 = vpop.xlane.xlu0 %3497
    %v3499 = vsel %vm237, %v3495, -inf
    %3500 = vmax.xlane.f32.xlu0 %v3499
    %v3501 = vpop.xlane.xlu0 %3500
    %v3502 = vsub.f32 %v3494, %v3498
    %v3503 = vsub.f32 %v3495, %v3501
    %v3504 = vmul.f32 %v3502, 1.442695
    %v3505 = vpow.pop %v3504
    %v3506 = vmul.f32 %v3503, 1.442695
    %v3507 = vpow.pop %v3506
    %v3508 = vsel %vm237, %v3505, 0.0
    %3509 = vadd.xlane.f32.xlu0 %v3508
    %v3510 = vpop.xlane.xlu0 %3509
    %v3511 = vsel %vm237, %v3507, 0.0
    %3512 = vadd.xlane.f32.xlu0 %v3511
    %v3513 = vpop.xlane.xlu0 %3512
    %v3514 = vrcp.pop %v3510
    %v3515 = vrcp.pop %v3513
    %v3516 = vmul.f32 %v3505, %v3514
    %v3517 = vmul.f32 %v3507, %v3515
    %v3518 = vadd.f32 %v3377, %v3516
    %v3519 = vadd.f32 %v3378, %v3517
    %3520 = vrot.lane.b32.xlu0 %v2737, 108
    %v3521 = vpop.permute.xlu0 %3520
    %3522 = vrot.lane.b32.xlu0 %v2742, 108
    %v3523 = vpop.permute.xlu0 %3522
    %v3527 = vsel %vm237, %v3516, 0
    %v3530 = vsel %vm237, %v3517, 0
    %3532 = vmatprep.subr.mxu0 0.0
    %3533 = vmatpush1.msra.mxu0 %v3521
    %3534 = vmatprep.subr.mxu0 0.0
    %3535 = vmatpush1.msra.mxu0 %v3523
    %3536 = vmatprep.subr.mxu0 0.0
    %3537 = vmatpush1.msra.mxu0 0.0
    %3538 = vmatprep.subr.mxu0 0.0
    %3539 = vmatpush1.msra.mxu0 0.0
    %3540 = vmatprep.subr.mxu0 0.0
    %3541 = vmatpush1.msra.mxu0 0.0
    %3542 = vmatprep.subr.mxu0 0.0
    %3543 = vmatpush1.msra.mxu0 0.0
    %3544 = vmatprep.subr.mxu0 0.0
    %3545 = vmatpush1.msra.mxu0 0.0
    %3546 = vmatprep.subr.mxu0 0.0
    %3547 = vmatpush1.msra.mxu0 0.0
    %3548 = vmatprep.subr.mxu0 0.0
    %3549 = vmatpush1.msra.mxu0 0.0
    %3550 = vmatprep.subr.mxu0 0.0
    %3551 = vmatpush1.msra.mxu0 0.0
    %3552 = vmatprep.subr.mxu0 0.0
    %3553 = vmatpush1.msra.mxu0 0.0
    %3554 = vmatprep.subr.mxu0 0.0
    %3555 = vmatpush1.msra.mxu0 0.0
    %3556 = vmatprep.subr.mxu0 0.0
    %3557 = vmatpush1.msra.mxu0 0.0
    %3558 = vmatprep.subr.mxu0 0.0
    %3559 = vmatpush1.msra.mxu0 0.0
    %3560 = vmatprep.subr.mxu0 0.0
    %3561 = vmatpush1.msra.mxu0 0.0
    %3562 = vmatprep.subr.mxu0 0.0
    %3563 = vmatpush1.msra.mxu0 0.0
    %3564 = vmatprep.subr.mxu0 0.0
    %3565 = vmatpush1.msra.mxu0 0.0
    %3566 = vmatprep.subr.mxu0 0.0
    %3567 = vmatpush1.msra.mxu0 0.0
    %3568 = vmatprep.subr.mxu0 0.0
    %3569 = vmatpush1.msra.mxu0 0.0
    %3570 = vmatprep.subr.mxu0 0.0
    %3571 = vmatpush1.msra.mxu0 0.0
    %3572 = vmatprep.subr.mxu0 0.0
    %3573 = vmatpush1.msra.mxu0 0.0
    %3574 = vmatprep.subr.mxu0 0.0
    %3575 = vmatpush1.msra.mxu0 0.0
    %3576 = vmatprep.subr.mxu0 0.0
    %3577 = vmatpush1.msra.mxu0 0.0
    %3578 = vmatprep.subr.mxu0 0.0
    %3579 = vmatpush1.msra.mxu0 0.0
    %3580 = vmatprep.subr.mxu0 0.0
    %3581 = vmatpush1.msra.mxu0 0.0
    %3582 = vmatprep.subr.mxu0 0.0
    %3583 = vmatpush1.msra.mxu0 0.0
    %3584 = vmatprep.subr.mxu0 0.0
    %3585 = vmatpush1.msra.mxu0 0.0
    %3586 = vmatprep.subr.mxu0 0.0
    %3587 = vmatpush1.msra.mxu0 0.0
    %3588 = vmatprep.subr.mxu0 0.0
    %3589 = vmatpush1.msra.mxu0 0.0
    %3590 = vmatprep.subr.mxu0 0.0
    %3591 = vmatpush1.msra.mxu0 0.0
    %3592 = vmatprep.subr.mxu0 0.0
    %3593 = vmatpush1.msra.mxu0 0.0
    %3594 = vmatprep.subr.mxu0 0.0
    %3595 = vmatpush1.msra.mxu0 0.0
    %3596 = vmatprep.mubr.f32.mxu0 0.0
    %3597 = vmatmul.mubr.f32.gmra.mrb[0].mxu0 %v3527
    %v3598 = vpop.f32.mrb[0].mxu0
    %v3599 = vadd.f32 0.0, %v3598
    %v3600 = vpop.f32.mrb[0].mxu0
    %3601 = vmatprep.mubr.f32.mxu0 0.0
    %3602 = vmatmul.mubr.f32.gmra.mrb[0].mxu0 %v3530
    %v3603 = vpop.f32.mrb[0].mxu0
    %v3604 = vadd.f32 0.0, %v3603
    %v3605 = vpop.f32.mrb[0].mxu0
    %3606 = vdwg.mxu0
    %3609 = vrot.lane.b32.xlu0 %v3599, 20
    %v3610 = vpop.permute.xlu0 %3609
    %3611 = vrot.lane.b32.xlu0 %v3604, 20
    %v3612 = vpop.permute.xlu0 %3611
    %3615 = vst.msk [vmem:[#allocation2] sm:$0xff] %vm1053, %v3610
    %3616 = vst.msk [vmem:[#allocation2 + $0x8] sm:$0xff] %vm1053, %v3612
    %3617 = vset.pattern.permute.xlu0 38
    %3618 = vperm.xlu0 %3617, %v2737
    %v3619 = vpop.permute.xlu0 %3618
    %3621 = vset.pattern.permute.xlu0 38
    %3622 = vperm.xlu0 %3621, %v2742
    %v3623 = vpop.permute.xlu0 %3622
    %v3625 = vlaneseq
    %v3626 = vshrl.u32 %v3625, 7
    %v3627 = vsub.s32 6, %v3626
    %v3628 = vrot.slane %v2769, %v3627
    %v3629 = vadd.f32 %v3619, %v3628
    %v3630 = vadd.f32 %v3623, %v3628
    %v3631 = vmul.f32 %v3629, 0.2
    %v3632 = vmul.f32 %v3630, 0.2
    %v3633 = vmax.f32 %v3629, %v3631
    %v3634 = vmax.f32 %v3630, %v3632
    %v3635 = vadd.f32 %v3633, %v56
    %v3636 = vadd.f32 %v3634, %v57
    %v3637 = vsel %vm237, %v3635, -inf
    %3638 = vmax.xlane.f32.xlu0 %v3637
    %v3639 = vpop.xlane.xlu0 %3638
    %v3640 = vsel %vm237, %v3636, -inf
    %3641 = vmax.xlane.f32.xlu0 %v3640
    %v3642 = vpop.xlane.xlu0 %3641
    %v3643 = vsub.f32 %v3635, %v3639
    %v3644 = vsub.f32 %v3636, %v3642
    %v3645 = vmul.f32 %v3643, 1.442695
    %v3646 = vpow.pop %v3645
    %v3647 = vmul.f32 %v3644, 1.442695
    %v3648 = vpow.pop %v3647
    %v3649 = vsel %vm237, %v3646, 0.0
    %3650 = vadd.xlane.f32.xlu0 %v3649
    %v3651 = vpop.xlane.xlu0 %3650
    %v3652 = vsel %vm237, %v3648, 0.0
    %3653 = vadd.xlane.f32.xlu0 %v3652
    %v3654 = vpop.xlane.xlu0 %3653
    %v3655 = vrcp.pop %v3651
    %v3656 = vrcp.pop %v3654
    %v3657 = vmul.f32 %v3646, %v3655
    %v3658 = vmul.f32 %v3648, %v3656
    %v3659 = vadd.f32 %v3518, %v3657
    %v3660 = vadd.f32 %v3519, %v3658
    %3661 = vrot.lane.b32.xlu0 %v2737, 104
    %v3662 = vpop.permute.xlu0 %3661
    %3663 = vrot.lane.b32.xlu0 %v2742, 104
    %v3664 = vpop.permute.xlu0 %3663
    %v3668 = vsel %vm237, %v3657, 0
    %v3671 = vsel %vm237, %v3658, 0
    %3673 = vmatprep.subr.mxu0 0.0
    %3674 = vmatpush1.msra.mxu0 %v3662
    %3675 = vmatprep.subr.mxu0 0.0
    %3676 = vmatpush1.msra.mxu0 %v3664
    %3677 = vmatprep.subr.mxu0 0.0
    %3678 = vmatpush1.msra.mxu0 0.0
    %3679 = vmatprep.subr.mxu0 0.0
    %3680 = vmatpush1.msra.mxu0 0.0
    %3681 = vmatprep.subr.mxu0 0.0
    %3682 = vmatpush1.msra.mxu0 0.0
    %3683 = vmatprep.subr.mxu0 0.0
    %3684 = vmatpush1.msra.mxu0 0.0
    %3685 = vmatprep.subr.mxu0 0.0
    %3686 = vmatpush1.msra.mxu0 0.0
    %3687 = vmatprep.subr.mxu0 0.0
    %3688 = vmatpush1.msra.mxu0 0.0
    %3689 = vmatprep.subr.mxu0 0.0
    %3690 = vmatpush1.msra.mxu0 0.0
    %3691 = vmatprep.subr.mxu0 0.0
    %3692 = vmatpush1.msra.mxu0 0.0
    %3693 = vmatprep.subr.mxu0 0.0
    %3694 = vmatpush1.msra.mxu0 0.0
    %3695 = vmatprep.subr.mxu0 0.0
    %3696 = vmatpush1.msra.mxu0 0.0
    %3697 = vmatprep.subr.mxu0 0.0
    %3698 = vmatpush1.msra.mxu0 0.0
    %3699 = vmatprep.subr.mxu0 0.0
    %3700 = vmatpush1.msra.mxu0 0.0
    %3701 = vmatprep.subr.mxu0 0.0
    %3702 = vmatpush1.msra.mxu0 0.0
    %3703 = vmatprep.subr.mxu0 0.0
    %3704 = vmatpush1.msra.mxu0 0.0
    %3705 = vmatprep.subr.mxu0 0.0
    %3706 = vmatpush1.msra.mxu0 0.0
    %3707 = vmatprep.subr.mxu0 0.0
    %3708 = vmatpush1.msra.mxu0 0.0
    %3709 = vmatprep.subr.mxu0 0.0
    %3710 = vmatpush1.msra.mxu0 0.0
    %3711 = vmatprep.subr.mxu0 0.0
    %3712 = vmatpush1.msra.mxu0 0.0
    %3713 = vmatprep.subr.mxu0 0.0
    %3714 = vmatpush1.msra.mxu0 0.0
    %3715 = vmatprep.subr.mxu0 0.0
    %3716 = vmatpush1.msra.mxu0 0.0
    %3717 = vmatprep.subr.mxu0 0.0
    %3718 = vmatpush1.msra.mxu0 0.0
    %3719 = vmatprep.subr.mxu0 0.0
    %3720 = vmatpush1.msra.mxu0 0.0
    %3721 = vmatprep.subr.mxu0 0.0
    %3722 = vmatpush1.msra.mxu0 0.0
    %3723 = vmatprep.subr.mxu0 0.0
    %3724 = vmatpush1.msra.mxu0 0.0
    %3725 = vmatprep.subr.mxu0 0.0
    %3726 = vmatpush1.msra.mxu0 0.0
    %3727 = vmatprep.subr.mxu0 0.0
    %3728 = vmatpush1.msra.mxu0 0.0
    %3729 = vmatprep.subr.mxu0 0.0
    %3730 = vmatpush1.msra.mxu0 0.0
    %3731 = vmatprep.subr.mxu0 0.0
    %3732 = vmatpush1.msra.mxu0 0.0
    %3733 = vmatprep.subr.mxu0 0.0
    %3734 = vmatpush1.msra.mxu0 0.0
    %3735 = vmatprep.subr.mxu0 0.0
    %3736 = vmatpush1.msra.mxu0 0.0
    %3737 = vmatprep.mubr.f32.mxu0 0.0
    %3738 = vmatmul.mubr.f32.gmra.mrb[0].mxu0 %v3668
    %v3739 = vpop.f32.mrb[0].mxu0
    %v3740 = vadd.f32 0.0, %v3739
    %v3741 = vpop.f32.mrb[0].mxu0
    %3742 = vmatprep.mubr.f32.mxu0 0.0
    %3743 = vmatmul.mubr.f32.gmra.mrb[0].mxu0 %v3671
    %v3744 = vpop.f32.mrb[0].mxu0
    %v3745 = vadd.f32 0.0, %v3744
    %v3746 = vpop.f32.mrb[0].mxu0
    %3747 = vdwg.mxu0
    %3750 = vrot.lane.b32.xlu0 %v3740, 24
    %v3751 = vpop.permute.xlu0 %3750
    %3752 = vrot.lane.b32.xlu0 %v3745, 24
    %v3753 = vpop.permute.xlu0 %3752
    %3756 = vst.msk [vmem:[#allocation2] sm:$0xff] %vm1195, %v3751
    %3757 = vst.msk [vmem:[#allocation2 + $0x8] sm:$0xff] %vm1195, %v3753
    %3758 = vset.pattern.permute.xlu0 39
    %3759 = vperm.xlu0 %3758, %v2737
    %v3760 = vpop.permute.xlu0 %3759
    %3762 = vset.pattern.permute.xlu0 39
    %3763 = vperm.xlu0 %3762, %v2742
    %v3764 = vpop.permute.xlu0 %3763
    %v3766 = vlaneseq
    %v3767 = vshrl.u32 %v3766, 7
    %v3768 = vsub.s32 7, %v3767
    %v3769 = vrot.slane %v2769, %v3768
    %v3770 = vadd.f32 %v3760, %v3769
    %v3771 = vadd.f32 %v3764, %v3769
    %v3772 = vmul.f32 %v3770, 0.2
    %v3773 = vmul.f32 %v3771, 0.2
    %v3774 = vmax.f32 %v3770, %v3772
    %v3775 = vmax.f32 %v3771, %v3773
    %v3776 = vadd.f32 %v3774, %v56
    %v3777 = vadd.f32 %v3775, %v57
    %v3778 = vsel %vm237, %v3776, -inf
    %3779 = vmax.xlane.f32.xlu0 %v3778
    %v3780 = vpop.xlane.xlu0 %3779
    %v3781 = vsel %vm237, %v3777, -inf
    %3782 = vmax.xlane.f32.xlu0 %v3781
    %v3783 = vpop.xlane.xlu0 %3782
    %v3784 = vsub.f32 %v3776, %v3780
    %v3785 = vsub.f32 %v3777, %v3783
    %v3786 = vmul.f32 %v3784, 1.442695
    %v3787 = vpow.pop %v3786
    %v3788 = vmul.f32 %v3785, 1.442695
    %v3789 = vpow.pop %v3788
    %v3790 = vsel %vm237, %v3787, 0.0
    %3791 = vadd.xlane.f32.xlu0 %v3790
    %v3792 = vpop.xlane.xlu0 %3791
    %v3793 = vsel %vm237, %v3789, 0.0
    %3794 = vadd.xlane.f32.xlu0 %v3793
    %v3795 = vpop.xlane.xlu0 %3794
    %v3796 = vrcp.pop %v3792
    %v3797 = vrcp.pop %v3795
    %v3798 = vmul.f32 %v3787, %v3796
    %v3799 = vmul.f32 %v3789, %v3797
    %v3800 = vadd.f32 %v3659, %v3798
    %v3801 = vadd.f32 %v3660, %v3799
    %3802 = vrot.lane.b32.xlu0 %v2737, 100
    %v3803 = vpop.permute.xlu0 %3802
    %3804 = vrot.lane.b32.xlu0 %v2742, 100
    %v3805 = vpop.permute.xlu0 %3804
    %v3809 = vsel %vm237, %v3798, 0
    %v3812 = vsel %vm237, %v3799, 0
    %3814 = vmatprep.subr.mxu0 0.0
    %3815 = vmatpush1.msra.mxu0 %v3803
    %3816 = vmatprep.subr.mxu0 0.0
    %3817 = vmatpush1.msra.mxu0 %v3805
    %3818 = vmatprep.subr.mxu0 0.0
    %3819 = vmatpush1.msra.mxu0 0.0
    %3820 = vmatprep.subr.mxu0 0.0
    %3821 = vmatpush1.msra.mxu0 0.0
    %3822 = vmatprep.subr.mxu0 0.0
    %3823 = vmatpush1.msra.mxu0 0.0
    %3824 = vmatprep.subr.mxu0 0.0
    %3825 = vmatpush1.msra.mxu0 0.0
    %3826 = vmatprep.subr.mxu0 0.0
    %3827 = vmatpush1.msra.mxu0 0.0
    %3828 = vmatprep.subr.mxu0 0.0
    %3829 = vmatpush1.msra.mxu0 0.0
    %3830 = vmatprep.subr.mxu0 0.0
    %3831 = vmatpush1.msra.mxu0 0.0
    %3832 = vmatprep.subr.mxu0 0.0
    %3833 = vmatpush1.msra.mxu0 0.0
    %3834 = vmatprep.subr.mxu0 0.0
    %3835 = vmatpush1.msra.mxu0 0.0
    %3836 = vmatprep.subr.mxu0 0.0
    %3837 = vmatpush1.msra.mxu0 0.0
    %3838 = vmatprep.subr.mxu0 0.0
    %3839 = vmatpush1.msra.mxu0 0.0
    %3840 = vmatprep.subr.mxu0 0.0
    %3841 = vmatpush1.msra.mxu0 0.0
    %3842 = vmatprep.subr.mxu0 0.0
    %3843 = vmatpush1.msra.mxu0 0.0
    %3844 = vmatprep.subr.mxu0 0.0
    %3845 = vmatpush1.msra.mxu0 0.0
    %3846 = vmatprep.subr.mxu0 0.0
    %3847 = vmatpush1.msra.mxu0 0.0
    %3848 = vmatprep.subr.mxu0 0.0
    %3849 = vmatpush1.msra.mxu0 0.0
    %3850 = vmatprep.subr.mxu0 0.0
    %3851 = vmatpush1.msra.mxu0 0.0
    %3852 = vmatprep.subr.mxu0 0.0
    %3853 = vmatpush1.msra.mxu0 0.0
    %3854 = vmatprep.subr.mxu0 0.0
    %3855 = vmatpush1.msra.mxu0 0.0
    %3856 = vmatprep.subr.mxu0 0.0
    %3857 = vmatpush1.msra.mxu0 0.0
    %3858 = vmatprep.subr.mxu0 0.0
    %3859 = vmatpush1.msra.mxu0 0.0
    %3860 = vmatprep.subr.mxu0 0.0
    %3861 = vmatpush1.msra.mxu0 0.0
    %3862 = vmatprep.subr.mxu0 0.0
    %3863 = vmatpush1.msra.mxu0 0.0
    %3864 = vmatprep.subr.mxu0 0.0
    %3865 = vmatpush1.msra.mxu0 0.0
    %3866 = vmatprep.subr.mxu0 0.0
    %3867 = vmatpush1.msra.mxu0 0.0
    %3868 = vmatprep.subr.mxu0 0.0
    %3869 = vmatpush1.msra.mxu0 0.0
    %3870 = vmatprep.subr.mxu0 0.0
    %3871 = vmatpush1.msra.mxu0 0.0
    %3872 = vmatprep.subr.mxu0 0.0
    %3873 = vmatpush1.msra.mxu0 0.0
    %3874 = vmatprep.subr.mxu0 0.0
    %3875 = vmatpush1.msra.mxu0 0.0
    %3876 = vmatprep.subr.mxu0 0.0
    %3877 = vmatpush1.msra.mxu0 0.0
    %3878 = vmatprep.mubr.f32.mxu0 0.0
    %3879 = vmatmul.mubr.f32.gmra.mrb[0].mxu0 %v3809
    %v3880 = vpop.f32.mrb[0].mxu0
    %v3881 = vadd.f32 0.0, %v3880
    %v3882 = vpop.f32.mrb[0].mxu0
    %3883 = vmatprep.mubr.f32.mxu0 0.0
    %3884 = vmatmul.mubr.f32.gmra.mrb[0].mxu0 %v3812
    %v3885 = vpop.f32.mrb[0].mxu0
    %v3886 = vadd.f32 0.0, %v3885
    %v3887 = vpop.f32.mrb[0].mxu0
    %3888 = vdwg.mxu0
    %3891 = vrot.lane.b32.xlu0 %v3881, 28
    %v3892 = vpop.permute.xlu0 %3891
    %3893 = vrot.lane.b32.xlu0 %v3886, 28
    %v3894 = vpop.permute.xlu0 %3893
    %3897 = vst.msk [vmem:[#allocation2] sm:$0xff] %vm1337, %v3892
    %3898 = vst.msk [vmem:[#allocation2 + $0x8] sm:$0xff] %vm1337, %v3894
    %v3899 = vld [vmem:[#allocation2] sm:$0xff]
    %v3900 = vld [vmem:[#allocation2 + $0x8] sm:$0xff]
    %v3901 = vld [vmem:[%s9] sm:$0x1]
    %v3903 = vlaneseq
    %v3904 = vshrl.u32 %v3903, 7
    %v3905 = vsub.s32 0, %v3904
    %v3906 = vrot.slane %v3901, %v3905
    %v3908 = vadd.f32 %v3899, %v3906
    %v3909 = vadd.f32 %v3900, %v3906
    %vm3910 = vcmp.gt.f32.partialorder %v3908, 0.0
    %vm3911 = vcmp.gt.f32.partialorder %v3909, 0.0
    %v3912 = vmin.f32 %v3908, 0.0
    %v3913 = vmin.f32 %v3909, 0.0
    %v3914 = vmul.f32 %v3912, 1.442695
    %v3915 = vpow.pop %v3914
    %v3916 = vmul.f32 %v3913, 1.442695
    %v3917 = vpow.pop %v3916
    %v3918 = vsub.f32 %v3915, 1.0
    %v3919 = vsub.f32 %v3917, 1.0
    %v3920 = vsel %vm3910, %v3908, %v3918
    %v3921 = vsel %vm3911, %v3909, %v3919
    %v3922 = vsel %vm2555, %v3920, 0.0
    %3923 = vadd.xlane.f32.xlu0 %v3922
    %v3924 = vpop.xlane.xlu0 %3923
    %v3925 = vsel %vm2555, %v3921, 0.0
    %3926 = vadd.xlane.f32.xlu0 %v3925
    %v3927 = vpop.xlane.xlu0 %3926
    %v3928 = vrcp.pop 32.0
    %v3929 = vmul.f32 %v3924, %v3928
    %v3930 = vmul.f32 %v3927, %v3928
    %v3931 = vsub.f32 %v3920, %v3929
    %v3932 = vsub.f32 %v3921, %v3930
    %v3933 = vmul.f32 %v3931, %v3931
    %v3934 = vmul.f32 %v3932, %v3932
    %v3935 = vsel %vm2555, %v3933, 0.0
    %3936 = vadd.xlane.f32.xlu0 %v3935
    %v3937 = vpop.xlane.xlu0 %3936
    %v3938 = vsel %vm2555, %v3934, 0.0
    %3939 = vadd.xlane.f32.xlu0 %v3938
    %v3940 = vpop.xlane.xlu0 %3939
    %v3941 = vmul.f32 %v3937, %v3928
    %v3942 = vmul.f32 %v3940, %v3928
    %v3943 = vadd.f32 %v3941, 1e-05
    %v3944 = vadd.f32 %v3942, 1e-05
    %v3945 = vrsqrt.pop %v3943
    %v3946 = vrsqrt.pop %v3944
    %v3947 = vmul.f32 %v3931, %v3945
    %v3948 = vmul.f32 %v3932, %v3946
    %v3949 = vld [vmem:[%s10] sm:$0x1]
    %v3951 = vlaneseq
    %v3952 = vshrl.u32 %v3951, 7
    %v3953 = vsub.s32 0, %v3952
    %v3954 = vrot.slane %v3949, %v3953
    %v3956 = vmul.f32 %v3947, %v3954
    %v3957 = vmul.f32 %v3948, %v3954
    %v3958 = vld [vmem:[%s11] sm:$0x1]
    %v3960 = vlaneseq
    %v3961 = vshrl.u32 %v3960, 7
    %v3962 = vsub.s32 0, %v3961
    %v3963 = vrot.slane %v3958, %v3962
    %v3965 = vadd.f32 %v3956, %v3963
    %v3966 = vadd.f32 %v3957, %v3963
    %3967 = vrot.lane.b32.xlu0 %v2737, 80
    %v3968 = vpop.permute.xlu0 %3967
    %3969 = vrot.lane.b32.xlu0 %v2742, 80
    %v3970 = vpop.permute.xlu0 %3969
    %v3973 = vadd.f32 %v3965, %v3968
    %v3974 = vadd.f32 %v3966, %v3970
    %v3975 = vmul.f32 %v3800, 0.125
    %v3976 = vmul.f32 %v3801, 0.125
    %v3978 = vsel %vm237, %v3975, 0
    %v3981 = vsel %vm237, %v3976, 0
    %3983 = vmatprep.subr.mxu0 0.0
    %3984 = vmatpush1.msra.mxu0 %v58
    %3985 = vmatprep.subr.mxu0 0.0
    %3986 = vmatpush1.msra.mxu0 %v59
    %3987 = vmatprep.subr.mxu0 0.0
    %3988 = vmatpush1.msra.mxu0 0.0
    %3989 = vmatprep.subr.mxu0 0.0
    %3990 = vmatpush1.msra.mxu0 0.0
    %3991 = vmatprep.subr.mxu0 0.0
    %3992 = vmatpush1.msra.mxu0 0.0
    %3993 = vmatprep.subr.mxu0 0.0
    %3994 = vmatpush1.msra.mxu0 0.0
    %3995 = vmatprep.subr.mxu0 0.0
    %3996 = vmatpush1.msra.mxu0 0.0
    %3997 = vmatprep.subr.mxu0 0.0
    %3998 = vmatpush1.msra.mxu0 0.0
    %3999 = vmatprep.subr.mxu0 0.0
    %4000 = vmatpush1.msra.mxu0 0.0
    %4001 = vmatprep.subr.mxu0 0.0
    %4002 = vmatpush1.msra.mxu0 0.0
    %4003 = vmatprep.subr.mxu0 0.0
    %4004 = vmatpush1.msra.mxu0 0.0
    %4005 = vmatprep.subr.mxu0 0.0
    %4006 = vmatpush1.msra.mxu0 0.0
    %4007 = vmatprep.subr.mxu0 0.0
    %4008 = vmatpush1.msra.mxu0 0.0
    %4009 = vmatprep.subr.mxu0 0.0
    %4010 = vmatpush1.msra.mxu0 0.0
    %4011 = vmatprep.subr.mxu0 0.0
    %4012 = vmatpush1.msra.mxu0 0.0
    %4013 = vmatprep.subr.mxu0 0.0
    %4014 = vmatpush1.msra.mxu0 0.0
    %4015 = vmatprep.subr.mxu0 0.0
    %4016 = vmatpush1.msra.mxu0 0.0
    %4017 = vmatprep.subr.mxu0 0.0
    %4018 = vmatpush1.msra.mxu0 0.0
    %4019 = vmatprep.subr.mxu0 0.0
    %4020 = vmatpush1.msra.mxu0 0.0
    %4021 = vmatprep.subr.mxu0 0.0
    %4022 = vmatpush1.msra.mxu0 0.0
    %4023 = vmatprep.subr.mxu0 0.0
    %4024 = vmatpush1.msra.mxu0 0.0
    %4025 = vmatprep.subr.mxu0 0.0
    %4026 = vmatpush1.msra.mxu0 0.0
    %4027 = vmatprep.subr.mxu0 0.0
    %4028 = vmatpush1.msra.mxu0 0.0
    %4029 = vmatprep.subr.mxu0 0.0
    %4030 = vmatpush1.msra.mxu0 0.0
    %4031 = vmatprep.subr.mxu0 0.0
    %4032 = vmatpush1.msra.mxu0 0.0
    %4033 = vmatprep.subr.mxu0 0.0
    %4034 = vmatpush1.msra.mxu0 0.0
    %4035 = vmatprep.subr.mxu0 0.0
    %4036 = vmatpush1.msra.mxu0 0.0
    %4037 = vmatprep.subr.mxu0 0.0
    %4038 = vmatpush1.msra.mxu0 0.0
    %4039 = vmatprep.subr.mxu0 0.0
    %4040 = vmatpush1.msra.mxu0 0.0
    %4041 = vmatprep.subr.mxu0 0.0
    %4042 = vmatpush1.msra.mxu0 0.0
    %4043 = vmatprep.subr.mxu0 0.0
    %4044 = vmatpush1.msra.mxu0 0.0
    %4045 = vmatprep.subr.mxu0 0.0
    %4046 = vmatpush1.msra.mxu0 0.0
    %4047 = vmatprep.mubr.f32.mxu0 0.0
    %4048 = vmatmul.mubr.f32.gmra.mrb[0].mxu0 %v3978
    %v4049 = vpop.f32.mrb[0].mxu0
    %v4050 = vadd.f32 0.0, %v4049
    %v4051 = vpop.f32.mrb[0].mxu0
    %4052 = vmatprep.mubr.f32.mxu0 0.0
    %4053 = vmatmul.mubr.f32.gmra.mrb[0].mxu0 %v3981
    %v4054 = vpop.f32.mrb[0].mxu0
    %v4055 = vadd.f32 0.0, %v4054
    %v4056 = vpop.f32.mrb[0].mxu0
    %4057 = vdwg.mxu0
    %v4058 = vmul.f32 %v4050, %v60
    %v4059 = vmul.f32 %v4055, %v61
    %v4060 = vsel %vm2555, %v4058, 0.0
    %v4061 = vsel %vm2555, %v4059, 0.0
    %v4062 = vadd.f32 %v4060, %v4061
    %v4063 = vrot.slane %v4062, 4
    %v4064 = vadd.f32 %v4062, %v4063
    %v4065 = vrot.slane %v4064, 2
    %v4066 = vadd.f32 %v4064, %v4065
    %v4067 = vrot.slane %v4066, 1
    %v4068 = vadd.f32 %v4066, %v4067
    %v4069 = vld [vmem:[%s12] sm:$0xff]
    %v4070 = vld [vmem:[%s12 + $0x8] sm:$0xff]
    %v4071 = vld [vmem:[%s12 + $0x10] sm:$0xff]
    %v4072 = vld [vmem:[%s12 + $0x18] sm:$0xff]
    %v4074 = vsel %vm2555, %v3973, 0
    %v4077 = vsel %vm2555, %v3974, 0
    %4079 = vmatprep.subr.mxu0 0.0
    %4080 = vmatpush1.msra.mxu0 %v4069
    %4081 = vmatprep.subr.mxu0 0.0
    %4082 = vmatpush1.msra.mxu0 %v4070
    %4083 = vmatprep.subr.mxu0 0.0
    %4084 = vmatpush1.msra.mxu0 %v4071
    %4085 = vmatprep.subr.mxu0 0.0
    %4086 = vmatpush1.msra.mxu0 %v4072
    %4087 = vmatprep.subr.mxu0 0.0
    %4088 = vmatpush1.msra.mxu0 0.0
    %4089 = vmatprep.subr.mxu0 0.0
    %4090 = vmatpush1.msra.mxu0 0.0
    %4091 = vmatprep.subr.mxu0 0.0
    %4092 = vmatpush1.msra.mxu0 0.0
    %4093 = vmatprep.subr.mxu0 0.0
    %4094 = vmatpush1.msra.mxu0 0.0
    %4095 = vmatprep.subr.mxu0 0.0
    %4096 = vmatpush1.msra.mxu0 0.0
    %4097 = vmatprep.subr.mxu0 0.0
    %4098 = vmatpush1.msra.mxu0 0.0
    %4099 = vmatprep.subr.mxu0 0.0
    %4100 = vmatpush1.msra.mxu0 0.0
    %4101 = vmatprep.subr.mxu0 0.0
    %4102 = vmatpush1.msra.mxu0 0.0
    %4103 = vmatprep.subr.mxu0 0.0
    %4104 = vmatpush1.msra.mxu0 0.0
    %4105 = vmatprep.subr.mxu0 0.0
    %4106 = vmatpush1.msra.mxu0 0.0
    %4107 = vmatprep.subr.mxu0 0.0
    %4108 = vmatpush1.msra.mxu0 0.0
    %4109 = vmatprep.subr.mxu0 0.0
    %4110 = vmatpush1.msra.mxu0 0.0
    %4111 = vmatprep.subr.mxu0 0.0
    %4112 = vmatpush1.msra.mxu0 0.0
    %4113 = vmatprep.subr.mxu0 0.0
    %4114 = vmatpush1.msra.mxu0 0.0
    %4115 = vmatprep.subr.mxu0 0.0
    %4116 = vmatpush1.msra.mxu0 0.0
    %4117 = vmatprep.subr.mxu0 0.0
    %4118 = vmatpush1.msra.mxu0 0.0
    %4119 = vmatprep.subr.mxu0 0.0
    %4120 = vmatpush1.msra.mxu0 0.0
    %4121 = vmatprep.subr.mxu0 0.0
    %4122 = vmatpush1.msra.mxu0 0.0
    %4123 = vmatprep.subr.mxu0 0.0
    %4124 = vmatpush1.msra.mxu0 0.0
    %4125 = vmatprep.subr.mxu0 0.0
    %4126 = vmatpush1.msra.mxu0 0.0
    %4127 = vmatprep.subr.mxu0 0.0
    %4128 = vmatpush1.msra.mxu0 0.0
    %4129 = vmatprep.subr.mxu0 0.0
    %4130 = vmatpush1.msra.mxu0 0.0
    %4131 = vmatprep.subr.mxu0 0.0
    %4132 = vmatpush1.msra.mxu0 0.0
    %4133 = vmatprep.subr.mxu0 0.0
    %4134 = vmatpush1.msra.mxu0 0.0
    %4135 = vmatprep.subr.mxu0 0.0
    %4136 = vmatpush1.msra.mxu0 0.0
    %4137 = vmatprep.subr.mxu0 0.0
    %4138 = vmatpush1.msra.mxu0 0.0
    %4139 = vmatprep.subr.mxu0 0.0
    %4140 = vmatpush1.msra.mxu0 0.0
    %4141 = vmatprep.subr.mxu0 0.0
    %4142 = vmatpush1.msra.mxu0 0.0
    %4143 = vmatprep.mubr.f32.mxu0 0.0
    %4144 = vmatmul.mubr.f32.gmra.mrb[0].mxu0 %v4074
    %v4145 = vpop.f32.mrb[0].mxu0
    %v4146 = vadd.f32 0.0, %v4145
    %v4147 = vpop.f32.mrb[0].mxu0
    %4148 = vmatprep.mubr.f32.mxu0 0.0
    %4149 = vmatmul.mubr.f32.gmra.mrb[0].mxu0 %v4077
    %v4150 = vpop.f32.mrb[0].mxu0
    %v4151 = vadd.f32 0.0, %v4150
    %v4152 = vpop.f32.mrb[0].mxu0
    %4153 = vdwg.mxu0
    %4156 = vrot.lane.b32.xlu0 %v4146, 108
    %v4157 = vpop.permute.xlu0 %4156
    %4158 = vrot.lane.b32.xlu0 %v4151, 108
    %v4159 = vpop.permute.xlu0 %4158
    %4162 = vxpose.xlu0.b32.start [1/16] %v4157, 128
    %4163 = vxpose.xlu0.b32.cont [2/16] %v4159, 128
    %4164 = vxpose.xlu0.b32.cont [3/16] 0.0, 128
    %4165 = vxpose.xlu0.b32.cont [4/16] 0.0, 128
    %4166 = vxpose.xlu0.b32.cont [5/16] 0.0, 128
    %4167 = vxpose.xlu0.b32.cont [6/16] 0.0, 128
    %4168 = vxpose.xlu0.b32.cont [7/16] 0.0, 128
    %4169 = vxpose.xlu0.b32.cont [8/16] 0.0, 128
    %4170 = vxpose.xlu0.b32.cont [9/16] 0.0, 128
    %4171 = vxpose.xlu0.b32.cont [10/16] 0.0, 128
    %4172 = vxpose.xlu0.b32.cont [11/16] 0.0, 128
    %4173 = vxpose.xlu0.b32.cont [12/16] 0.0, 128
    %4174 = vxpose.xlu0.b32.cont [13/16] 0.0, 128
    %4175 = vxpose.xlu0.b32.cont [14/16] 0.0, 128
    %4176 = vxpose.xlu0.b32.cont [15/16] 0.0, 128
    %4177 = vxpose.xlu0.b32.end [16/16] 0.0, 128
    %v4178 = vpop.trf.xlu0
    %v4179 = vpop.trf.xlu0
    %v4180 = vpop.trf.xlu0
    %v4181 = vpop.trf.xlu0
    %v4182 = vpop.trf.xlu0
    %v4183 = vpop.trf.xlu0
    %v4184 = vpop.trf.xlu0
    %v4185 = vpop.trf.xlu0
    %v4186 = vpop.trf.xlu0
    %v4187 = vpop.trf.xlu0
    %v4188 = vpop.trf.xlu0
    %v4189 = vpop.trf.xlu0
    %v4190 = vpop.trf.xlu0
    %v4191 = vpop.trf.xlu0
    %v4192 = vpop.trf.xlu0
    %v4193 = vpop.trf.xlu0
    %4194 = vset.pattern.permute.xlu0 16
    %4195 = vperm.xlu0 %4194, %v4146
    %v4196 = vpop.permute.xlu0 %4195
    %4198 = vset.pattern.permute.xlu0 16
    %4199 = vperm.xlu0 %4198, %v4151
    %v4200 = vpop.permute.xlu0 %4199
    %v4202 = vlaneseq
    %v4203 = vshrl.u32 %v4202, 7
    %v4204 = vsub.s32 0, %v4203
    %v4205 = vrot.slane %v4178, %v4204
    %v4206 = vadd.f32 %v4196, %v4205
    %v4207 = vadd.f32 %v4200, %v4205
    %v4208 = vmul.f32 %v4206, 0.2
    %v4209 = vmul.f32 %v4207, 0.2
    %v4210 = vmax.f32 %v4206, %v4208
    %v4211 = vmax.f32 %v4207, %v4209
    %v4212 = vadd.f32 %v4210, %v56
    %v4213 = vadd.f32 %v4211, %v57
    %v4214 = vsel %vm237, %v4212, -inf
    %4215 = vmax.xlane.f32.xlu0 %v4214
    %v4216 = vpop.xlane.xlu0 %4215
    %v4217 = vsel %vm237, %v4213, -inf
    %4218 = vmax.xlane.f32.xlu0 %v4217
    %v4219 = vpop.xlane.xlu0 %4218
    %v4220 = vsub.f32 %v4212, %v4216
    %v4221 = vsub.f32 %v4213, %v4219
    %v4222 = vmul.f32 %v4220, 1.442695
    %v4223 = vpow.pop %v4222
    %v4224 = vmul.f32 %v4221, 1.442695
    %v4225 = vpow.pop %v4224
    %v4226 = vsel %vm237, %v4223, 0.0
    %4227 = vadd.xlane.f32.xlu0 %v4226
    %v4228 = vpop.xlane.xlu0 %4227
    %v4229 = vsel %vm237, %v4225, 0.0
    %4230 = vadd.xlane.f32.xlu0 %v4229
    %v4231 = vpop.xlane.xlu0 %4230
    %v4232 = vrcp.pop %v4228
    %v4233 = vrcp.pop %v4231
    %v4234 = vmul.f32 %v4223, %v4232
    %v4235 = vmul.f32 %v4225, %v4233
    %v4236 = vadd.f32 %v4234, 0.0
    %v4237 = vadd.f32 %v4235, 0.0
    %v4239 = vsel %vm237, %v4234, 0
    %v4242 = vsel %vm237, %v4235, 0
    %4244 = vmatprep.subr.mxu0 0.0
    %4245 = vmatpush1.msra.mxu0 %v4146
    %4246 = vmatprep.subr.mxu0 0.0
    %4247 = vmatpush1.msra.mxu0 %v4151
    %4248 = vmatprep.subr.mxu0 0.0
    %4249 = vmatpush1.msra.mxu0 0.0
    %4250 = vmatprep.subr.mxu0 0.0
    %4251 = vmatpush1.msra.mxu0 0.0
    %4252 = vmatprep.subr.mxu0 0.0
    %4253 = vmatpush1.msra.mxu0 0.0
    %4254 = vmatprep.subr.mxu0 0.0
    %4255 = vmatpush1.msra.mxu0 0.0
    %4256 = vmatprep.subr.mxu0 0.0
    %4257 = vmatpush1.msra.mxu0 0.0
    %4258 = vmatprep.subr.mxu0 0.0
    %4259 = vmatpush1.msra.mxu0 0.0
    %4260 = vmatprep.subr.mxu0 0.0
    %4261 = vmatpush1.msra.mxu0 0.0
    %4262 = vmatprep.subr.mxu0 0.0
    %4263 = vmatpush1.msra.mxu0 0.0
    %4264 = vmatprep.subr.mxu0 0.0
    %4265 = vmatpush1.msra.mxu0 0.0
    %4266 = vmatprep.subr.mxu0 0.0
    %4267 = vmatpush1.msra.mxu0 0.0
    %4268 = vmatprep.subr.mxu0 0.0
    %4269 = vmatpush1.msra.mxu0 0.0
    %4270 = vmatprep.subr.mxu0 0.0
    %4271 = vmatpush1.msra.mxu0 0.0
    %4272 = vmatprep.subr.mxu0 0.0
    %4273 = vmatpush1.msra.mxu0 0.0
    %4274 = vmatprep.subr.mxu0 0.0
    %4275 = vmatpush1.msra.mxu0 0.0
    %4276 = vmatprep.subr.mxu0 0.0
    %4277 = vmatpush1.msra.mxu0 0.0
    %4278 = vmatprep.subr.mxu0 0.0
    %4279 = vmatpush1.msra.mxu0 0.0
    %4280 = vmatprep.subr.mxu0 0.0
    %4281 = vmatpush1.msra.mxu0 0.0
    %4282 = vmatprep.subr.mxu0 0.0
    %4283 = vmatpush1.msra.mxu0 0.0
    %4284 = vmatprep.subr.mxu0 0.0
    %4285 = vmatpush1.msra.mxu0 0.0
    %4286 = vmatprep.subr.mxu0 0.0
    %4287 = vmatpush1.msra.mxu0 0.0
    %4288 = vmatprep.subr.mxu0 0.0
    %4289 = vmatpush1.msra.mxu0 0.0
    %4290 = vmatprep.subr.mxu0 0.0
    %4291 = vmatpush1.msra.mxu0 0.0
    %4292 = vmatprep.subr.mxu0 0.0
    %4293 = vmatpush1.msra.mxu0 0.0
    %4294 = vmatprep.subr.mxu0 0.0
    %4295 = vmatpush1.msra.mxu0 0.0
    %4296 = vmatprep.subr.mxu0 0.0
    %4297 = vmatpush1.msra.mxu0 0.0
    %4298 = vmatprep.subr.mxu0 0.0
    %4299 = vmatpush1.msra.mxu0 0.0
    %4300 = vmatprep.subr.mxu0 0.0
    %4301 = vmatpush1.msra.mxu0 0.0
    %4302 = vmatprep.subr.mxu0 0.0
    %4303 = vmatpush1.msra.mxu0 0.0
    %4304 = vmatprep.subr.mxu0 0.0
    %4305 = vmatpush1.msra.mxu0 0.0
    %4306 = vmatprep.subr.mxu0 0.0
    %4307 = vmatpush1.msra.mxu0 0.0
    %4308 = vmatprep.mubr.f32.mxu0 0.0
    %4309 = vmatmul.mubr.f32.gmra.mrb[0].mxu0 %v4239
    %v4310 = vpop.f32.mrb[0].mxu0
    %v4311 = vadd.f32 0.0, %v4310
    %v4312 = vpop.f32.mrb[0].mxu0
    %4313 = vmatprep.mubr.f32.mxu0 0.0
    %4314 = vmatmul.mubr.f32.gmra.mrb[0].mxu0 %v4242
    %v4315 = vpop.f32.mrb[0].mxu0
    %v4316 = vadd.f32 0.0, %v4315
    %v4317 = vpop.f32.mrb[0].mxu0
    %4318 = vdwg.mxu0
    %4319 = vst.msk [vmem:[#allocation2] sm:$0xff] %vm343, %v4311
    %4320 = vst.msk [vmem:[#allocation2 + $0x8] sm:$0xff] %vm343, %v4316
    %4321 = vset.pattern.permute.xlu0 17
    %4322 = vperm.xlu0 %4321, %v4146
    %v4323 = vpop.permute.xlu0 %4322
    %4325 = vset.pattern.permute.xlu0 17
    %4326 = vperm.xlu0 %4325, %v4151
    %v4327 = vpop.permute.xlu0 %4326
    %v4329 = vlaneseq
    %v4330 = vshrl.u32 %v4329, 7
    %v4331 = vsub.s32 1, %v4330
    %v4332 = vrot.slane %v4178, %v4331
    %v4333 = vadd.f32 %v4323, %v4332
    %v4334 = vadd.f32 %v4327, %v4332
    %v4335 = vmul.f32 %v4333, 0.2
    %v4336 = vmul.f32 %v4334, 0.2
    %v4337 = vmax.f32 %v4333, %v4335
    %v4338 = vmax.f32 %v4334, %v4336
    %v4339 = vadd.f32 %v4337, %v56
    %v4340 = vadd.f32 %v4338, %v57
    %v4341 = vsel %vm237, %v4339, -inf
    %4342 = vmax.xlane.f32.xlu0 %v4341
    %v4343 = vpop.xlane.xlu0 %4342
    %v4344 = vsel %vm237, %v4340, -inf
    %4345 = vmax.xlane.f32.xlu0 %v4344
    %v4346 = vpop.xlane.xlu0 %4345
    %v4347 = vsub.f32 %v4339, %v4343
    %v4348 = vsub.f32 %v4340, %v4346
    %v4349 = vmul.f32 %v4347, 1.442695
    %v4350 = vpow.pop %v4349
    %v4351 = vmul.f32 %v4348, 1.442695
    %v4352 = vpow.pop %v4351
    %v4353 = vsel %vm237, %v4350, 0.0
    %4354 = vadd.xlane.f32.xlu0 %v4353
    %v4355 = vpop.xlane.xlu0 %4354
    %v4356 = vsel %vm237, %v4352, 0.0
    %4357 = vadd.xlane.f32.xlu0 %v4356
    %v4358 = vpop.xlane.xlu0 %4357
    %v4359 = vrcp.pop %v4355
    %v4360 = vrcp.pop %v4358
    %v4361 = vmul.f32 %v4350, %v4359
    %v4362 = vmul.f32 %v4352, %v4360
    %v4363 = vadd.f32 %v4236, %v4361
    %v4364 = vadd.f32 %v4237, %v4362
    %4365 = vrot.lane.b32.xlu0 %v4146, 124
    %v4366 = vpop.permute.xlu0 %4365
    %4367 = vrot.lane.b32.xlu0 %v4151, 124
    %v4368 = vpop.permute.xlu0 %4367
    %v4372 = vsel %vm237, %v4361, 0
    %v4375 = vsel %vm237, %v4362, 0
    %4377 = vmatprep.subr.mxu0 0.0
    %4378 = vmatpush1.msra.mxu0 %v4366
    %4379 = vmatprep.subr.mxu0 0.0
    %4380 = vmatpush1.msra.mxu0 %v4368
    %4381 = vmatprep.subr.mxu0 0.0
    %4382 = vmatpush1.msra.mxu0 0.0
    %4383 = vmatprep.subr.mxu0 0.0
    %4384 = vmatpush1.msra.mxu0 0.0
    %4385 = vmatprep.subr.mxu0 0.0
    %4386 = vmatpush1.msra.mxu0 0.0
    %4387 = vmatprep.subr.mxu0 0.0
    %4388 = vmatpush1.msra.mxu0 0.0
    %4389 = vmatprep.subr.mxu0 0.0
    %4390 = vmatpush1.msra.mxu0 0.0
    %4391 = vmatprep.subr.mxu0 0.0
    %4392 = vmatpush1.msra.mxu0 0.0
    %4393 = vmatprep.subr.mxu0 0.0
    %4394 = vmatpush1.msra.mxu0 0.0
    %4395 = vmatprep.subr.mxu0 0.0
    %4396 = vmatpush1.msra.mxu0 0.0
    %4397 = vmatprep.subr.mxu0 0.0
    %4398 = vmatpush1.msra.mxu0 0.0
    %4399 = vmatprep.subr.mxu0 0.0
    %4400 = vmatpush1.msra.mxu0 0.0
    %4401 = vmatprep.subr.mxu0 0.0
    %4402 = vmatpush1.msra.mxu0 0.0
    %4403 = vmatprep.subr.mxu0 0.0
    %4404 = vmatpush1.msra.mxu0 0.0
    %4405 = vmatprep.subr.mxu0 0.0
    %4406 = vmatpush1.msra.mxu0 0.0
    %4407 = vmatprep.subr.mxu0 0.0
    %4408 = vmatpush1.msra.mxu0 0.0
    %4409 = vmatprep.subr.mxu0 0.0
    %4410 = vmatpush1.msra.mxu0 0.0
    %4411 = vmatprep.subr.mxu0 0.0
    %4412 = vmatpush1.msra.mxu0 0.0
    %4413 = vmatprep.subr.mxu0 0.0
    %4414 = vmatpush1.msra.mxu0 0.0
    %4415 = vmatprep.subr.mxu0 0.0
    %4416 = vmatpush1.msra.mxu0 0.0
    %4417 = vmatprep.subr.mxu0 0.0
    %4418 = vmatpush1.msra.mxu0 0.0
    %4419 = vmatprep.subr.mxu0 0.0
    %4420 = vmatpush1.msra.mxu0 0.0
    %4421 = vmatprep.subr.mxu0 0.0
    %4422 = vmatpush1.msra.mxu0 0.0
    %4423 = vmatprep.subr.mxu0 0.0
    %4424 = vmatpush1.msra.mxu0 0.0
    %4425 = vmatprep.subr.mxu0 0.0
    %4426 = vmatpush1.msra.mxu0 0.0
    %4427 = vmatprep.subr.mxu0 0.0
    %4428 = vmatpush1.msra.mxu0 0.0
    %4429 = vmatprep.subr.mxu0 0.0
    %4430 = vmatpush1.msra.mxu0 0.0
    %4431 = vmatprep.subr.mxu0 0.0
    %4432 = vmatpush1.msra.mxu0 0.0
    %4433 = vmatprep.subr.mxu0 0.0
    %4434 = vmatpush1.msra.mxu0 0.0
    %4435 = vmatprep.subr.mxu0 0.0
    %4436 = vmatpush1.msra.mxu0 0.0
    %4437 = vmatprep.subr.mxu0 0.0
    %4438 = vmatpush1.msra.mxu0 0.0
    %4439 = vmatprep.subr.mxu0 0.0
    %4440 = vmatpush1.msra.mxu0 0.0
    %4441 = vmatprep.mubr.f32.mxu0 0.0
    %4442 = vmatmul.mubr.f32.gmra.mrb[0].mxu0 %v4372
    %v4443 = vpop.f32.mrb[0].mxu0
    %v4444 = vadd.f32 0.0, %v4443
    %v4445 = vpop.f32.mrb[0].mxu0
    %4446 = vmatprep.mubr.f32.mxu0 0.0
    %4447 = vmatmul.mubr.f32.gmra.mrb[0].mxu0 %v4375
    %v4448 = vpop.f32.mrb[0].mxu0
    %v4449 = vadd.f32 0.0, %v4448
    %v4450 = vpop.f32.mrb[0].mxu0
    %4451 = vdwg.mxu0
    %4454 = vrot.lane.b32.xlu0 %v4444, 4
    %v4455 = vpop.permute.xlu0 %4454
    %4456 = vrot.lane.b32.xlu0 %v4449, 4
    %v4457 = vpop.permute.xlu0 %4456
    %4460 = vst.msk [vmem:[#allocation2] sm:$0xff] %vm485, %v4455
    %4461 = vst.msk [vmem:[#allocation2 + $0x8] sm:$0xff] %vm485, %v4457
    %4462 = vset.pattern.permute.xlu0 18
    %4463 = vperm.xlu0 %4462, %v4146
    %v4464 = vpop.permute.xlu0 %4463
    %4466 = vset.pattern.permute.xlu0 18
    %4467 = vperm.xlu0 %4466, %v4151
    %v4468 = vpop.permute.xlu0 %4467
    %v4470 = vlaneseq
    %v4471 = vshrl.u32 %v4470, 7
    %v4472 = vsub.s32 2, %v4471
    %v4473 = vrot.slane %v4178, %v4472
    %v4474 = vadd.f32 %v4464, %v4473
    %v4475 = vadd.f32 %v4468, %v4473
    %v4476 = vmul.f32 %v4474, 0.2
    %v4477 = vmul.f32 %v4475, 0.2
    %v4478 = vmax.f32 %v4474, %v4476
    %v4479 = vmax.f32 %v4475, %v4477
    %v4480 = vadd.f32 %v4478, %v56
    %v4481 = vadd.f32 %v4479, %v57
    %v4482 = vsel %vm237, %v4480, -inf
    %4483 = vmax.xlane.f32.xlu0 %v4482
    %v4484 = vpop.xlane.xlu0 %4483
    %v4485 = vsel %vm237, %v4481, -inf
    %4486 = vmax.xlane.f32.xlu0 %v4485
    %v4487 = vpop.xlane.xlu0 %4486
    %v4488 = vsub.f32 %v4480, %v4484
    %v4489 = vsub.f32 %v4481, %v4487
    %v4490 = vmul.f32 %v4488, 1.442695
    %v4491 = vpow.pop %v4490
    %v4492 = vmul.f32 %v4489, 1.442695
    %v4493 = vpow.pop %v4492
    %v4494 = vsel %vm237, %v4491, 0.0
    %4495 = vadd.xlane.f32.xlu0 %v4494
    %v4496 = vpop.xlane.xlu0 %4495
    %v4497 = vsel %vm237, %v4493, 0.0
    %4498 = vadd.xlane.f32.xlu0 %v4497
    %v4499 = vpop.xlane.xlu0 %4498
    %v4500 = vrcp.pop %v4496
    %v4501 = vrcp.pop %v4499
    %v4502 = vmul.f32 %v4491, %v4500
    %v4503 = vmul.f32 %v4493, %v4501
    %v4504 = vadd.f32 %v4363, %v4502
    %v4505 = vadd.f32 %v4364, %v4503
    %4506 = vrot.lane.b32.xlu0 %v4146, 120
    %v4507 = vpop.permute.xlu0 %4506
    %4508 = vrot.lane.b32.xlu0 %v4151, 120
    %v4509 = vpop.permute.xlu0 %4508
    %v4513 = vsel %vm237, %v4502, 0
    %v4516 = vsel %vm237, %v4503, 0
    %4518 = vmatprep.subr.mxu0 0.0
    %4519 = vmatpush1.msra.mxu0 %v4507
    %4520 = vmatprep.subr.mxu0 0.0
    %4521 = vmatpush1.msra.mxu0 %v4509
    %4522 = vmatprep.subr.mxu0 0.0
    %4523 = vmatpush1.msra.mxu0 0.0
    %4524 = vmatprep.subr.mxu0 0.0
    %4525 = vmatpush1.msra.mxu0 0.0
    %4526 = vmatprep.subr.mxu0 0.0
    %4527 = vmatpush1.msra.mxu0 0.0
    %4528 = vmatprep.subr.mxu0 0.0
    %4529 = vmatpush1.msra.mxu0 0.0
    %4530 = vmatprep.subr.mxu0 0.0
    %4531 = vmatpush1.msra.mxu0 0.0
    %4532 = vmatprep.subr.mxu0 0.0
    %4533 = vmatpush1.msra.mxu0 0.0
    %4534 = vmatprep.subr.mxu0 0.0
    %4535 = vmatpush1.msra.mxu0 0.0
    %4536 = vmatprep.subr.mxu0 0.0
    %4537 = vmatpush1.msra.mxu0 0.0
    %4538 = vmatprep.subr.mxu0 0.0
    %4539 = vmatpush1.msra.mxu0 0.0
    %4540 = vmatprep.subr.mxu0 0.0
    %4541 = vmatpush1.msra.mxu0 0.0
    %4542 = vmatprep.subr.mxu0 0.0
    %4543 = vmatpush1.msra.mxu0 0.0
    %4544 = vmatprep.subr.mxu0 0.0
    %4545 = vmatpush1.msra.mxu0 0.0
    %4546 = vmatprep.subr.mxu0 0.0
    %4547 = vmatpush1.msra.mxu0 0.0
    %4548 = vmatprep.subr.mxu0 0.0
    %4549 = vmatpush1.msra.mxu0 0.0
    %4550 = vmatprep.subr.mxu0 0.0
    %4551 = vmatpush1.msra.mxu0 0.0
    %4552 = vmatprep.subr.mxu0 0.0
    %4553 = vmatpush1.msra.mxu0 0.0
    %4554 = vmatprep.subr.mxu0 0.0
    %4555 = vmatpush1.msra.mxu0 0.0
    %4556 = vmatprep.subr.mxu0 0.0
    %4557 = vmatpush1.msra.mxu0 0.0
    %4558 = vmatprep.subr.mxu0 0.0
    %4559 = vmatpush1.msra.mxu0 0.0
    %4560 = vmatprep.subr.mxu0 0.0
    %4561 = vmatpush1.msra.mxu0 0.0
    %4562 = vmatprep.subr.mxu0 0.0
    %4563 = vmatpush1.msra.mxu0 0.0
    %4564 = vmatprep.subr.mxu0 0.0
    %4565 = vmatpush1.msra.mxu0 0.0
    %4566 = vmatprep.subr.mxu0 0.0
    %4567 = vmatpush1.msra.mxu0 0.0
    %4568 = vmatprep.subr.mxu0 0.0
    %4569 = vmatpush1.msra.mxu0 0.0
    %4570 = vmatprep.subr.mxu0 0.0
    %4571 = vmatpush1.msra.mxu0 0.0
    %4572 = vmatprep.subr.mxu0 0.0
    %4573 = vmatpush1.msra.mxu0 0.0
    %4574 = vmatprep.subr.mxu0 0.0
    %4575 = vmatpush1.msra.mxu0 0.0
    %4576 = vmatprep.subr.mxu0 0.0
    %4577 = vmatpush1.msra.mxu0 0.0
    %4578 = vmatprep.subr.mxu0 0.0
    %4579 = vmatpush1.msra.mxu0 0.0
    %4580 = vmatprep.subr.mxu0 0.0
    %4581 = vmatpush1.msra.mxu0 0.0
    %4582 = vmatprep.mubr.f32.mxu0 0.0
    %4583 = vmatmul.mubr.f32.gmra.mrb[0].mxu0 %v4513
    %v4584 = vpop.f32.mrb[0].mxu0
    %v4585 = vadd.f32 0.0, %v4584
    %v4586 = vpop.f32.mrb[0].mxu0
    %4587 = vmatprep.mubr.f32.mxu0 0.0
    %4588 = vmatmul.mubr.f32.gmra.mrb[0].mxu0 %v4516
    %v4589 = vpop.f32.mrb[0].mxu0
    %v4590 = vadd.f32 0.0, %v4589
    %v4591 = vpop.f32.mrb[0].mxu0
    %4592 = vdwg.mxu0
    %4595 = vrot.lane.b32.xlu0 %v4585, 8
    %v4596 = vpop.permute.xlu0 %4595
    %4597 = vrot.lane.b32.xlu0 %v4590, 8
    %v4598 = vpop.permute.xlu0 %4597
    %4601 = vst.msk [vmem:[#allocation2] sm:$0xff] %vm627, %v4596
    %4602 = vst.msk [vmem:[#allocation2 + $0x8] sm:$0xff] %vm627, %v4598
    %4603 = vset.pattern.permute.xlu0 19
    %4604 = vperm.xlu0 %4603, %v4146
    %v4605 = vpop.permute.xlu0 %4604
    %4607 = vset.pattern.permute.xlu0 19
    %4608 = vperm.xlu0 %4607, %v4151
    %v4609 = vpop.permute.xlu0 %4608
    %v4611 = vlaneseq
    %v4612 = vshrl.u32 %v4611, 7
    %v4613 = vsub.s32 3, %v4612
    %v4614 = vrot.slane %v4178, %v4613
    %v4615 = vadd.f32 %v4605, %v4614
    %v4616 = vadd.f32 %v4609, %v4614
    %v4617 = vmul.f32 %v4615, 0.2
    %v4618 = vmul.f32 %v4616, 0.2
    %v4619 = vmax.f32 %v4615, %v4617
    %v4620 = vmax.f32 %v4616, %v4618
    %v4621 = vadd.f32 %v4619, %v56
    %v4622 = vadd.f32 %v4620, %v57
    %v4623 = vsel %vm237, %v4621, -inf
    %4624 = vmax.xlane.f32.xlu0 %v4623
    %v4625 = vpop.xlane.xlu0 %4624
    %v4626 = vsel %vm237, %v4622, -inf
    %4627 = vmax.xlane.f32.xlu0 %v4626
    %v4628 = vpop.xlane.xlu0 %4627
    %v4629 = vsub.f32 %v4621, %v4625
    %v4630 = vsub.f32 %v4622, %v4628
    %v4631 = vmul.f32 %v4629, 1.442695
    %v4632 = vpow.pop %v4631
    %v4633 = vmul.f32 %v4630, 1.442695
    %v4634 = vpow.pop %v4633
    %v4635 = vsel %vm237, %v4632, 0.0
    %4636 = vadd.xlane.f32.xlu0 %v4635
    %v4637 = vpop.xlane.xlu0 %4636
    %v4638 = vsel %vm237, %v4634, 0.0
    %4639 = vadd.xlane.f32.xlu0 %v4638
    %v4640 = vpop.xlane.xlu0 %4639
    %v4641 = vrcp.pop %v4637
    %v4642 = vrcp.pop %v4640
    %v4643 = vmul.f32 %v4632, %v4641
    %v4644 = vmul.f32 %v4634, %v4642
    %v4645 = vadd.f32 %v4504, %v4643
    %v4646 = vadd.f32 %v4505, %v4644
    %4647 = vrot.lane.b32.xlu0 %v4146, 116
    %v4648 = vpop.permute.xlu0 %4647
    %4649 = vrot.lane.b32.xlu0 %v4151, 116
    %v4650 = vpop.permute.xlu0 %4649
    %v4654 = vsel %vm237, %v4643, 0
    %v4657 = vsel %vm237, %v4644, 0
    %4659 = vmatprep.subr.mxu0 0.0
    %4660 = vmatpush1.msra.mxu0 %v4648
    %4661 = vmatprep.subr.mxu0 0.0
    %4662 = vmatpush1.msra.mxu0 %v4650
    %4663 = vmatprep.subr.mxu0 0.0
    %4664 = vmatpush1.msra.mxu0 0.0
    %4665 = vmatprep.subr.mxu0 0.0
    %4666 = vmatpush1.msra.mxu0 0.0
    %4667 = vmatprep.subr.mxu0 0.0
    %4668 = vmatpush1.msra.mxu0 0.0
    %4669 = vmatprep.subr.mxu0 0.0
    %4670 = vmatpush1.msra.mxu0 0.0
    %4671 = vmatprep.subr.mxu0 0.0
    %4672 = vmatpush1.msra.mxu0 0.0
    %4673 = vmatprep.subr.mxu0 0.0
    %4674 = vmatpush1.msra.mxu0 0.0
    %4675 = vmatprep.subr.mxu0 0.0
    %4676 = vmatpush1.msra.mxu0 0.0
    %4677 = vmatprep.subr.mxu0 0.0
    %4678 = vmatpush1.msra.mxu0 0.0
    %4679 = vmatprep.subr.mxu0 0.0
    %4680 = vmatpush1.msra.mxu0 0.0
    %4681 = vmatprep.subr.mxu0 0.0
    %4682 = vmatpush1.msra.mxu0 0.0
    %4683 = vmatprep.subr.mxu0 0.0
    %4684 = vmatpush1.msra.mxu0 0.0
    %4685 = vmatprep.subr.mxu0 0.0
    %4686 = vmatpush1.msra.mxu0 0.0
    %4687 = vmatprep.subr.mxu0 0.0
    %4688 = vmatpush1.msra.mxu0 0.0
    %4689 = vmatprep.subr.mxu0 0.0
    %4690 = vmatpush1.msra.mxu0 0.0
    %4691 = vmatprep.subr.mxu0 0.0
    %4692 = vmatpush1.msra.mxu0 0.0
    %4693 = vmatprep.subr.mxu0 0.0
    %4694 = vmatpush1.msra.mxu0 0.0
    %4695 = vmatprep.subr.mxu0 0.0
    %4696 = vmatpush1.msra.mxu0 0.0
    %4697 = vmatprep.subr.mxu0 0.0
    %4698 = vmatpush1.msra.mxu0 0.0
    %4699 = vmatprep.subr.mxu0 0.0
    %4700 = vmatpush1.msra.mxu0 0.0
    %4701 = vmatprep.subr.mxu0 0.0
    %4702 = vmatpush1.msra.mxu0 0.0
    %4703 = vmatprep.subr.mxu0 0.0
    %4704 = vmatpush1.msra.mxu0 0.0
    %4705 = vmatprep.subr.mxu0 0.0
    %4706 = vmatpush1.msra.mxu0 0.0
    %4707 = vmatprep.subr.mxu0 0.0
    %4708 = vmatpush1.msra.mxu0 0.0
    %4709 = vmatprep.subr.mxu0 0.0
    %4710 = vmatpush1.msra.mxu0 0.0
    %4711 = vmatprep.subr.mxu0 0.0
    %4712 = vmatpush1.msra.mxu0 0.0
    %4713 = vmatprep.subr.mxu0 0.0
    %4714 = vmatpush1.msra.mxu0 0.0
    %4715 = vmatprep.subr.mxu0 0.0
    %4716 = vmatpush1.msra.mxu0 0.0
    %4717 = vmatprep.subr.mxu0 0.0
    %4718 = vmatpush1.msra.mxu0 0.0
    %4719 = vmatprep.subr.mxu0 0.0
    %4720 = vmatpush1.msra.mxu0 0.0
    %4721 = vmatprep.subr.mxu0 0.0
    %4722 = vmatpush1.msra.mxu0 0.0
    %4723 = vmatprep.mubr.f32.mxu0 0.0
    %4724 = vmatmul.mubr.f32.gmra.mrb[0].mxu0 %v4654
    %v4725 = vpop.f32.mrb[0].mxu0
    %v4726 = vadd.f32 0.0, %v4725
    %v4727 = vpop.f32.mrb[0].mxu0
    %4728 = vmatprep.mubr.f32.mxu0 0.0
    %4729 = vmatmul.mubr.f32.gmra.mrb[0].mxu0 %v4657
    %v4730 = vpop.f32.mrb[0].mxu0
    %v4731 = vadd.f32 0.0, %v4730
    %v4732 = vpop.f32.mrb[0].mxu0
    %4733 = vdwg.mxu0
    %4736 = vrot.lane.b32.xlu0 %v4726, 12
    %v4737 = vpop.permute.xlu0 %4736
    %4738 = vrot.lane.b32.xlu0 %v4731, 12
    %v4739 = vpop.permute.xlu0 %4738
    %4742 = vst.msk [vmem:[#allocation2] sm:$0xff] %vm769, %v4737
    %4743 = vst.msk [vmem:[#allocation2 + $0x8] sm:$0xff] %vm769, %v4739
    %v4744 = vld [vmem:[#allocation2] sm:$0xff]
    %v4745 = vld [vmem:[#allocation2 + $0x8] sm:$0xff]
    %v4746 = vld [vmem:[%s13] sm:$0x1]
    %v4748 = vlaneseq
    %v4749 = vshrl.u32 %v4748, 7
    %v4750 = vsub.s32 0, %v4749
    %v4751 = vrot.slane %v4746, %v4750
    %v4753 = vadd.f32 %v4744, %v4751
    %v4754 = vadd.f32 %v4745, %v4751
    %vm4755 = vcmp.gt.f32.partialorder %v4753, 0.0
    %vm4756 = vcmp.gt.f32.partialorder %v4754, 0.0
    %v4757 = vmin.f32 %v4753, 0.0
    %v4758 = vmin.f32 %v4754, 0.0
    %v4759 = vmul.f32 %v4757, 1.442695
    %v4760 = vpow.pop %v4759
    %v4761 = vmul.f32 %v4758, 1.442695
    %v4762 = vpow.pop %v4761
    %v4763 = vsub.f32 %v4760, 1.0
    %v4764 = vsub.f32 %v4762, 1.0
    %v4765 = vsel %vm4755, %v4753, %v4763
    %v4766 = vsel %vm4756, %v4754, %v4764
    %v4767 = vsel %vm237, %v4765, 0.0
    %4768 = vadd.xlane.f32.xlu0 %v4767
    %v4769 = vpop.xlane.xlu0 %4768
    %v4770 = vsel %vm237, %v4766, 0.0
    %4771 = vadd.xlane.f32.xlu0 %v4770
    %v4772 = vpop.xlane.xlu0 %4771
    %v4773 = vrcp.pop 16.0
    %v4774 = vmul.f32 %v4769, %v4773
    %v4775 = vmul.f32 %v4772, %v4773
    %v4776 = vsub.f32 %v4765, %v4774
    %v4777 = vsub.f32 %v4766, %v4775
    %v4778 = vmul.f32 %v4776, %v4776
    %v4779 = vmul.f32 %v4777, %v4777
    %v4780 = vsel %vm237, %v4778, 0.0
    %4781 = vadd.xlane.f32.xlu0 %v4780
    %v4782 = vpop.xlane.xlu0 %4781
    %v4783 = vsel %vm237, %v4779, 0.0
    %4784 = vadd.xlane.f32.xlu0 %v4783
    %v4785 = vpop.xlane.xlu0 %4784
    %v4786 = vmul.f32 %v4782, %v4773
    %v4787 = vmul.f32 %v4785, %v4773
    %v4788 = vadd.f32 %v4786, 1e-05
    %v4789 = vadd.f32 %v4787, 1e-05
    %v4790 = vrsqrt.pop %v4788
    %v4791 = vrsqrt.pop %v4789
    %v4792 = vmul.f32 %v4776, %v4790
    %v4793 = vmul.f32 %v4777, %v4791
    %v4794 = vld [vmem:[%s14] sm:$0x1]
    %v4796 = vlaneseq
    %v4797 = vshrl.u32 %v4796, 7
    %v4798 = vsub.s32 0, %v4797
    %v4799 = vrot.slane %v4794, %v4798
    %v4801 = vmul.f32 %v4792, %v4799
    %v4802 = vmul.f32 %v4793, %v4799
    %v4803 = vld [vmem:[%s15] sm:$0x1]
    %v4805 = vlaneseq
    %v4806 = vshrl.u32 %v4805, 7
    %v4807 = vsub.s32 0, %v4806
    %v4808 = vrot.slane %v4803, %v4807
    %v4810 = vadd.f32 %v4801, %v4808
    %v4811 = vadd.f32 %v4802, %v4808
    %v4812 = vmul.f32 %v4645, 0.25
    %v4813 = vmul.f32 %v4646, 0.25
    %v4815 = vsel %vm237, %v4812, 0
    %v4818 = vsel %vm237, %v4813, 0
    %4820 = vmatprep.subr.mxu0 0.0
    %4821 = vmatpush1.msra.mxu0 %v58
    %4822 = vmatprep.subr.mxu0 0.0
    %4823 = vmatpush1.msra.mxu0 %v59
    %4824 = vmatprep.subr.mxu0 0.0
    %4825 = vmatpush1.msra.mxu0 0.0
    %4826 = vmatprep.subr.mxu0 0.0
    %4827 = vmatpush1.msra.mxu0 0.0
    %4828 = vmatprep.subr.mxu0 0.0
    %4829 = vmatpush1.msra.mxu0 0.0
    %4830 = vmatprep.subr.mxu0 0.0
    %4831 = vmatpush1.msra.mxu0 0.0
    %4832 = vmatprep.subr.mxu0 0.0
    %4833 = vmatpush1.msra.mxu0 0.0
    %4834 = vmatprep.subr.mxu0 0.0
    %4835 = vmatpush1.msra.mxu0 0.0
    %4836 = vmatprep.subr.mxu0 0.0
    %4837 = vmatpush1.msra.mxu0 0.0
    %4838 = vmatprep.subr.mxu0 0.0
    %4839 = vmatpush1.msra.mxu0 0.0
    %4840 = vmatprep.subr.mxu0 0.0
    %4841 = vmatpush1.msra.mxu0 0.0
    %4842 = vmatprep.subr.mxu0 0.0
    %4843 = vmatpush1.msra.mxu0 0.0
    %4844 = vmatprep.subr.mxu0 0.0
    %4845 = vmatpush1.msra.mxu0 0.0
    %4846 = vmatprep.subr.mxu0 0.0
    %4847 = vmatpush1.msra.mxu0 0.0
    %4848 = vmatprep.subr.mxu0 0.0
    %4849 = vmatpush1.msra.mxu0 0.0
    %4850 = vmatprep.subr.mxu0 0.0
    %4851 = vmatpush1.msra.mxu0 0.0
    %4852 = vmatprep.subr.mxu0 0.0
    %4853 = vmatpush1.msra.mxu0 0.0
    %4854 = vmatprep.subr.mxu0 0.0
    %4855 = vmatpush1.msra.mxu0 0.0
    %4856 = vmatprep.subr.mxu0 0.0
    %4857 = vmatpush1.msra.mxu0 0.0
    %4858 = vmatprep.subr.mxu0 0.0
    %4859 = vmatpush1.msra.mxu0 0.0
    %4860 = vmatprep.subr.mxu0 0.0
    %4861 = vmatpush1.msra.mxu0 0.0
    %4862 = vmatprep.subr.mxu0 0.0
    %4863 = vmatpush1.msra.mxu0 0.0
    %4864 = vmatprep.subr.mxu0 0.0
    %4865 = vmatpush1.msra.mxu0 0.0
    %4866 = vmatprep.subr.mxu0 0.0
    %4867 = vmatpush1.msra.mxu0 0.0
    %4868 = vmatprep.subr.mxu0 0.0
    %4869 = vmatpush1.msra.mxu0 0.0
    %4870 = vmatprep.subr.mxu0 0.0
    %4871 = vmatpush1.msra.mxu0 0.0
    %4872 = vmatprep.subr.mxu0 0.0
    %4873 = vmatpush1.msra.mxu0 0.0
    %4874 = vmatprep.subr.mxu0 0.0
    %4875 = vmatpush1.msra.mxu0 0.0
    %4876 = vmatprep.subr.mxu0 0.0
    %4877 = vmatpush1.msra.mxu0 0.0
    %4878 = vmatprep.subr.mxu0 0.0
    %4879 = vmatpush1.msra.mxu0 0.0
    %4880 = vmatprep.subr.mxu0 0.0
    %4881 = vmatpush1.msra.mxu0 0.0
    %4882 = vmatprep.subr.mxu0 0.0
    %4883 = vmatpush1.msra.mxu0 0.0
    %4884 = vmatprep.mubr.f32.mxu0 0.0
    %4885 = vmatmul.mubr.f32.gmra.mrb[0].mxu0 %v4815
    %v4886 = vpop.f32.mrb[0].mxu0
    %v4887 = vadd.f32 0.0, %v4886
    %v4888 = vpop.f32.mrb[0].mxu0
    %4889 = vmatprep.mubr.f32.mxu0 0.0
    %4890 = vmatmul.mubr.f32.gmra.mrb[0].mxu0 %v4818
    %v4891 = vpop.f32.mrb[0].mxu0
    %v4892 = vadd.f32 0.0, %v4891
    %v4893 = vpop.f32.mrb[0].mxu0
    %4894 = vdwg.mxu0
    %v4895 = vmul.f32 %v4887, %v60
    %v4896 = vmul.f32 %v4892, %v61
    %v4897 = vsel %vm2555, %v4895, 0.0
    %v4898 = vsel %vm2555, %v4896, 0.0
    %v4899 = vadd.f32 %v4897, %v4898
    %v4900 = vrot.slane %v4899, 4
    %v4901 = vadd.f32 %v4899, %v4900
    %v4902 = vrot.slane %v4901, 2
    %v4903 = vadd.f32 %v4901, %v4902
    %v4904 = vrot.slane %v4903, 1
    %v4905 = vadd.f32 %v4903, %v4904
    %4906 = vst.msk [vmem:[#allocation3] sm:$0xff] %vm237, %v4810
    %4907 = vst.msk [vmem:[#allocation3 + $0x8] sm:$0xff] %vm237, %v4811
    %vm4908 = vcmask 1040384
    %v4909 = vsel %vm4908, %v2655, %v4068
    %vm4910 = vcmask 1041408
    %v4911 = vsel %vm4910, %v4909, %v4905
    %v4912 = vmul.f32 %v4911, 2.0
    %vm4913 = vcmask 256000
    %v4914 = vsel %vm4913, %v4912, -inf
    %4915 = vmax.xlane.f32.xlu0 %v4914
    %v4916 = vpop.xlane.xlu0 %4915
    %v4917 = vsub.f32 %v4912, %v4916
    %v4918 = vmul.f32 %v4917, 1.442695
    %v4919 = vpow.pop %v4918
    %v4920 = vsel %vm4913, %v4919, 0.0
    %4921 = vadd.xlane.f32.xlu0 %v4920
    %v4922 = vpop.xlane.xlu0 %4921
    %v4923 = vrcp.pop %v4922
    %v4924 = vmul.f32 %v4919, %v4923
    %4925 = vst.msk [vmem:[%s17] sm:$0x7] %vm4913, %v4924
    // Predicated region
    $region66: #{gatnet_forward.1} parent=1 // pred_check
      _
    $region67: #{gatnet_forward.1} parent=1 // pred_check_branch
      %4927 = sbr.rel (0) target = $region69
    $region68: #{gatnet_forward.1} parent=1 // pred_region
      %s4929 = ssub.s32 256, 256
      %4930 = vsyncadd [#allocation4], %s4929
      %s4931 = sshll.u32 [#allocation3], 4
      %s4932 = int_to_ptr.vmem [resolvable:$true] %s4931
      %4937 = dma.vmem_to_hbm [thread:$0]  %s4932, 256, %s16, [#allocation4], 128, 128, 8
    $region69: #{gatnet_forward.1} parent=1 // pred_fallthru
      _
    // Predicated region
    $region70: #{gatnet_forward.1} parent=1 // pred_check
      _
    $region71: #{gatnet_forward.1} parent=1 // pred_check_branch
      %4939 = sbr.rel (0) target = $region73
    $region72: #{gatnet_forward.1} parent=1 // pred_region
      _
    $region73: #{gatnet_forward.1} parent=1 // pred_fallthru
      _
    // Predicated region
    $region74: #{gatnet_forward.1} parent=1 // pred_check
      _
    $region75: #{gatnet_forward.1} parent=1 // pred_check_branch
      %4941 = sbr.rel (0) target = $region77
    $region76: #{gatnet_forward.1} parent=1 // pred_region
      %4942 = dma.done [#allocation4], 256
    $region77: #{gatnet_forward.1} parent=1 // pred_fallthru
      _
    // Predicated region
    $region78: #{gatnet_forward.1} parent=1 // pred_check
      _
    $region79: #{gatnet_forward.1} parent=1 // pred_check_branch
      %4944 = sbr.rel (0) target = $region81
    $region80: #{gatnet_forward.1} parent=1 // pred_region
      _
    $region81: #{gatnet_forward.1} parent=1 // pred_fallthru
      _
    %4945 = vsyncpa [#allocation4], 1

</llo_original>
